<compile_context>
chip_gen: v6e
topology: v6e:2x2x1
jax: 0.10.0
libtpu: 0.0.40
codegen_flags: <defaults>
</compile_context>

<pallas_src>
import functools

import jax
import jax.numpy as jnp
from jax.experimental import pallas as pl
from jax.experimental.pallas import tpu as pltpu


def _round_up(x, m):
    return ((x + m - 1) // m) * m


# ----------------------------------------------------------------------------
# Pallas kernel: fused (bf16 x bf16 -> f32) matmul + bias + activation.
# Gridded over M; weights/bias use a constant index_map so they are DMA'd into
# VMEM once per pallas_call and stay resident across all M tiles.
# ----------------------------------------------------------------------------
def _mm_bias_act_kernel(x_ref, w_ref, b_ref, o_ref, *, act):
    y = jnp.dot(x_ref[...], w_ref[...], preferred_element_type=jnp.float32)
    y = y + b_ref[...]  # (1, N) f32, broadcasts over rows
    if act == "relu":
        y = jnp.maximum(y, 0.0)
    elif act == "sigmoid":
        y = jax.nn.sigmoid(y)
    o_ref[...] = y.astype(o_ref.dtype)


# Tile sized for v7x's 32 MiB scoped VMEM (also comfortably fits v5e/v6e).
_TILE_M_MAX = 512


def matmul_bias_act(x, w, b, act):
    """x: [M, K], w: [K, N], b: [N] -> [M, N] float32.

    * M is tiled (grid axis "parallel" -> software pipelining + megacore).
    * N and bias are zero-padded to a multiple of 128 for lane-dense stores.
    * Inputs are cast to bf16; MXU accumulation and bias/act are f32.
    """
    M, K = x.shape
    N = w.shape[1]
    n_pad = _round_up(N, 128)

    if M <= _TILE_M_MAX:
        tile_m = _round_up(max(M, 1), 8)
    else:
        tile_m = _TILE_M_MAX
    m_pad = _round_up(M, tile_m)

    xp = x if m_pad == M else jnp.pad(x, ((0, m_pad - M), (0, 0)))
    wp = w if n_pad == N else jnp.pad(w, ((0, 0), (0, n_pad - N)))
    bp = b if n_pad == N else jnp.pad(b, (0, n_pad - N))

    xp = xp.astype(jnp.bfloat16)
    wp = wp.astype(jnp.bfloat16)
    bp = bp.astype(jnp.float32).reshape(1, n_pad)

    kernel = functools.partial(_mm_bias_act_kernel, act=act)
    out = pl.pallas_call(
        kernel,
        out_shape=jax.ShapeDtypeStruct((m_pad, n_pad), jnp.float32),
        grid_spec=pltpu.PrefetchScalarGridSpec(
            num_scalar_prefetch=0,
            grid=(m_pad // tile_m,),
            in_specs=[
                pl.BlockSpec((tile_m, K), lambda i: (i, 0)),
                pl.BlockSpec((K, n_pad), lambda i: (0, 0)),   # resident weight
                pl.BlockSpec((1, n_pad), lambda i: (0, 0)),   # resident bias
            ],
            out_specs=pl.BlockSpec((tile_m, n_pad), lambda i: (i, 0)),
        ),
        compiler_params=pltpu.CompilerParams(
            dimension_semantics=("parallel",),
            vmem_limit_bytes=32 * 1024 * 1024,
        ),
    )(xp, wp, bp)
    return out[:M, :N]


# ----------------------------------------------------------------------------
# Layer lowerings (plain-JAX glue; all heavy compute goes through the kernel)
# ----------------------------------------------------------------------------
def _im2col(x_nhwc, k, stride):
    """x: [N, H, W, C] (already padded) -> patches [N*Ho*Wo, k*k*C], Ho, Wo."""
    n, h, w, c = x_nhwc.shape
    ho = (h - k) // stride + 1
    wo = (w - k) // stride + 1
    pieces = []
    for i in range(k):
        for j in range(k):
            pieces.append(
                x_nhwc[:, i : i + stride * ho : stride, j : j + stride * wo : stride, :]
            )
    p = jnp.stack(pieces, axis=3)  # [N, Ho, Wo, k*k, C]
    return p.reshape(n * ho * wo, k * k * c), ho, wo


def conv2d(x_nhwc, weight, bias, *, stride, padding, act):
    """PyTorch-semantics Conv2d. weight: [Cout, Cin, k, k], bias: [Cout]."""
    # TODO(synk): move the im2col gather into the Pallas kernel (loop over taps
    # on a VMEM-resident input tile) to cut HBM traffic ~k*k x for the 3x3 layers.
    cout, _, k, _ = weight.shape
    xp = jnp.pad(x_nhwc, ((0, 0), (padding, padding), (padding, padding), (0, 0)))
    patches, ho, wo = _im2col(xp, k, stride)
    wmat = jnp.transpose(weight, (2, 3, 1, 0)).reshape(-1, cout)  # (ky, kx, cin) order
    out = matmul_bias_act(patches, wmat, bias, act)
    return out.reshape(x_nhwc.shape[0], ho, wo, cout)


def conv2d_full_window(x_nhwc, weight, bias, act):
    """Valid kxk conv whose kernel covers the whole spatial extent -> one matmul."""
    n, h, w, c = x_nhwc.shape
    cout = weight.shape[0]
    xm = x_nhwc.reshape(n, h * w * c)                                 # (ky, kx, cin)
    wmat = jnp.transpose(weight, (2, 3, 1, 0)).reshape(h * w * c, cout)
    out = matmul_bias_act(xm, wmat, bias, act)
    return out.reshape(n, 1, 1, cout)


def conv_transpose2d_from_1x1(x_nhwc, weight, bias, act):
    """ConvTranspose2d(stride=1, padding=0) on a 1x1 spatial input.

    out[n, ty, tx, co] = sum_ci weight[ci, co, ty, tx] * x[n, ci] + bias[co]
    weight: [Cin, Cout, k, k].
    """
    n = x_nhwc.shape[0]
    cin, cout, k, _ = weight.shape
    xm = x_nhwc.reshape(n, cin)
    wmat = jnp.transpose(weight, (0, 2, 3, 1)).reshape(cin, k * k * cout)
    bfull = jnp.tile(bias, k * k)
    out = matmul_bias_act(xm, wmat, bfull, act)
    return out.reshape(n, k, k, cout)


def conv_transpose2d_s2_phase(x_nhwc, weight, bias, act):
    """ConvTranspose2d(k=3, stride=2, padding=1, output_padding=1) via sub-pixel
    phase decomposition, fused into a single block-structured matmul.

    Output pixel (2r+py, 2c+px) only depends on inputs {x[r,c], x[r,c+1],
    x[r+1,c], x[r+1,c+1]} with the tap subset selected by the parity (py, px),
    so no zero-dilated input or dense 3x3 im2col is ever materialized.
    weight: [Cin, Cout, 3, 3].
    """
    n, h, w, cin = x_nhwc.shape
    cout = weight.shape[1]
    # Equivalent regular-conv weight, im2col layout:
    #   w_hat[ty, tx, cin, cout] = weight[cin, cout, 2 - ty, 2 - tx]
    w_hat = jnp.transpose(jnp.flip(weight, axis=(2, 3)), (2, 3, 0, 1))

    # 2x2 neighbourhood patches; one zero row/col on the high side handles the
    # output_padding boundary (those taps must contribute zero).
    xq = jnp.pad(x_nhwc, ((0, 0), (0, 1), (0, 1), (0, 0)))
    q0 = xq[:, :h, :w, :]
    q1 = xq[:, :h, 1 : w + 1, :]
    q2 = xq[:, 1 : h + 1, :w, :]
    q3 = xq[:, 1 : h + 1, 1 : w + 1, :]
    patches = jnp.concatenate([q0, q1, q2, q3], axis=-1).reshape(n * h * w, 4 * cin)

    # Combined weight [4*Cin, 4*Cout]; column groups are phases
    # (py, px) in [(0,0), (0,1), (1,0), (1,1)], row groups are q0..q3.
    z = jnp.zeros((cin, cout), weight.dtype)
    wc = jnp.block([
        [w_hat[1, 1], w_hat[1, 0], w_hat[0, 1], w_hat[0, 0]],
        [z,           w_hat[1, 2], z,           w_hat[0, 2]],
        [z,           z,           w_hat[2, 1], w_hat[2, 0]],
        [z,           z,           z,           w_hat[2, 2]],
    ])
    out = matmul_bias_act(patches, wc, jnp.tile(bias, 4), act)       # [n*h*w, 4*cout]
    out = out.reshape(n, h, w, 2, 2, cout)                           # (.., py, px, co)
    out = jnp.transpose(out, (0, 1, 3, 2, 4, 5)).reshape(n, 2 * h, 2 * w, cout)
    return out


# ----------------------------------------------------------------------------
# Deterministic parameter init (shapes match the PyTorch module)
# ----------------------------------------------------------------------------
def init_params(key):
    def conv_w(key, cout, cin, k):
        fan_in = cin * k * k
        bound = 1.0 / jnp.sqrt(fan_in)
        kw, kb = jax.random.split(key)
        w = jax.random.uniform(kw, (cout, cin, k, k), jnp.float32, -bound, bound)
        b = jax.random.uniform(kb, (cout,), jnp.float32, -bound, bound)
        return w, b

    def convt_w(key, cin, cout, k):
        fan_in = cin * k * k  # deterministic init; forward math is unaffected
        bound = 1.0 / jnp.sqrt(fan_in)
        kw, kb = jax.random.split(key)
        w = jax.random.uniform(kw, (cin, cout, k, k), jnp.float32, -bound, bound)
        b = jax.random.uniform(kb, (cout,), jnp.float32, -bound, bound)
        return w, b

    keys = jax.random.split(key, 6)
    return {
        "enc1": conv_w(keys[0], 16, 1, 3),
        "enc2": conv_w(keys[1], 32, 16, 3),
        "enc3": conv_w(keys[2], 64, 32, 7),
        "dec1": convt_w(keys[3], 64, 32, 7),
        "dec2": convt_w(keys[4], 32, 16, 3),
        "dec3": convt_w(keys[5], 16, 1, 3),
    }


# ----------------------------------------------------------------------------
# Full forward pass (NCHW in, NCHW out — mirrors the PyTorch module)
# ----------------------------------------------------------------------------
def autoencoder_forward(params, x_nchw):
    x = jnp.transpose(x_nchw, (0, 2, 3, 1))  # NCHW -> NHWC

    # encoder
    w, b = params["enc1"]
    x = conv2d(x, w, b, stride=2, padding=1, act="relu")             # [N,14,14,16]
    w, b = params["enc2"]
    x = conv2d(x, w, b, stride=2, padding=1, act="relu")             # [N,7,7,32]
    w, b = params["enc3"]
    x = conv2d_full_window(x, w, b, act="none")                      # [N,1,1,64]

    # decoder
    w, b = params["dec1"]
    x = conv_transpose2d_from_1x1(x, w, b, act="relu")               # [N,7,7,32]
    w, b = params["dec2"]
    x = conv_transpose2d_s2_phase(x, w, b, act="relu")               # [N,14,14,16]
    w, b = params["dec3"]
    x = conv_transpose2d_s2_phase(x, w, b, act="sigmoid")            # [N,28,28,1]

    return jnp.transpose(x, (0, 3, 1, 2))  # NHWC -> NCHW


if __name__ == "__main__":
    key = jax.random.PRNGKey(0)
    k_params, k_input = jax.random.split(key)

    params = init_params(k_params)
    # Input must be 28x28 so the 7x7 valid conv collapses 7 -> 1 (MNIST convention).
    x = jax.random.normal(k_input, (2, 1, 28, 28), dtype=jnp.float32)

    fwd = jax.jit(autoencoder_forward)
    out = fwd(params, x)
    out = jax.block_until_ready(out)

    assert out.shape == (2, 1, 28, 28), out.shape
    assert bool(jnp.all(jnp.isfinite(out)))
    assert bool(jnp.all((out >= 0.0) & (out <= 1.0)))  # sigmoid range

    print("KERNEL_OK")
</pallas_src>

<mosaic_0001>
module attributes {stable_mosaic.version = 11 : i64} {
  func.func @_mm_bias_act_kernel(%arg0: i32, %arg1: memref<392x9xbf16, #tpu.memory_space<vmem>>, %arg2: memref<9x128xbf16, #tpu.memory_space<vmem>>, %arg3: memref<1x128xf32, #tpu.memory_space<vmem>>, %arg4: memref<392x128xf32, #tpu.memory_space<vmem>>) attributes {dimension_semantics = [#tpu.dimension_semantics<parallel>], iteration_bounds = array<i64: 1>, scalar_prefetch = 0 : i64, scratch_operands = 0 : i64, tpu.core_type = #tpu.core_type<tc>, window_params = [{transform_indices = @transform_0, window_bounds = array<i64: 392, 9>}, {pipeline_mode = #tpu.pipeline_mode<synchronous>, transform_indices = @transform_1, window_bounds = array<i64: 9, 128>}, {pipeline_mode = #tpu.pipeline_mode<synchronous>, transform_indices = @transform_2, window_bounds = array<i64: 1, 128>}, {transform_indices = @transform_3, window_bounds = array<i64: 392, 128>}]} {
    %c0 = arith.constant 0 : index
    %c0_0 = arith.constant 0 : index
    %0 = vector.load %arg1[%c0, %c0_0] : memref<392x9xbf16, #tpu.memory_space<vmem>>, vector<392x9xbf16>
    %c0_1 = arith.constant 0 : index
    %c0_2 = arith.constant 0 : index
    %1 = vector.load %arg2[%c0_1, %c0_2] : memref<9x128xbf16, #tpu.memory_space<vmem>>, vector<9x128xbf16>
    %cst = arith.constant dense<0.000000e+00> : vector<392x128xf32>
    %2 = tpu.matmul %0, %1, %cst {dimension_numbers = #tpu.dot_dimension_numbers<[1], [0], [0], [1], [0, 0, 1, 1], [], []>} : vector<392x9xbf16>, vector<9x128xbf16>, vector<392x128xf32> -> vector<392x128xf32>
    %c0_3 = arith.constant 0 : index
    %c0_4 = arith.constant 0 : index
    %3 = vector.load %arg3[%c0_3, %c0_4] : memref<1x128xf32, #tpu.memory_space<vmem>>, vector<1x128xf32>
    %4 = vector.broadcast %3 : vector<1x128xf32> to vector<392x128xf32>
    %5 = arith.addf %2, %4 : vector<392x128xf32>
    %cst_5 = arith.constant 0.000000e+00 : f32
    %6 = vector.broadcast %cst_5 : f32 to vector<392x128xf32>
    %7 = arith.maximumf %5, %6 : vector<392x128xf32>
    %c0_6 = arith.constant 0 : index
    %c0_7 = arith.constant 0 : index
    %8 = vector.load %arg4[%c0_6, %c0_7] : memref<392x128xf32, #tpu.memory_space<vmem>>, vector<392x128xf32>
    tpu.vector_store %arg4[%c0_6, %c0_7], %7 {strides = array<i32>} : memref<392x128xf32, #tpu.memory_space<vmem>>, vector<392x128xf32>,
    return
  }
  func.func @transform_0(%arg0: i32) -> (i32, i32) {
    %c0_i32 = arith.constant 0 : i32
    %c0_i32_0 = arith.constant 0 : i32
    return %arg0, %c0_i32 : i32, i32
  }
  func.func @transform_1(%arg0: i32) -> (i32, i32) {
    %c0_i32 = arith.constant 0 : i32
    %c0_i32_0 = arith.constant 0 : i32
    %c0_i32_1 = arith.constant 0 : i32
    return %c0_i32, %c0_i32_0 : i32, i32
  }
  func.func @transform_2(%arg0: i32) -> (i32, i32) {
    %c0_i32 = arith.constant 0 : i32
    %c0_i32_0 = arith.constant 0 : i32
    %c0_i32_1 = arith.constant 0 : i32
    return %c0_i32, %c0_i32_0 : i32, i32
  }
  func.func @transform_3(%arg0: i32) -> (i32, i32) {
    %c0_i32 = arith.constant 0 : i32
    %c0_i32_0 = arith.constant 0 : i32
    return %arg0, %c0_i32 : i32, i32
  }
}

module attributes {stable_mosaic.version = 11 : i64} {
  func.func @_mm_bias_act_kernel(%arg0: i32, %arg1: memref<104x144xbf16, #tpu.memory_space<vmem>>, %arg2: memref<144x128xbf16, #tpu.memory_space<vmem>>, %arg3: memref<1x128xf32, #tpu.memory_space<vmem>>, %arg4: memref<104x128xf32, #tpu.memory_space<vmem>>) attributes {dimension_semantics = [#tpu.dimension_semantics<parallel>], iteration_bounds = array<i64: 1>, scalar_prefetch = 0 : i64, scratch_operands = 0 : i64, tpu.core_type = #tpu.core_type<tc>, window_params = [{transform_indices = @transform_0, window_bounds = array<i64: 104, 144>}, {pipeline_mode = #tpu.pipeline_mode<synchronous>, transform_indices = @transform_1, window_bounds = array<i64: 144, 128>}, {pipeline_mode = #tpu.pipeline_mode<synchronous>, transform_indices = @transform_2, window_bounds = array<i64: 1, 128>}, {transform_indices = @transform_3, window_bounds = array<i64: 104, 128>}]} {
    %c0 = arith.constant 0 : index
    %c0_0 = arith.constant 0 : index
    %0 = vector.load %arg1[%c0, %c0_0] : memref<104x144xbf16, #tpu.memory_space<vmem>>, vector<104x144xbf16>
    %c0_1 = arith.constant 0 : index
    %c0_2 = arith.constant 0 : index
    %1 = vector.load %arg2[%c0_1, %c0_2] : memref<144x128xbf16, #tpu.memory_space<vmem>>, vector<144x128xbf16>
    %cst = arith.constant dense<0.000000e+00> : vector<104x128xf32>
    %2 = tpu.matmul %0, %1, %cst {dimension_numbers = #tpu.dot_dimension_numbers<[1], [0], [0], [1], [0, 0, 1, 1], [], []>} : vector<104x144xbf16>, vector<144x128xbf16>, vector<104x128xf32> -> vector<104x128xf32>
    %c0_3 = arith.constant 0 : index
    %c0_4 = arith.constant 0 : index
    %3 = vector.load %arg3[%c0_3, %c0_4] : memref<1x128xf32, #tpu.memory_space<vmem>>, vector<1x128xf32>
    %4 = vector.broadcast %3 : vector<1x128xf32> to vector<104x128xf32>
    %5 = arith.addf %2, %4 : vector<104x128xf32>
    %cst_5 = arith.constant 0.000000e+00 : f32
    %6 = vector.broadcast %cst_5 : f32 to vector<104x128xf32>
    %7 = arith.maximumf %5, %6 : vector<104x128xf32>
    %c0_6 = arith.constant 0 : index
    %c0_7 = arith.constant 0 : index
    %8 = vector.load %arg4[%c0_6, %c0_7] : memref<104x128xf32, #tpu.memory_space<vmem>>, vector<104x128xf32>
    tpu.vector_store %arg4[%c0_6, %c0_7], %7 {strides = array<i32>} : memref<104x128xf32, #tpu.memory_space<vmem>>, vector<104x128xf32>,
    return
  }
  func.func @transform_0(%arg0: i32) -> (i32, i32) {
    %c0_i32 = arith.constant 0 : i32
    %c0_i32_0 = arith.constant 0 : i32
    return %arg0, %c0_i32 : i32, i32
  }
  func.func @transform_1(%arg0: i32) -> (i32, i32) {
    %c0_i32 = arith.constant 0 : i32
    %c0_i32_0 = arith.constant 0 : i32
    %c0_i32_1 = arith.constant 0 : i32
    return %c0_i32, %c0_i32_0 : i32, i32
  }
  func.func @transform_2(%arg0: i32) -> (i32, i32) {
    %c0_i32 = arith.constant 0 : i32
    %c0_i32_0 = arith.constant 0 : i32
    %c0_i32_1 = arith.constant 0 : i32
    return %c0_i32, %c0_i32_0 : i32, i32
  }
  func.func @transform_3(%arg0: i32) -> (i32, i32) {
    %c0_i32 = arith.constant 0 : i32
    %c0_i32_0 = arith.constant 0 : i32
    return %arg0, %c0_i32 : i32, i32
  }
}

module attributes {stable_mosaic.version = 11 : i64} {
  func.func @_mm_bias_act_kernel(%arg0: i32, %arg1: memref<8x1568xbf16, #tpu.memory_space<vmem>>, %arg2: memref<1568x128xbf16, #tpu.memory_space<vmem>>, %arg3: memref<1x128xf32, #tpu.memory_space<vmem>>, %arg4: memref<8x128xf32, #tpu.memory_space<vmem>>) attributes {dimension_semantics = [#tpu.dimension_semantics<parallel>], iteration_bounds = array<i64: 1>, scalar_prefetch = 0 : i64, scratch_operands = 0 : i64, tpu.core_type = #tpu.core_type<tc>, window_params = [{transform_indices = @transform_0, window_bounds = array<i64: 8, 1568>}, {pipeline_mode = #tpu.pipeline_mode<synchronous>, transform_indices = @transform_1, window_bounds = array<i64: 1568, 128>}, {pipeline_mode = #tpu.pipeline_mode<synchronous>, transform_indices = @transform_2, window_bounds = array<i64: 1, 128>}, {transform_indices = @transform_3, window_bounds = array<i64: 8, 128>}]} {
    %c0 = arith.constant 0 : index
    %c0_0 = arith.constant 0 : index
    %0 = vector.load %arg1[%c0, %c0_0] : memref<8x1568xbf16, #tpu.memory_space<vmem>>, vector<8x1568xbf16>
    %c0_1 = arith.constant 0 : index
    %c0_2 = arith.constant 0 : index
    %1 = vector.load %arg2[%c0_1, %c0_2] : memref<1568x128xbf16, #tpu.memory_space<vmem>>, vector<1568x128xbf16>
    %cst = arith.constant dense<0.000000e+00> : vector<8x128xf32>
    %2 = tpu.matmul %0, %1, %cst {dimension_numbers = #tpu.dot_dimension_numbers<[1], [0], [0], [1], [0, 0, 1, 1], [], []>} : vector<8x1568xbf16>, vector<1568x128xbf16>, vector<8x128xf32> -> vector<8x128xf32>
    %c0_3 = arith.constant 0 : index
    %c0_4 = arith.constant 0 : index
    %3 = vector.load %arg3[%c0_3, %c0_4] : memref<1x128xf32, #tpu.memory_space<vmem>>, vector<1x128xf32>
    %4 = vector.broadcast %3 : vector<1x128xf32> to vector<8x128xf32>
    %5 = arith.addf %2, %4 : vector<8x128xf32>
    %c0_5 = arith.constant 0 : index
    %c0_6 = arith.constant 0 : index
    %6 = vector.load %arg4[%c0_5, %c0_6] : memref<8x128xf32, #tpu.memory_space<vmem>>, vector<8x128xf32>
    tpu.vector_store %arg4[%c0_5, %c0_6], %5 {strides = array<i32>} : memref<8x128xf32, #tpu.memory_space<vmem>>, vector<8x128xf32>,
    return
  }
  func.func @transform_0(%arg0: i32) -> (i32, i32) {
    %c0_i32 = arith.constant 0 : i32
    %c0_i32_0 = arith.constant 0 : i32
    return %arg0, %c0_i32 : i32, i32
  }
  func.func @transform_1(%arg0: i32) -> (i32, i32) {
    %c0_i32 = arith.constant 0 : i32
    %c0_i32_0 = arith.constant 0 : i32
    %c0_i32_1 = arith.constant 0 : i32
    return %c0_i32, %c0_i32_0 : i32, i32
  }
  func.func @transform_2(%arg0: i32) -> (i32, i32) {
    %c0_i32 = arith.constant 0 : i32
    %c0_i32_0 = arith.constant 0 : i32
    %c0_i32_1 = arith.constant 0 : i32
    return %c0_i32, %c0_i32_0 : i32, i32
  }
  func.func @transform_3(%arg0: i32) -> (i32, i32) {
    %c0_i32 = arith.constant 0 : i32
    %c0_i32_0 = arith.constant 0 : i32
    return %arg0, %c0_i32 : i32, i32
  }
}

module attributes {stable_mosaic.version = 11 : i64} {
  func.func @_mm_bias_act_kernel(%arg0: i32, %arg1: memref<8x64xbf16, #tpu.memory_space<vmem>>, %arg2: memref<64x1664xbf16, #tpu.memory_space<vmem>>, %arg3: memref<1x1664xf32, #tpu.memory_space<vmem>>, %arg4: memref<8x1664xf32, #tpu.memory_space<vmem>>) attributes {dimension_semantics = [#tpu.dimension_semantics<parallel>], iteration_bounds = array<i64: 1>, scalar_prefetch = 0 : i64, scratch_operands = 0 : i64, tpu.core_type = #tpu.core_type<tc>, window_params = [{transform_indices = @transform_0, window_bounds = array<i64: 8, 64>}, {pipeline_mode = #tpu.pipeline_mode<synchronous>, transform_indices = @transform_1, window_bounds = array<i64: 64, 1664>}, {pipeline_mode = #tpu.pipeline_mode<synchronous>, transform_indices = @transform_2, window_bounds = array<i64: 1, 1664>}, {transform_indices = @transform_3, window_bounds = array<i64: 8, 1664>}]} {
    %c0 = arith.constant 0 : index
    %c0_0 = arith.constant 0 : index
    %0 = vector.load %arg1[%c0, %c0_0] : memref<8x64xbf16, #tpu.memory_space<vmem>>, vector<8x64xbf16>
    %c0_1 = arith.constant 0 : index
    %c0_2 = arith.constant 0 : index
    %1 = vector.load %arg2[%c0_1, %c0_2] : memref<64x1664xbf16, #tpu.memory_space<vmem>>, vector<64x1664xbf16>
    %cst = arith.constant dense<0.000000e+00> : vector<8x1664xf32>
    %2 = tpu.matmul %0, %1, %cst {dimension_numbers = #tpu.dot_dimension_numbers<[1], [0], [0], [1], [0, 0, 1, 1], [], []>} : vector<8x64xbf16>, vector<64x1664xbf16>, vector<8x1664xf32> -> vector<8x1664xf32>
    %c0_3 = arith.constant 0 : index
    %c0_4 = arith.constant 0 : index
    %3 = vector.load %arg3[%c0_3, %c0_4] : memref<1x1664xf32, #tpu.memory_space<vmem>>, vector<1x1664xf32>
    %4 = vector.broadcast %3 : vector<1x1664xf32> to vector<8x1664xf32>
    %5 = arith.addf %2, %4 : vector<8x1664xf32>
    %cst_5 = arith.constant 0.000000e+00 : f32
    %6 = vector.broadcast %cst_5 : f32 to vector<8x1664xf32>
    %7 = arith.maximumf %5, %6 : vector<8x1664xf32>
    %c0_6 = arith.constant 0 : index
    %c0_7 = arith.constant 0 : index
    %8 = vector.load %arg4[%c0_6, %c0_7] : memref<8x1664xf32, #tpu.memory_space<vmem>>, vector<8x1664xf32>
    tpu.vector_store %arg4[%c0_6, %c0_7], %7 {strides = array<i32>} : memref<8x1664xf32, #tpu.memory_space<vmem>>, vector<8x1664xf32>,
    return
  }
  func.func @transform_0(%arg0: i32) -> (i32, i32) {
    %c0_i32 = arith.constant 0 : i32
    %c0_i32_0 = arith.constant 0 : i32
    return %arg0, %c0_i32 : i32, i32
  }
  func.func @transform_1(%arg0: i32) -> (i32, i32) {
    %c0_i32 = arith.constant 0 : i32
    %c0_i32_0 = arith.constant 0 : i32
    %c0_i32_1 = arith.constant 0 : i32
    return %c0_i32, %c0_i32_0 : i32, i32
  }
  func.func @transform_2(%arg0: i32) -> (i32, i32) {
    %c0_i32 = arith.constant 0 : i32
    %c0_i32_0 = arith.constant 0 : i32
    %c0_i32_1 = arith.constant 0 : i32
    return %c0_i32, %c0_i32_0 : i32, i32
  }
  func.func @transform_3(%arg0: i32) -> (i32, i32) {
    %c0_i32 = arith.constant 0 : i32
    %c0_i32_0 = arith.constant 0 : i32
    return %arg0, %c0_i32 : i32, i32
  }
}

module attributes {stable_mosaic.version = 11 : i64} {
  func.func @_mm_bias_act_kernel(%arg0: i32, %arg1: memref<104x128xbf16, #tpu.memory_space<vmem>>, %arg2: memref<128x128xbf16, #tpu.memory_space<vmem>>, %arg3: memref<1x128xf32, #tpu.memory_space<vmem>>, %arg4: memref<104x128xf32, #tpu.memory_space<vmem>>) attributes {dimension_semantics = [#tpu.dimension_semantics<parallel>], iteration_bounds = array<i64: 1>, scalar_prefetch = 0 : i64, scratch_operands = 0 : i64, tpu.core_type = #tpu.core_type<tc>, window_params = [{transform_indices = @transform_0, window_bounds = array<i64: 104, 128>}, {pipeline_mode = #tpu.pipeline_mode<synchronous>, transform_indices = @transform_1, window_bounds = array<i64: 128, 128>}, {pipeline_mode = #tpu.pipeline_mode<synchronous>, transform_indices = @transform_2, window_bounds = array<i64: 1, 128>}, {transform_indices = @transform_3, window_bounds = array<i64: 104, 128>}]} {
    %c0 = arith.constant 0 : index
    %c0_0 = arith.constant 0 : index
    %0 = vector.load %arg1[%c0, %c0_0] : memref<104x128xbf16, #tpu.memory_space<vmem>>, vector<104x128xbf16>
    %c0_1 = arith.constant 0 : index
    %c0_2 = arith.constant 0 : index
    %1 = vector.load %arg2[%c0_1, %c0_2] : memref<128x128xbf16, #tpu.memory_space<vmem>>, vector<128x128xbf16>
    %cst = arith.constant dense<0.000000e+00> : vector<104x128xf32>
    %2 = tpu.matmul %0, %1, %cst {dimension_numbers = #tpu.dot_dimension_numbers<[1], [0], [0], [1], [0, 0, 1, 1], [], []>} : vector<104x128xbf16>, vector<128x128xbf16>, vector<104x128xf32> -> vector<104x128xf32>
    %c0_3 = arith.constant 0 : index
    %c0_4 = arith.constant 0 : index
    %3 = vector.load %arg3[%c0_3, %c0_4] : memref<1x128xf32, #tpu.memory_space<vmem>>, vector<1x128xf32>
    %4 = vector.broadcast %3 : vector<1x128xf32> to vector<104x128xf32>
    %5 = arith.addf %2, %4 : vector<104x128xf32>
    %cst_5 = arith.constant 0.000000e+00 : f32
    %6 = vector.broadcast %cst_5 : f32 to vector<104x128xf32>
    %7 = arith.maximumf %5, %6 : vector<104x128xf32>
    %c0_6 = arith.constant 0 : index
    %c0_7 = arith.constant 0 : index
    %8 = vector.load %arg4[%c0_6, %c0_7] : memref<104x128xf32, #tpu.memory_space<vmem>>, vector<104x128xf32>
    tpu.vector_store %arg4[%c0_6, %c0_7], %7 {strides = array<i32>} : memref<104x128xf32, #tpu.memory_space<vmem>>, vector<104x128xf32>,
    return
  }
  func.func @transform_0(%arg0: i32) -> (i32, i32) {
    %c0_i32 = arith.constant 0 : i32
    %c0_i32_0 = arith.constant 0 : i32
    return %arg0, %c0_i32 : i32, i32
  }
  func.func @transform_1(%arg0: i32) -> (i32, i32) {
    %c0_i32 = arith.constant 0 : i32
    %c0_i32_0 = arith.constant 0 : i32
    %c0_i32_1 = arith.constant 0 : i32
    return %c0_i32, %c0_i32_0 : i32, i32
  }
  func.func @transform_2(%arg0: i32) -> (i32, i32) {
    %c0_i32 = arith.constant 0 : i32
    %c0_i32_0 = arith.constant 0 : i32
    %c0_i32_1 = arith.constant 0 : i32
    return %c0_i32, %c0_i32_0 : i32, i32
  }
  func.func @transform_3(%arg0: i32) -> (i32, i32) {
    %c0_i32 = arith.constant 0 : i32
    %c0_i32_0 = arith.constant 0 : i32
    return %arg0, %c0_i32 : i32, i32
  }
}

module attributes {stable_mosaic.version = 11 : i64} {
  func.func @_mm_bias_act_kernel(%arg0: i32, %arg1: memref<392x64xbf16, #tpu.memory_space<vmem>>, %arg2: memref<64x128xbf16, #tpu.memory_space<vmem>>, %arg3: memref<1x128xf32, #tpu.memory_space<vmem>>, %arg4: memref<392x128xf32, #tpu.memory_space<vmem>>) attributes {dimension_semantics = [#tpu.dimension_semantics<parallel>], iteration_bounds = array<i64: 1>, scalar_prefetch = 0 : i64, scratch_operands = 0 : i64, tpu.core_type = #tpu.core_type<tc>, window_params = [{transform_indices = @transform_0, window_bounds = array<i64: 392, 64>}, {pipeline_mode = #tpu.pipeline_mode<synchronous>, transform_indices = @transform_1, window_bounds = array<i64: 64, 128>}, {pipeline_mode = #tpu.pipeline_mode<synchronous>, transform_indices = @transform_2, window_bounds = array<i64: 1, 128>}, {transform_indices = @transform_3, window_bounds = array<i64: 392, 128>}]} {
    %c0 = arith.constant 0 : index
    %c0_0 = arith.constant 0 : index
    %0 = vector.load %arg1[%c0, %c0_0] : memref<392x64xbf16, #tpu.memory_space<vmem>>, vector<392x64xbf16>
    %c0_1 = arith.constant 0 : index
    %c0_2 = arith.constant 0 : index
    %1 = vector.load %arg2[%c0_1, %c0_2] : memref<64x128xbf16, #tpu.memory_space<vmem>>, vector<64x128xbf16>
    %cst = arith.constant dense<0.000000e+00> : vector<392x128xf32>
    %2 = tpu.matmul %0, %1, %cst {dimension_numbers = #tpu.dot_dimension_numbers<[1], [0], [0], [1], [0, 0, 1, 1], [], []>} : vector<392x64xbf16>, vector<64x128xbf16>, vector<392x128xf32> -> vector<392x128xf32>
    %c0_3 = arith.constant 0 : index
    %c0_4 = arith.constant 0 : index
    %3 = vector.load %arg3[%c0_3, %c0_4] : memref<1x128xf32, #tpu.memory_space<vmem>>, vector<1x128xf32>
    %4 = vector.broadcast %3 : vector<1x128xf32> to vector<392x128xf32>
    %5 = arith.addf %2, %4 : vector<392x128xf32>
    %6 = arith.negf %5 : vector<392x128xf32>
    %7 = math.exp %6 : vector<392x128xf32>
    %cst_5 = arith.constant 1.000000e+00 : f32
    %8 = vector.broadcast %cst_5 : f32 to vector<392x128xf32>
    %9 = arith.addf %8, %7 : vector<392x128xf32>
    %10 = arith.divf %8, %9 : vector<392x128xf32>
    %c0_6 = arith.constant 0 : index
    %c0_7 = arith.constant 0 : index
    %11 = vector.load %arg4[%c0_6, %c0_7] : memref<392x128xf32, #tpu.memory_space<vmem>>, vector<392x128xf32>
    tpu.vector_store %arg4[%c0_6, %c0_7], %10 {strides = array<i32>} : memref<392x128xf32, #tpu.memory_space<vmem>>, vector<392x128xf32>,
    return
  }
  func.func @transform_0(%arg0: i32) -> (i32, i32) {
    %c0_i32 = arith.constant 0 : i32
    %c0_i32_0 = arith.constant 0 : i32
    return %arg0, %c0_i32 : i32, i32
  }
  func.func @transform_1(%arg0: i32) -> (i32, i32) {
    %c0_i32 = arith.constant 0 : i32
    %c0_i32_0 = arith.constant 0 : i32
    %c0_i32_1 = arith.constant 0 : i32
    return %c0_i32, %c0_i32_0 : i32, i32
  }
  func.func @transform_2(%arg0: i32) -> (i32, i32) {
    %c0_i32 = arith.constant 0 : i32
    %c0_i32_0 = arith.constant 0 : i32
    %c0_i32_1 = arith.constant 0 : i32
    return %c0_i32, %c0_i32_0 : i32, i32
  }
  func.func @transform_3(%arg0: i32) -> (i32, i32) {
    %c0_i32 = arith.constant 0 : i32
    %c0_i32_0 = arith.constant 0 : i32
    return %arg0, %c0_i32 : i32, i32
  }
}

</mosaic_0001>

<llo_original>
// kernel: autoencoder_forward.6
$region0: #{autoencoder_forward.6}
  #allocation0 [shape = 'u32[]', space=smem, size = 0x4, offset = 0x4, fixed_abs, tag = 'smem constant byte address 0x4 - core index']
  #allocation1 [shape = 'u32[144,128]{1,0:T(1,128)}', space=vmem, size = 0x12000, scoped, tag = 'internal scratch']
  %s0 = inlined_call_operand.vmem [shape: bf16[392,9], index: 0, kind: input, shape index: {}]
  %s1 = inlined_call_operand.vmem [shape: bf16[9,128], index: 1, kind: input, shape index: {}]
  %s2 = inlined_call_operand.vmem [shape: f32[1,128], index: 2, kind: input, shape index: {}]
  %s3 = inlined_call_operand.vmem [shape: f32[392,128], index: 3, kind: output, shape index: {}]
  %s4 = sld [smem:[#allocation0]]
  $region22: #{autoencoder_forward.6} parent=0
    _
  %s6 = ssub.s32 1, %s4
  %s7 = scalar_select 0, %s6, %s4
  // Predicated region
  $region2: #{autoencoder_forward.6} parent=0 // pred_check
    _
  $region3: #{autoencoder_forward.6} parent=0 // pred_check_branch
    %9 = sbr.rel (0) target = $region5
  $region4: #{autoencoder_forward.6} parent=0 // pred_region
    _
  $region5: #{autoencoder_forward.6} parent=0 // pred_fallthru
    _
  // Predicated region
  $region6: #{autoencoder_forward.6} parent=0 // pred_check
    _
  $region7: #{autoencoder_forward.6} parent=0 // pred_check_branch
    %11 = sbr.rel (0) target = $region9
  $region8: #{autoencoder_forward.6} parent=0 // pred_region
    _
  $region9: #{autoencoder_forward.6} parent=0 // pred_fallthru
    _
  // Predicated region
  $region10: #{autoencoder_forward.6} parent=0 // pred_check
    _
  $region11: #{autoencoder_forward.6} parent=0 // pred_check_branch
    %13 = sbr.rel (0) target = $region13
  $region12: #{autoencoder_forward.6} parent=0 // pred_region
    _
  $region13: #{autoencoder_forward.6} parent=0 // pred_fallthru
    _
  %v15 = vld [vmem:[%s0] sm:$0xf]
  %v16 = vld [vmem:[%s0 + $0x4] sm:$0xf]
  %v17 = vld [vmem:[%s0 + $0x8] sm:$0xf]
  %v18 = vld [vmem:[%s0 + $0xc] sm:$0xf]
  %v19 = vld [vmem:[%s0 + $0x10] sm:$0xf]
  %v20 = vld [vmem:[%s0 + $0x14] sm:$0xf]
  %v21 = vld [vmem:[%s0 + $0x18] sm:$0xf]
  %v22 = vld [vmem:[%s0 + $0x1c] sm:$0xf]
  %v23 = vld [vmem:[%s0 + $0x20] sm:$0xf]
  %v24 = vld [vmem:[%s0 + $0x24] sm:$0xf]
  %v25 = vld [vmem:[%s0 + $0x28] sm:$0xf]
  %v26 = vld [vmem:[%s0 + $0x2c] sm:$0xf]
  %v27 = vld [vmem:[%s0 + $0x30] sm:$0xf]
  %v28 = vld [vmem:[%s0 + $0x34] sm:$0xf]
  %v29 = vld [vmem:[%s0 + $0x38] sm:$0xf]
  %v30 = vld [vmem:[%s0 + $0x3c] sm:$0xf]
  %v31 = vld [vmem:[%s0 + $0x40] sm:$0xf]
  %v32 = vld [vmem:[%s0 + $0x44] sm:$0xf]
  %v33 = vld [vmem:[%s0 + $0x48] sm:$0xf]
  %v34 = vld [vmem:[%s0 + $0x4c] sm:$0xf]
  %v35 = vld [vmem:[%s0 + $0x50] sm:$0xf]
  %v36 = vld [vmem:[%s0 + $0x54] sm:$0xf]
  %v37 = vld [vmem:[%s0 + $0x58] sm:$0xf]
  %v38 = vld [vmem:[%s0 + $0x5c] sm:$0xf]
  %v39 = vld [vmem:[%s0 + $0x60] sm:$0xf]
  %v40 = vld [vmem:[%s0 + $0x64] sm:$0xf]
  %v41 = vld [vmem:[%s0 + $0x68] sm:$0xf]
  %v42 = vld [vmem:[%s0 + $0x6c] sm:$0xf]
  %v43 = vld [vmem:[%s0 + $0x70] sm:$0xf]
  %v44 = vld [vmem:[%s0 + $0x74] sm:$0xf]
  %v45 = vld [vmem:[%s0 + $0x78] sm:$0xf]
  %v46 = vld [vmem:[%s0 + $0x7c] sm:$0xf]
  %v47 = vld [vmem:[%s0 + $0x80] sm:$0xf]
  %v48 = vld [vmem:[%s0 + $0x84] sm:$0xf]
  %v49 = vld [vmem:[%s0 + $0x88] sm:$0xf]
  %v50 = vld [vmem:[%s0 + $0x8c] sm:$0xf]
  %v51 = vld [vmem:[%s0 + $0x90] sm:$0xf]
  %v52 = vld [vmem:[%s0 + $0x94] sm:$0xf]
  %v53 = vld [vmem:[%s0 + $0x98] sm:$0xf]
  %v54 = vld [vmem:[%s0 + $0x9c] sm:$0xf]
  %v55 = vld [vmem:[%s0 + $0xa0] sm:$0xf]
  %v56 = vld [vmem:[%s0 + $0xa4] sm:$0xf]
  %v57 = vld [vmem:[%s0 + $0xa8] sm:$0xf]
  %v58 = vld [vmem:[%s0 + $0xac] sm:$0xf]
  %v59 = vld [vmem:[%s0 + $0xb0] sm:$0xf]
  %v60 = vld [vmem:[%s0 + $0xb4] sm:$0xf]
  %v61 = vld [vmem:[%s0 + $0xb8] sm:$0xf]
  %v62 = vld [vmem:[%s0 + $0xbc] sm:$0xf]
  %v63 = vld [vmem:[%s0 + $0xc0] sm:$0xf]
  %v64 = vld [vmem:[%s1] sm:$0xf]
  %v65 = vld [vmem:[%s1 + $0x4] sm:$0x1]
  %v66 = vld [vmem:[%s2] sm:$0x1]
  %v68 = vlaneseq
  %v69 = vshrl.u32 %v68, 7
  %v70 = vsub.s32 0, %v69
  %v71 = vrot.slane %v66, %v70
  %v122 = vunpack.c.l.b16 %v15
  %v123 = vunpack.c.l.b16 %v16
  %v124 = vunpack.c.l.b16 %v17
  %v125 = vunpack.c.l.b16 %v18
  %v126 = vunpack.c.l.b16 %v19
  %v127 = vunpack.c.l.b16 %v20
  %v128 = vunpack.c.l.b16 %v21
  %v129 = vunpack.c.l.b16 %v22
  %v130 = vunpack.c.l.b16 %v23
  %v131 = vunpack.c.l.b16 %v24
  %v132 = vunpack.c.l.b16 %v25
  %v133 = vunpack.c.l.b16 %v26
  %v134 = vunpack.c.l.b16 %v27
  %v135 = vunpack.c.l.b16 %v28
  %v136 = vunpack.c.l.b16 %v29
  %v137 = vunpack.c.l.b16 %v30
  %v138 = vunpack.c.l.b16 %v31
  %v139 = vunpack.c.l.b16 %v32
  %v140 = vunpack.c.l.b16 %v33
  %v141 = vunpack.c.l.b16 %v34
  %v142 = vunpack.c.l.b16 %v35
  %v143 = vunpack.c.l.b16 %v36
  %v144 = vunpack.c.l.b16 %v37
  %v145 = vunpack.c.l.b16 %v38
  %v146 = vunpack.c.l.b16 %v39
  %v147 = vunpack.c.l.b16 %v40
  %v148 = vunpack.c.l.b16 %v41
  %v149 = vunpack.c.l.b16 %v42
  %v150 = vunpack.c.l.b16 %v43
  %v151 = vunpack.c.l.b16 %v44
  %v152 = vunpack.c.l.b16 %v45
  %v153 = vunpack.c.l.b16 %v46
  %v154 = vunpack.c.l.b16 %v47
  %v155 = vunpack.c.l.b16 %v48
  %v156 = vunpack.c.l.b16 %v49
  %v157 = vunpack.c.l.b16 %v50
  %v158 = vunpack.c.l.b16 %v51
  %v159 = vunpack.c.l.b16 %v52
  %v160 = vunpack.c.l.b16 %v53
  %v161 = vunpack.c.l.b16 %v54
  %v162 = vunpack.c.l.b16 %v55
  %v163 = vunpack.c.l.b16 %v56
  %v164 = vunpack.c.l.b16 %v57
  %v165 = vunpack.c.l.b16 %v58
  %v166 = vunpack.c.l.b16 %v59
  %v167 = vunpack.c.l.b16 %v60
  %v168 = vunpack.c.l.b16 %v61
  %v169 = vunpack.c.l.b16 %v62
  %v170 = vunpack.c.l.b16 %v63
  %v171 = vpack.c.b16 %v123, %v122
  %v172 = vpack.c.b16 %v125, %v124
  %v173 = vpack.c.b16 %v127, %v126
  %v174 = vpack.c.b16 %v129, %v128
  %v175 = vpack.c.b16 %v131, %v130
  %v176 = vpack.c.b16 %v133, %v132
  %v177 = vpack.c.b16 %v135, %v134
  %v178 = vpack.c.b16 %v137, %v136
  %v179 = vpack.c.b16 %v139, %v138
  %v180 = vpack.c.b16 %v141, %v140
  %v181 = vpack.c.b16 %v143, %v142
  %v182 = vpack.c.b16 %v145, %v144
  %v183 = vpack.c.b16 %v147, %v146
  %v184 = vpack.c.b16 %v149, %v148
  %v185 = vpack.c.b16 %v151, %v150
  %v186 = vpack.c.b16 %v153, %v152
  %v187 = vpack.c.b16 %v155, %v154
  %v188 = vpack.c.b16 %v157, %v156
  %v189 = vpack.c.b16 %v159, %v158
  %v190 = vpack.c.b16 %v161, %v160
  %v191 = vpack.c.b16 %v163, %v162
  %v192 = vpack.c.b16 %v165, %v164
  %v193 = vpack.c.b16 %v167, %v166
  %v194 = vpack.c.b16 %v169, %v168
  %v195 = vpack.c.b16 %v170, %v170
  %v198 = vunpack.c.l.b16 %v64
  %v199 = vunpack.c.l.b16 %v65
  %v200 = vpack.c.b16 %v199, %v198
  %vm201 = vcmask 72704
  %v203 = vsel %vm201, %v171, 0
  %v206 = vsel %vm201, %v172, 0
  %v209 = vsel %vm201, %v173, 0
  %v212 = vsel %vm201, %v174, 0
  %v215 = vsel %vm201, %v175, 0
  %v218 = vsel %vm201, %v176, 0
  %v221 = vsel %vm201, %v177, 0
  %v224 = vsel %vm201, %v178, 0
  %v227 = vsel %vm201, %v179, 0
  %v230 = vsel %vm201, %v180, 0
  %v233 = vsel %vm201, %v181, 0
  %v236 = vsel %vm201, %v182, 0
  %v239 = vsel %vm201, %v183, 0
  %v242 = vsel %vm201, %v184, 0
  %v245 = vsel %vm201, %v185, 0
  %v248 = vsel %vm201, %v186, 0
  %v251 = vsel %vm201, %v187, 0
  %v254 = vsel %vm201, %v188, 0
  %v257 = vsel %vm201, %v189, 0
  %v260 = vsel %vm201, %v190, 0
  %v263 = vsel %vm201, %v191, 0
  %v266 = vsel %vm201, %v192, 0
  %v269 = vsel %vm201, %v193, 0
  %v272 = vsel %vm201, %v194, 0
  %v275 = vsel %vm201, %v195, 0
  %vm277 = vcmask 1043456
  %vm278 = vcmask 1044480
  %v279 = vsel %vm277, 4294967295, 65535
  %v280 = vsel %vm278, %v279, 0
  %v282 = vand.u32 %v200, %v280
  %284 = vmatprep.subr.bf16.mxu0 0
  %285 = vmatpush1.bf16.msra.mxu0 0
  %286 = vmatprep.subr.bf16.mxu0 0
  %287 = vmatpush1.bf16.msra.mxu0 0
  %288 = vmatprep.subr.bf16.mxu0 0
  %289 = vmatpush1.bf16.msra.mxu0 0
  %290 = vmatprep.subr.bf16.mxu0 0
  %291 = vmatpush1.bf16.msra.mxu0 0
  %292 = vmatprep.subr.bf16.mxu0 0
  %293 = vmatpush1.bf16.msra.mxu0 0
  %294 = vmatprep.subr.bf16.mxu0 0
  %295 = vmatpush1.bf16.msra.mxu0 0
  %296 = vmatprep.subr.bf16.mxu0 0
  %297 = vmatpush1.bf16.msra.mxu0 0
  %298 = vmatprep.subr.bf16.mxu0 0
  %299 = vmatpush1.bf16.msra.mxu0 %v282
  %300 = vmatprep.subr.bf16.mxu0 0
  %301 = vmatpush2.bf16.msra.mxu0 0
  %302 = vmatprep.subr.bf16.mxu0 0
  %303 = vmatpush2.bf16.msra.mxu0 0
  %304 = vmatprep.subr.bf16.mxu0 0
  %305 = vmatpush2.bf16.msra.mxu0 0
  %306 = vmatprep.subr.bf16.mxu0 0
  %307 = vmatpush2.bf16.msra.mxu0 0
  %308 = vmatprep.subr.bf16.mxu0 0
  %309 = vmatpush2.bf16.msra.mxu0 0
  %310 = vmatprep.subr.bf16.mxu0 0
  %311 = vmatpush2.bf16.msra.mxu0 0
  %312 = vmatprep.subr.bf16.mxu0 0
  %313 = vmatpush2.bf16.msra.mxu0 0
  %314 = vmatprep.subr.bf16.mxu0 0
  %315 = vmatpush2.bf16.msra.mxu0 0
  %316 = vmatprep.mubr.bf16.mxu0 0
  %317 = vmatmul.mubr.bf16.gmra.mxu0 %v203
  %v318 = vpop.f32.mrf.mxu0
  %v319 = vadd.f32 %v71, %v318
  %v320 = vpop.f32.mrf.mxu0
  %v321 = vpop.f32.mrf.mxu0
  %v322 = vadd.f32 %v71, %v321
  %v323 = vpop.f32.mrf.mxu0
  %324 = vmatprep.mubr.bf16.mxu0 0
  %325 = vmatmul.mubr.bf16.gmra.mxu0 %v206
  %v326 = vpop.f32.mrf.mxu0
  %v327 = vadd.f32 %v71, %v326
  %v328 = vpop.f32.mrf.mxu0
  %v329 = vpop.f32.mrf.mxu0
  %v330 = vadd.f32 %v71, %v329
  %v331 = vpop.f32.mrf.mxu0
  %332 = vmatprep.mubr.bf16.mxu0 0
  %333 = vmatmul.mubr.bf16.gmra.mxu0 %v209
  %v334 = vpop.f32.mrf.mxu0
  %v335 = vadd.f32 %v71, %v334
  %v336 = vpop.f32.mrf.mxu0
  %v337 = vpop.f32.mrf.mxu0
  %v338 = vadd.f32 %v71, %v337
  %v339 = vpop.f32.mrf.mxu0
  %340 = vmatprep.mubr.bf16.mxu0 0
  %341 = vmatmul.mubr.bf16.gmra.mxu0 %v212
  %v342 = vpop.f32.mrf.mxu0
  %v343 = vadd.f32 %v71, %v342
  %v344 = vpop.f32.mrf.mxu0
  %v345 = vpop.f32.mrf.mxu0
  %v346 = vadd.f32 %v71, %v345
  %v347 = vpop.f32.mrf.mxu0
  %348 = vmatprep.mubr.bf16.mxu0 0
  %349 = vmatmul.mubr.bf16.gmra.mxu0 %v215
  %v350 = vpop.f32.mrf.mxu0
  %v351 = vadd.f32 %v71, %v350
  %v352 = vpop.f32.mrf.mxu0
  %v353 = vpop.f32.mrf.mxu0
  %v354 = vadd.f32 %v71, %v353
  %v355 = vpop.f32.mrf.mxu0
  %356 = vmatprep.mubr.bf16.mxu0 0
  %357 = vmatmul.mubr.bf16.gmra.mxu0 %v218
  %v358 = vpop.f32.mrf.mxu0
  %v359 = vadd.f32 %v71, %v358
  %v360 = vpop.f32.mrf.mxu0
  %v361 = vpop.f32.mrf.mxu0
  %v362 = vadd.f32 %v71, %v361
  %v363 = vpop.f32.mrf.mxu0
  %364 = vmatprep.mubr.bf16.mxu0 0
  %365 = vmatmul.mubr.bf16.gmra.mxu0 %v221
  %v366 = vpop.f32.mrf.mxu0
  %v367 = vadd.f32 %v71, %v366
  %v368 = vpop.f32.mrf.mxu0
  %v369 = vpop.f32.mrf.mxu0
  %v370 = vadd.f32 %v71, %v369
  %v371 = vpop.f32.mrf.mxu0
  %372 = vmatprep.mubr.bf16.mxu0 0
  %373 = vmatmul.mubr.bf16.gmra.mxu0 %v224
  %v374 = vpop.f32.mrf.mxu0
  %v375 = vadd.f32 %v71, %v374
  %v376 = vpop.f32.mrf.mxu0
  %v377 = vpop.f32.mrf.mxu0
  %v378 = vadd.f32 %v71, %v377
  %v379 = vpop.f32.mrf.mxu0
  %380 = vmatprep.mubr.bf16.mxu0 0
  %381 = vmatmul.mubr.bf16.gmra.mxu0 %v227
  %v382 = vpop.f32.mrf.mxu0
  %v383 = vadd.f32 %v71, %v382
  %v384 = vpop.f32.mrf.mxu0
  %v385 = vpop.f32.mrf.mxu0
  %v386 = vadd.f32 %v71, %v385
  %v387 = vpop.f32.mrf.mxu0
  %388 = vmatprep.mubr.bf16.mxu0 0
  %389 = vmatmul.mubr.bf16.gmra.mxu0 %v230
  %v390 = vpop.f32.mrf.mxu0
  %v391 = vadd.f32 %v71, %v390
  %v392 = vpop.f32.mrf.mxu0
  %v393 = vpop.f32.mrf.mxu0
  %v394 = vadd.f32 %v71, %v393
  %v395 = vpop.f32.mrf.mxu0
  %396 = vmatprep.mubr.bf16.mxu0 0
  %397 = vmatmul.mubr.bf16.gmra.mxu0 %v233
  %v398 = vpop.f32.mrf.mxu0
  %v399 = vadd.f32 %v71, %v398
  %v400 = vpop.f32.mrf.mxu0
  %v401 = vpop.f32.mrf.mxu0
  %v402 = vadd.f32 %v71, %v401
  %v403 = vpop.f32.mrf.mxu0
  %404 = vmatprep.mubr.bf16.mxu0 0
  %405 = vmatmul.mubr.bf16.gmra.mxu0 %v236
  %v406 = vpop.f32.mrf.mxu0
  %v407 = vadd.f32 %v71, %v406
  %v408 = vpop.f32.mrf.mxu0
  %v409 = vpop.f32.mrf.mxu0
  %v410 = vadd.f32 %v71, %v409
  %v411 = vpop.f32.mrf.mxu0
  %412 = vmatprep.mubr.bf16.mxu0 0
  %413 = vmatmul.mubr.bf16.gmra.mxu0 %v239
  %v414 = vpop.f32.mrf.mxu0
  %v415 = vadd.f32 %v71, %v414
  %v416 = vpop.f32.mrf.mxu0
  %v417 = vpop.f32.mrf.mxu0
  %v418 = vadd.f32 %v71, %v417
  %v419 = vpop.f32.mrf.mxu0
  %420 = vmatprep.mubr.bf16.mxu0 0
  %421 = vmatmul.mubr.bf16.gmra.mxu0 %v242
  %v422 = vpop.f32.mrf.mxu0
  %v423 = vadd.f32 %v71, %v422
  %v424 = vpop.f32.mrf.mxu0
  %v425 = vpop.f32.mrf.mxu0
  %v426 = vadd.f32 %v71, %v425
  %v427 = vpop.f32.mrf.mxu0
  %428 = vmatprep.mubr.bf16.mxu0 0
  %429 = vmatmul.mubr.bf16.gmra.mxu0 %v245
  %v430 = vpop.f32.mrf.mxu0
  %v431 = vadd.f32 %v71, %v430
  %v432 = vpop.f32.mrf.mxu0
  %v433 = vpop.f32.mrf.mxu0
  %v434 = vadd.f32 %v71, %v433
  %v435 = vpop.f32.mrf.mxu0
  %436 = vmatprep.mubr.bf16.mxu0 0
  %437 = vmatmul.mubr.bf16.gmra.mxu0 %v248
  %v438 = vpop.f32.mrf.mxu0
  %v439 = vadd.f32 %v71, %v438
  %v440 = vpop.f32.mrf.mxu0
  %v441 = vpop.f32.mrf.mxu0
  %v442 = vadd.f32 %v71, %v441
  %v443 = vpop.f32.mrf.mxu0
  %444 = vmatprep.mubr.bf16.mxu0 0
  %445 = vmatmul.mubr.bf16.gmra.mxu0 %v251
  %v446 = vpop.f32.mrf.mxu0
  %v447 = vadd.f32 %v71, %v446
  %v448 = vpop.f32.mrf.mxu0
  %v449 = vpop.f32.mrf.mxu0
  %v450 = vadd.f32 %v71, %v449
  %v451 = vpop.f32.mrf.mxu0
  %452 = vmatprep.mubr.bf16.mxu0 0
  %453 = vmatmul.mubr.bf16.gmra.mxu0 %v254
  %v454 = vpop.f32.mrf.mxu0
  %v455 = vadd.f32 %v71, %v454
  %v456 = vpop.f32.mrf.mxu0
  %v457 = vpop.f32.mrf.mxu0
  %v458 = vadd.f32 %v71, %v457
  %v459 = vpop.f32.mrf.mxu0
  %460 = vmatprep.mubr.bf16.mxu0 0
  %461 = vmatmul.mubr.bf16.gmra.mxu0 %v257
  %v462 = vpop.f32.mrf.mxu0
  %v463 = vadd.f32 %v71, %v462
  %v464 = vpop.f32.mrf.mxu0
  %v465 = vpop.f32.mrf.mxu0
  %v466 = vadd.f32 %v71, %v465
  %v467 = vpop.f32.mrf.mxu0
  %468 = vmatprep.mubr.bf16.mxu0 0
  %469 = vmatmul.mubr.bf16.gmra.mxu0 %v260
  %v470 = vpop.f32.mrf.mxu0
  %v471 = vadd.f32 %v71, %v470
  %v472 = vpop.f32.mrf.mxu0
  %v473 = vpop.f32.mrf.mxu0
  %v474 = vadd.f32 %v71, %v473
  %v475 = vpop.f32.mrf.mxu0
  %476 = vmatprep.mubr.bf16.mxu0 0
  %477 = vmatmul.mubr.bf16.gmra.mxu0 %v263
  %v478 = vpop.f32.mrf.mxu0
  %v479 = vadd.f32 %v71, %v478
  %v480 = vpop.f32.mrf.mxu0
  %v481 = vpop.f32.mrf.mxu0
  %v482 = vadd.f32 %v71, %v481
  %v483 = vpop.f32.mrf.mxu0
  %484 = vmatprep.mubr.bf16.mxu0 0
  %485 = vmatmul.mubr.bf16.gmra.mxu0 %v266
  %v486 = vpop.f32.mrf.mxu0
  %v487 = vadd.f32 %v71, %v486
  %v488 = vpop.f32.mrf.mxu0
  %v489 = vpop.f32.mrf.mxu0
  %v490 = vadd.f32 %v71, %v489
  %v491 = vpop.f32.mrf.mxu0
  %492 = vmatprep.mubr.bf16.mxu0 0
  %493 = vmatmul.mubr.bf16.gmra.mxu0 %v269
  %v494 = vpop.f32.mrf.mxu0
  %v495 = vadd.f32 %v71, %v494
  %v496 = vpop.f32.mrf.mxu0
  %v497 = vpop.f32.mrf.mxu0
  %v498 = vadd.f32 %v71, %v497
  %v499 = vpop.f32.mrf.mxu0
  %500 = vmatprep.mubr.bf16.mxu0 0
  %501 = vmatmul.mubr.bf16.gmra.mxu0 %v272
  %v502 = vpop.f32.mrf.mxu0
  %v503 = vadd.f32 %v71, %v502
  %v504 = vpop.f32.mrf.mxu0
  %v505 = vpop.f32.mrf.mxu0
  %v506 = vadd.f32 %v71, %v505
  %v507 = vpop.f32.mrf.mxu0
  %508 = vmatprep.mubr.bf16.mxu0 0
  %509 = vmatmul.mubr.bf16.gmra.mxu0 %v275
  %v510 = vpop.f32.mrf.mxu0
  %v511 = vadd.f32 %v71, %v510
  %v512 = vpop.f32.mrf.mxu0
  %v513 = vpop.f32.mrf.mxu0
  %v514 = vpop.f32.mrf.mxu0
  %515 = vdwg.mxu0
  %v516 = vmax.f32 %v319, 0.0
  %v517 = vmax.f32 %v322, 0.0
  %v518 = vmax.f32 %v327, 0.0
  %v519 = vmax.f32 %v330, 0.0
  %v520 = vmax.f32 %v335, 0.0
  %v521 = vmax.f32 %v338, 0.0
  %v522 = vmax.f32 %v343, 0.0
  %v523 = vmax.f32 %v346, 0.0
  %v524 = vmax.f32 %v351, 0.0
  %v525 = vmax.f32 %v354, 0.0
  %v526 = vmax.f32 %v359, 0.0
  %v527 = vmax.f32 %v362, 0.0
  %v528 = vmax.f32 %v367, 0.0
  %v529 = vmax.f32 %v370, 0.0
  %v530 = vmax.f32 %v375, 0.0
  %v531 = vmax.f32 %v378, 0.0
  %v532 = vmax.f32 %v383, 0.0
  %v533 = vmax.f32 %v386, 0.0
  %v534 = vmax.f32 %v391, 0.0
  %v535 = vmax.f32 %v394, 0.0
  %v536 = vmax.f32 %v399, 0.0
  %v537 = vmax.f32 %v402, 0.0
  %v538 = vmax.f32 %v407, 0.0
  %v539 = vmax.f32 %v410, 0.0
  %v540 = vmax.f32 %v415, 0.0
  %v541 = vmax.f32 %v418, 0.0
  %v542 = vmax.f32 %v423, 0.0
  %v543 = vmax.f32 %v426, 0.0
  %v544 = vmax.f32 %v431, 0.0
  %v545 = vmax.f32 %v434, 0.0
  %v546 = vmax.f32 %v439, 0.0
  %v547 = vmax.f32 %v442, 0.0
  %v548 = vmax.f32 %v447, 0.0
  %v549 = vmax.f32 %v450, 0.0
  %v550 = vmax.f32 %v455, 0.0
  %v551 = vmax.f32 %v458, 0.0
  %v552 = vmax.f32 %v463, 0.0
  %v553 = vmax.f32 %v466, 0.0
  %v554 = vmax.f32 %v471, 0.0
  %v555 = vmax.f32 %v474, 0.0
  %v556 = vmax.f32 %v479, 0.0
  %v557 = vmax.f32 %v482, 0.0
  %v558 = vmax.f32 %v487, 0.0
  %v559 = vmax.f32 %v490, 0.0
  %v560 = vmax.f32 %v495, 0.0
  %v561 = vmax.f32 %v498, 0.0
  %v562 = vmax.f32 %v503, 0.0
  %v563 = vmax.f32 %v506, 0.0
  %v564 = vmax.f32 %v511, 0.0
  %565 = vst [vmem:[%s3] sm:$0xff] %v516
  %566 = vst [vmem:[%s3 + $0x8] sm:$0xff] %v517
  %567 = vst [vmem:[%s3 + $0x10] sm:$0xff] %v518
  %568 = vst [vmem:[%s3 + $0x18] sm:$0xff] %v519
  %569 = vst [vmem:[%s3 + $0x20] sm:$0xff] %v520
  %570 = vst [vmem:[%s3 + $0x28] sm:$0xff] %v521
  %571 = vst [vmem:[%s3 + $0x30] sm:$0xff] %v522
  %572 = vst [vmem:[%s3 + $0x38] sm:$0xff] %v523
  %573 = vst [vmem:[%s3 + $0x40] sm:$0xff] %v524
  %574 = vst [vmem:[%s3 + $0x48] sm:$0xff] %v525
  %575 = vst [vmem:[%s3 + $0x50] sm:$0xff] %v526
  %576 = vst [vmem:[%s3 + $0x58] sm:$0xff] %v527
  %577 = vst [vmem:[%s3 + $0x60] sm:$0xff] %v528
  %578 = vst [vmem:[%s3 + $0x68] sm:$0xff] %v529
  %579 = vst [vmem:[%s3 + $0x70] sm:$0xff] %v530
  %580 = vst [vmem:[%s3 + $0x78] sm:$0xff] %v531
  %581 = vst [vmem:[%s3 + $0x80] sm:$0xff] %v532
  %582 = vst [vmem:[%s3 + $0x88] sm:$0xff] %v533
  %583 = vst [vmem:[%s3 + $0x90] sm:$0xff] %v534
  %584 = vst [vmem:[%s3 + $0x98] sm:$0xff] %v535
  %585 = vst [vmem:[%s3 + $0xa0] sm:$0xff] %v536
  %586 = vst [vmem:[%s3 + $0xa8] sm:$0xff] %v537
  %587 = vst [vmem:[%s3 + $0xb0] sm:$0xff] %v538
  %588 = vst [vmem:[%s3 + $0xb8] sm:$0xff] %v539
  %589 = vst [vmem:[%s3 + $0xc0] sm:$0xff] %v540
  %590 = vst [vmem:[%s3 + $0xc8] sm:$0xff] %v541
  %591 = vst [vmem:[%s3 + $0xd0] sm:$0xff] %v542
  %592 = vst [vmem:[%s3 + $0xd8] sm:$0xff] %v543
  %593 = vst [vmem:[%s3 + $0xe0] sm:$0xff] %v544
  %594 = vst [vmem:[%s3 + $0xe8] sm:$0xff] %v545
  %595 = vst [vmem:[%s3 + $0xf0] sm:$0xff] %v546
  %596 = vst [vmem:[%s3 + $0xf8] sm:$0xff] %v547
  %597 = vst [vmem:[%s3 + $0x100] sm:$0xff] %v548
  %598 = vst [vmem:[%s3 + $0x108] sm:$0xff] %v549
  %599 = vst [vmem:[%s3 + $0x110] sm:$0xff] %v550
  %600 = vst [vmem:[%s3 + $0x118] sm:$0xff] %v551
  %601 = vst [vmem:[%s3 + $0x120] sm:$0xff] %v552
  %602 = vst [vmem:[%s3 + $0x128] sm:$0xff] %v553
  %603 = vst [vmem:[%s3 + $0x130] sm:$0xff] %v554
  %604 = vst [vmem:[%s3 + $0x138] sm:$0xff] %v555
  %605 = vst [vmem:[%s3 + $0x140] sm:$0xff] %v556
  %606 = vst [vmem:[%s3 + $0x148] sm:$0xff] %v557
  %607 = vst [vmem:[%s3 + $0x150] sm:$0xff] %v558
  %608 = vst [vmem:[%s3 + $0x158] sm:$0xff] %v559
  %609 = vst [vmem:[%s3 + $0x160] sm:$0xff] %v560
  %610 = vst [vmem:[%s3 + $0x168] sm:$0xff] %v561
  %611 = vst [vmem:[%s3 + $0x170] sm:$0xff] %v562
  %612 = vst [vmem:[%s3 + $0x178] sm:$0xff] %v563
  %613 = vst [vmem:[%s3 + $0x180] sm:$0xff] %v564
  // Predicated region
  $region14: #{autoencoder_forward.6} parent=0 // pred_check
    _
  $region15: #{autoencoder_forward.6} parent=0 // pred_check_branch
    %615 = sbr.rel (0) target = $region17
  $region16: #{autoencoder_forward.6} parent=0 // pred_region
    _
  $region17: #{autoencoder_forward.6} parent=0 // pred_fallthru
    _
  // Predicated region
  $region18: #{autoencoder_forward.6} parent=0 // pred_check
    _
  $region19: #{autoencoder_forward.6} parent=0 // pred_check_branch
    %617 = sbr.rel (0) target = $region21
  $region20: #{autoencoder_forward.6} parent=0 // pred_region
    _
  $region21: #{autoencoder_forward.6} parent=0 // pred_fallthru
    _

// kernel: autoencoder_forward.7
$region0: #{autoencoder_forward.7}
  #allocation0 [shape = 'u32[]', space=smem, size = 0x4, offset = 0x4, fixed_abs, tag = 'smem constant byte address 0x4 - core index']
  #allocation1 [shape = 'u32[144,128]{1,0:T(1,128)}', space=vmem, size = 0x12000, scoped, tag = 'internal scratch']
  %s0 = inlined_call_operand.vmem [shape: bf16[104,144], index: 0, kind: input, shape index: {}]
  %s1 = inlined_call_operand.vmem [shape: bf16[144,128], index: 1, kind: input, shape index: {}]
  %s2 = inlined_call_operand.vmem [shape: f32[1,128], index: 2, kind: input, shape index: {}]
  %s3 = inlined_call_operand.vmem [shape: f32[104,128], index: 3, kind: output, shape index: {}]
  %s4 = sld [smem:[#allocation0]]
  $region22: #{autoencoder_forward.7} parent=0
    _
  %s6 = ssub.s32 1, %s4
  %s7 = scalar_select 0, %s6, %s4
  // Predicated region
  $region2: #{autoencoder_forward.7} parent=0 // pred_check
    _
  $region3: #{autoencoder_forward.7} parent=0 // pred_check_branch
    %9 = sbr.rel (0) target = $region5
  $region4: #{autoencoder_forward.7} parent=0 // pred_region
    _
  $region5: #{autoencoder_forward.7} parent=0 // pred_fallthru
    _
  // Predicated region
  $region6: #{autoencoder_forward.7} parent=0 // pred_check
    _
  $region7: #{autoencoder_forward.7} parent=0 // pred_check_branch
    %11 = sbr.rel (0) target = $region9
  $region8: #{autoencoder_forward.7} parent=0 // pred_region
    _
  $region9: #{autoencoder_forward.7} parent=0 // pred_fallthru
    _
  // Predicated region
  $region10: #{autoencoder_forward.7} parent=0 // pred_check
    _
  $region11: #{autoencoder_forward.7} parent=0 // pred_check_branch
    %13 = sbr.rel (0) target = $region13
  $region12: #{autoencoder_forward.7} parent=0 // pred_region
    _
  $region13: #{autoencoder_forward.7} parent=0 // pred_fallthru
    _
  %v15 = vld [vmem:[%s0] sm:$0xff]
  %v16 = vld [vmem:[%s0 + $0x8] sm:$0xff]
  %v17 = vld [vmem:[%s0 + $0x10] sm:$0xff]
  %v18 = vld [vmem:[%s0 + $0x18] sm:$0xff]
  %v19 = vld [vmem:[%s0 + $0x20] sm:$0xff]
  %v20 = vld [vmem:[%s0 + $0x28] sm:$0xff]
  %v21 = vld [vmem:[%s0 + $0x30] sm:$0xff]
  %v22 = vld [vmem:[%s0 + $0x38] sm:$0xff]
  %v23 = vld [vmem:[%s0 + $0x40] sm:$0xff]
  %v24 = vld [vmem:[%s0 + $0x48] sm:$0xff]
  %v25 = vld [vmem:[%s0 + $0x50] sm:$0xff]
  %v26 = vld [vmem:[%s0 + $0x58] sm:$0xff]
  %v27 = vld [vmem:[%s0 + $0x60] sm:$0xff]
  %v28 = vld [vmem:[%s1] sm:$0xf]
  %v29 = vld [vmem:[%s1 + $0x4] sm:$0xf]
  %v30 = vld [vmem:[%s1 + $0x8] sm:$0xf]
  %v31 = vld [vmem:[%s1 + $0xc] sm:$0xf]
  %v32 = vld [vmem:[%s1 + $0x10] sm:$0xf]
  %v33 = vld [vmem:[%s1 + $0x14] sm:$0xf]
  %v34 = vld [vmem:[%s1 + $0x18] sm:$0xf]
  %v35 = vld [vmem:[%s1 + $0x1c] sm:$0xf]
  %v36 = vld [vmem:[%s1 + $0x20] sm:$0xf]
  %v37 = vld [vmem:[%s1 + $0x24] sm:$0xf]
  %v38 = vld [vmem:[%s1 + $0x28] sm:$0xf]
  %v39 = vld [vmem:[%s1 + $0x2c] sm:$0xf]
  %v40 = vld [vmem:[%s1 + $0x30] sm:$0xf]
  %v41 = vld [vmem:[%s1 + $0x34] sm:$0xf]
  %v42 = vld [vmem:[%s1 + $0x38] sm:$0xf]
  %v43 = vld [vmem:[%s1 + $0x3c] sm:$0xf]
  %v44 = vld [vmem:[%s1 + $0x40] sm:$0xf]
  %v45 = vld [vmem:[%s1 + $0x44] sm:$0xf]
  %v46 = vld [vmem:[%s2] sm:$0x1]
  %v48 = vlaneseq
  %v49 = vshrl.u32 %v48, 7
  %v50 = vsub.s32 0, %v49
  %v51 = vrot.slane %v46, %v50
  %v66 = vunpack.c.l.b16 %v15
  %v67 = vunpack.c.h.b16 %v15
  %v68 = vunpack.c.l.b16 %v16
  %v69 = vunpack.c.h.b16 %v16
  %v70 = vunpack.c.l.b16 %v17
  %v71 = vunpack.c.h.b16 %v17
  %v72 = vunpack.c.l.b16 %v18
  %v73 = vunpack.c.h.b16 %v18
  %v74 = vunpack.c.l.b16 %v19
  %v75 = vunpack.c.h.b16 %v19
  %v76 = vunpack.c.l.b16 %v20
  %v77 = vunpack.c.h.b16 %v20
  %v78 = vunpack.c.l.b16 %v21
  %v79 = vunpack.c.h.b16 %v21
  %v80 = vunpack.c.l.b16 %v22
  %v81 = vunpack.c.h.b16 %v22
  %v82 = vunpack.c.l.b16 %v23
  %v83 = vunpack.c.h.b16 %v23
  %v84 = vunpack.c.l.b16 %v24
  %v85 = vunpack.c.h.b16 %v24
  %v86 = vunpack.c.l.b16 %v25
  %v87 = vunpack.c.h.b16 %v25
  %v88 = vunpack.c.l.b16 %v26
  %v89 = vunpack.c.h.b16 %v26
  %v90 = vunpack.c.l.b16 %v27
  %v91 = vunpack.c.h.b16 %v27
  %v92 = vpack.c.b16 %v68, %v66
  %v93 = vpack.c.b16 %v69, %v67
  %v94 = vpack.c.b16 %v72, %v70
  %v95 = vpack.c.b16 %v73, %v71
  %v96 = vpack.c.b16 %v76, %v74
  %v97 = vpack.c.b16 %v77, %v75
  %v98 = vpack.c.b16 %v80, %v78
  %v99 = vpack.c.b16 %v81, %v79
  %v100 = vpack.c.b16 %v84, %v82
  %v101 = vpack.c.b16 %v85, %v83
  %v102 = vpack.c.b16 %v88, %v86
  %v103 = vpack.c.b16 %v89, %v87
  %v104 = vpack.c.b16 %v90, %v90
  %v105 = vpack.c.b16 %v91, %v91
  %v131 = vunpack.c.l.b16 %v28
  %v132 = vunpack.c.l.b16 %v29
  %v133 = vunpack.c.l.b16 %v30
  %v134 = vunpack.c.l.b16 %v31
  %v135 = vunpack.c.l.b16 %v32
  %v136 = vunpack.c.l.b16 %v33
  %v137 = vunpack.c.l.b16 %v34
  %v138 = vunpack.c.l.b16 %v35
  %v139 = vunpack.c.l.b16 %v36
  %v140 = vunpack.c.l.b16 %v37
  %v141 = vunpack.c.l.b16 %v38
  %v142 = vunpack.c.l.b16 %v39
  %v143 = vunpack.c.l.b16 %v40
  %v144 = vunpack.c.l.b16 %v41
  %v145 = vunpack.c.l.b16 %v42
  %v146 = vunpack.c.l.b16 %v43
  %v147 = vunpack.c.l.b16 %v44
  %v148 = vunpack.c.l.b16 %v45
  %v149 = vpack.c.b16 %v132, %v131
  %v150 = vpack.c.b16 %v134, %v133
  %v151 = vpack.c.b16 %v136, %v135
  %v152 = vpack.c.b16 %v138, %v137
  %v153 = vpack.c.b16 %v140, %v139
  %v154 = vpack.c.b16 %v142, %v141
  %v155 = vpack.c.b16 %v144, %v143
  %v156 = vpack.c.b16 %v146, %v145
  %v157 = vpack.c.b16 %v148, %v147
  %vm167 = vcmask 130048
  %v169 = vsel %vm167, %v93, 0
  %v172 = vsel %vm167, %v95, 0
  %v175 = vsel %vm167, %v97, 0
  %v178 = vsel %vm167, %v99, 0
  %v181 = vsel %vm167, %v101, 0
  %v184 = vsel %vm167, %v103, 0
  %v187 = vsel %vm167, %v105, 0
  %189 = vmatprep.subr.bf16.mxu0 0
  %190 = vmatpush1.bf16.msra.mxu0 %v156
  %191 = vmatprep.subr.bf16.mxu0 0
  %192 = vmatpush1.bf16.msra.mxu0 %v155
  %193 = vmatprep.subr.bf16.mxu0 0
  %194 = vmatpush1.bf16.msra.mxu0 %v154
  %195 = vmatprep.subr.bf16.mxu0 0
  %196 = vmatpush1.bf16.msra.mxu0 %v153
  %197 = vmatprep.subr.bf16.mxu0 0
  %198 = vmatpush1.bf16.msra.mxu0 %v152
  %199 = vmatprep.subr.bf16.mxu0 0
  %200 = vmatpush1.bf16.msra.mxu0 %v151
  %201 = vmatprep.subr.bf16.mxu0 0
  %202 = vmatpush1.bf16.msra.mxu0 %v150
  %203 = vmatprep.subr.bf16.mxu0 0
  %204 = vmatpush1.bf16.msra.mxu0 %v149
  %205 = vmatprep.subr.bf16.mxu0 0
  %206 = vmatpush2.bf16.msra.mxu0 0
  %207 = vmatprep.subr.bf16.mxu0 0
  %208 = vmatpush2.bf16.msra.mxu0 0
  %209 = vmatprep.subr.bf16.mxu0 0
  %210 = vmatpush2.bf16.msra.mxu0 0
  %211 = vmatprep.subr.bf16.mxu0 0
  %212 = vmatpush2.bf16.msra.mxu0 0
  %213 = vmatprep.subr.bf16.mxu0 0
  %214 = vmatpush2.bf16.msra.mxu0 0
  %215 = vmatprep.subr.bf16.mxu0 0
  %216 = vmatpush2.bf16.msra.mxu0 0
  %217 = vmatprep.subr.bf16.mxu0 0
  %218 = vmatpush2.bf16.msra.mxu0 0
  %219 = vmatprep.subr.bf16.mxu0 0
  %220 = vmatpush2.bf16.msra.mxu0 %v157
  %221 = vmatprep.mubr.bf16.mxu0 %v169
  %222 = vmatmul.mubr.bf16.gmra.mxu0 %v92
  %v223 = vpop.f32.mrf.mxu0
  %v224 = vadd.f32 %v51, %v223
  %v225 = vpop.f32.mrf.mxu0
  %v226 = vpop.f32.mrf.mxu0
  %v227 = vadd.f32 %v51, %v226
  %v228 = vpop.f32.mrf.mxu0
  %229 = vmatprep.mubr.bf16.mxu0 %v172
  %230 = vmatmul.mubr.bf16.gmra.mxu0 %v94
  %v231 = vpop.f32.mrf.mxu0
  %v232 = vadd.f32 %v51, %v231
  %v233 = vpop.f32.mrf.mxu0
  %v234 = vpop.f32.mrf.mxu0
  %v235 = vadd.f32 %v51, %v234
  %v236 = vpop.f32.mrf.mxu0
  %237 = vmatprep.mubr.bf16.mxu0 %v175
  %238 = vmatmul.mubr.bf16.gmra.mxu0 %v96
  %v239 = vpop.f32.mrf.mxu0
  %v240 = vadd.f32 %v51, %v239
  %v241 = vpop.f32.mrf.mxu0
  %v242 = vpop.f32.mrf.mxu0
  %v243 = vadd.f32 %v51, %v242
  %v244 = vpop.f32.mrf.mxu0
  %245 = vmatprep.mubr.bf16.mxu0 %v178
  %246 = vmatmul.mubr.bf16.gmra.mxu0 %v98
  %v247 = vpop.f32.mrf.mxu0
  %v248 = vadd.f32 %v51, %v247
  %v249 = vpop.f32.mrf.mxu0
  %v250 = vpop.f32.mrf.mxu0
  %v251 = vadd.f32 %v51, %v250
  %v252 = vpop.f32.mrf.mxu0
  %253 = vmatprep.mubr.bf16.mxu0 %v181
  %254 = vmatmul.mubr.bf16.gmra.mxu0 %v100
  %v255 = vpop.f32.mrf.mxu0
  %v256 = vadd.f32 %v51, %v255
  %v257 = vpop.f32.mrf.mxu0
  %v258 = vpop.f32.mrf.mxu0
  %v259 = vadd.f32 %v51, %v258
  %v260 = vpop.f32.mrf.mxu0
  %261 = vmatprep.mubr.bf16.mxu0 %v184
  %262 = vmatmul.mubr.bf16.gmra.mxu0 %v102
  %v263 = vpop.f32.mrf.mxu0
  %v264 = vadd.f32 %v51, %v263
  %v265 = vpop.f32.mrf.mxu0
  %v266 = vpop.f32.mrf.mxu0
  %v267 = vadd.f32 %v51, %v266
  %v268 = vpop.f32.mrf.mxu0
  %269 = vmatprep.mubr.bf16.mxu0 %v187
  %270 = vmatmul.mubr.bf16.gmra.mxu0 %v104
  %v271 = vpop.f32.mrf.mxu0
  %v272 = vadd.f32 %v51, %v271
  %v273 = vpop.f32.mrf.mxu0
  %v274 = vpop.f32.mrf.mxu0
  %v275 = vpop.f32.mrf.mxu0
  %276 = vdwg.mxu0
  %v277 = vmax.f32 %v224, 0.0
  %v278 = vmax.f32 %v227, 0.0
  %v279 = vmax.f32 %v232, 0.0
  %v280 = vmax.f32 %v235, 0.0
  %v281 = vmax.f32 %v240, 0.0
  %v282 = vmax.f32 %v243, 0.0
  %v283 = vmax.f32 %v248, 0.0
  %v284 = vmax.f32 %v251, 0.0
  %v285 = vmax.f32 %v256, 0.0
  %v286 = vmax.f32 %v259, 0.0
  %v287 = vmax.f32 %v264, 0.0
  %v288 = vmax.f32 %v267, 0.0
  %v289 = vmax.f32 %v272, 0.0
  %290 = vst [vmem:[%s3] sm:$0xff] %v277
  %291 = vst [vmem:[%s3 + $0x8] sm:$0xff] %v278
  %292 = vst [vmem:[%s3 + $0x10] sm:$0xff] %v279
  %293 = vst [vmem:[%s3 + $0x18] sm:$0xff] %v280
  %294 = vst [vmem:[%s3 + $0x20] sm:$0xff] %v281
  %295 = vst [vmem:[%s3 + $0x28] sm:$0xff] %v282
  %296 = vst [vmem:[%s3 + $0x30] sm:$0xff] %v283
  %297 = vst [vmem:[%s3 + $0x38] sm:$0xff] %v284
  %298 = vst [vmem:[%s3 + $0x40] sm:$0xff] %v285
  %299 = vst [vmem:[%s3 + $0x48] sm:$0xff] %v286
  %300 = vst [vmem:[%s3 + $0x50] sm:$0xff] %v287
  %301 = vst [vmem:[%s3 + $0x58] sm:$0xff] %v288
  %302 = vst [vmem:[%s3 + $0x60] sm:$0xff] %v289
  // Predicated region
  $region14: #{autoencoder_forward.7} parent=0 // pred_check
    _
  $region15: #{autoencoder_forward.7} parent=0 // pred_check_branch
    %304 = sbr.rel (0) target = $region17
  $region16: #{autoencoder_forward.7} parent=0 // pred_region
    _
  $region17: #{autoencoder_forward.7} parent=0 // pred_fallthru
    _
  // Predicated region
  $region18: #{autoencoder_forward.7} parent=0 // pred_check
    _
  $region19: #{autoencoder_forward.7} parent=0 // pred_check_branch
    %306 = sbr.rel (0) target = $region21
  $region20: #{autoencoder_forward.7} parent=0 // pred_region
    _
  $region21: #{autoencoder_forward.7} parent=0 // pred_fallthru
    _

// kernel: tile.18
$region0: #{tile.18}
  #allocation0 [shape = 's32[1]{0}', space=sflag, size = 0x4, scoped, tag = 'scoped memory for tile.18']
  %s0 = inlined_call_operand.vmem [shape: f32[32], index: 0, kind: input, shape index: {}]
  %s1 = inlined_call_operand.vmem [shape: f32[49,32], index: 1, kind: output, shape index: {}]
  // Predicated region
  $region2: #{tile.18} parent=0 // pred_check
    _
  $region3: #{tile.18} parent=0 // pred_check_branch
    %3 = sbr.rel (0) target = $region5
  $region4: #{tile.18} parent=0 // pred_region
    _
  $region5: #{tile.18} parent=0 // pred_fallthru
    _
  %v4 = vld [vmem:[%s0] ss:$0 sm:$0xff]
  %5 = vst [vmem:[%s1] sm:$0xff] %v4
  %s6 = scalar_lea.vmem %s1, 8
  %7 = vst [vmem:[%s6] sm:$0xff] %v4
  %s8 = scalar_lea.vmem %s1, 16
  %9 = vst [vmem:[%s8] sm:$0xff] %v4
  %s10 = scalar_lea.vmem %s1, 24
  %11 = vst [vmem:[%s10] sm:$0xff] %v4
  %s12 = scalar_lea.vmem %s1, 32
  %13 = vst [vmem:[%s12] sm:$0xff] %v4
  %s14 = scalar_lea.vmem %s1, 40
  %15 = vst [vmem:[%s14] sm:$0xff] %v4
  %s16 = scalar_lea.vmem %s1, 48
  %17 = vst [vmem:[%s16] sm:$0xff] %v4

// kernel: tile.19
$region0: #{tile.19}
  %s0 = inlined_call_operand.vmem [shape: f32[49,32], index: 0, kind: input, shape index: {}]
  %s1 = inlined_call_operand.vmem [shape: f32[1568], index: 1, kind: output, shape index: {}]
  %v2 = vld [vmem:[%s0] ss:$4 sm:$0xff]
  %vm3 = vcmask 261120
  %4 = vst.msk [vmem:[%s1] sm:$0xff] %vm3, %v2
  %s5 = scalar_lea.vmem %s0, 32
  %v6 = vld [vmem:[%s5] ss:$4 sm:$0x1f]
  %vm7 = vcmask 261120
  %s8 = scalar_lea.vmem %s1, 8
  %9 = vst.msk [vmem:[%s8] sm:$0x1f] %vm7, %v6
  %s10 = scalar_lea.vmem %s0, 3
  %v11 = vld [vmem:[%s10] ss:$4 sm:$0xff]
  %12 = vrot.lane.b32.xlu0 %v11, 96
  %v13 = vpop.permute.xlu0 %12
  %vm14 = vcmask 1048320
  %15 = vst.msk [vmem:[%s1] sm:$0xff] %vm14, %v13
  %s16 = scalar_lea.vmem %s0, 35
  %v17 = vld [vmem:[%s16] ss:$4 sm:$0xf]
  %18 = vrot.lane.b32.xlu0 %v17, 96
  %v19 = vpop.permute.xlu0 %18
  %vm20 = vcmask 1048320
  %s21 = scalar_lea.vmem %s1, 8
  %22 = vst.msk [vmem:[%s21] sm:$0xf] %vm20, %v19
  %s23 = scalar_lea.vmem %s0, 2
  %v24 = vld [vmem:[%s23] ss:$4 sm:$0xff]
  %25 = vrot.lane.b32.xlu0 %v24, 64
  %v26 = vpop.permute.xlu0 %25
  %vm27 = vcmask 785920
  %28 = vst.msk [vmem:[%s1] sm:$0xff] %vm27, %v26
  %s29 = scalar_lea.vmem %s0, 34
  %v30 = vld [vmem:[%s29] ss:$4 sm:$0xf]
  %31 = vrot.lane.b32.xlu0 %v30, 64
  %v32 = vpop.permute.xlu0 %31
  %vm33 = vcmask 785920
  %s34 = scalar_lea.vmem %s1, 8
  %35 = vst.msk [vmem:[%s34] sm:$0xf] %vm33, %v32
  %s36 = scalar_lea.vmem %s0, 1
  %v37 = vld [vmem:[%s36] ss:$4 sm:$0xff]
  %38 = vrot.lane.b32.xlu0 %v37, 32
  %v39 = vpop.permute.xlu0 %38
  %vm40 = vcmask 523520
  %41 = vst.msk [vmem:[%s1] sm:$0xff] %vm40, %v39
  %s42 = scalar_lea.vmem %s0, 33
  %v43 = vld [vmem:[%s42] ss:$4 sm:$0xf]
  %44 = vrot.lane.b32.xlu0 %v43, 32
  %v45 = vpop.permute.xlu0 %44
  %vm46 = vcmask 523520
  %s47 = scalar_lea.vmem %s1, 8
  %48 = vst.msk [vmem:[%s47] sm:$0xf] %vm46, %v45

// kernel: autoencoder_forward.8
$region0: #{autoencoder_forward.8}
  #allocation0 [shape = 'u32[]', space=smem, size = 0x4, offset = 0x4, fixed_abs, tag = 'smem constant byte address 0x4 - core index']
  #allocation1 [shape = 'u32[144,128]{1,0:T(1,128)}', space=vmem, size = 0x12000, scoped, tag = 'internal scratch']
  %s0 = inlined_call_operand.vmem [shape: bf16[8,1568], index: 0, kind: input, shape index: {}]
  %s1 = inlined_call_operand.vmem [shape: bf16[1568,128], index: 1, kind: input, shape index: {}]
  %s2 = inlined_call_operand.vmem [shape: f32[1,128], index: 2, kind: input, shape index: {}]
  %s3 = inlined_call_operand.vmem [shape: f32[8,128], index: 3, kind: output, shape index: {}]
  %s4 = sld [smem:[#allocation0]]
  $region22: #{autoencoder_forward.8} parent=0
    _
  %s6 = ssub.s32 1, %s4
  %s7 = scalar_select 0, %s6, %s4
  // Predicated region
  $region2: #{autoencoder_forward.8} parent=0 // pred_check
    _
  $region3: #{autoencoder_forward.8} parent=0 // pred_check_branch
    %9 = sbr.rel (0) target = $region5
  $region4: #{autoencoder_forward.8} parent=0 // pred_region
    _
  $region5: #{autoencoder_forward.8} parent=0 // pred_fallthru
    _
  // Predicated region
  $region6: #{autoencoder_forward.8} parent=0 // pred_check
    _
  $region7: #{autoencoder_forward.8} parent=0 // pred_check_branch
    %11 = sbr.rel (0) target = $region9
  $region8: #{autoencoder_forward.8} parent=0 // pred_region
    _
  $region9: #{autoencoder_forward.8} parent=0 // pred_fallthru
    _
  // Predicated region
  $region10: #{autoencoder_forward.8} parent=0 // pred_check
    _
  $region11: #{autoencoder_forward.8} parent=0 // pred_check_branch
    %13 = sbr.rel (0) target = $region13
  $region12: #{autoencoder_forward.8} parent=0 // pred_region
    _
  $region13: #{autoencoder_forward.8} parent=0 // pred_fallthru
    _
  %v15 = vld [vmem:[%s0] sm:$0xff]
  %v16 = vld [vmem:[%s0 + $0x8] sm:$0xff]
  %v17 = vld [vmem:[%s0 + $0x10] sm:$0xff]
  %v18 = vld [vmem:[%s0 + $0x18] sm:$0xff]
  %v19 = vld [vmem:[%s0 + $0x20] sm:$0xff]
  %v20 = vld [vmem:[%s0 + $0x28] sm:$0xff]
  %v21 = vld [vmem:[%s0 + $0x30] sm:$0xf]
  %v22 = vld [vmem:[%s1] sm:$0xf]
  %v23 = vld [vmem:[%s1 + $0x4] sm:$0xf]
  %v24 = vld [vmem:[%s1 + $0x8] sm:$0xf]
  %v25 = vld [vmem:[%s1 + $0xc] sm:$0xf]
  %v26 = vld [vmem:[%s1 + $0x10] sm:$0xf]
  %v27 = vld [vmem:[%s1 + $0x14] sm:$0xf]
  %v28 = vld [vmem:[%s1 + $0x18] sm:$0xf]
  %v29 = vld [vmem:[%s1 + $0x1c] sm:$0xf]
  %v30 = vld [vmem:[%s1 + $0x20] sm:$0xf]
  %v31 = vld [vmem:[%s1 + $0x24] sm:$0xf]
  %v32 = vld [vmem:[%s1 + $0x28] sm:$0xf]
  %v33 = vld [vmem:[%s1 + $0x2c] sm:$0xf]
  %v34 = vld [vmem:[%s1 + $0x30] sm:$0xf]
  %v35 = vld [vmem:[%s1 + $0x34] sm:$0xf]
  %v36 = vld [vmem:[%s1 + $0x38] sm:$0xf]
  %v37 = vld [vmem:[%s1 + $0x3c] sm:$0xf]
  %v38 = vld [vmem:[%s1 + $0x40] sm:$0xf]
  %v39 = vld [vmem:[%s1 + $0x44] sm:$0xf]
  %v40 = vld [vmem:[%s1 + $0x48] sm:$0xf]
  %v41 = vld [vmem:[%s1 + $0x4c] sm:$0xf]
  %v42 = vld [vmem:[%s1 + $0x50] sm:$0xf]
  %v43 = vld [vmem:[%s1 + $0x54] sm:$0xf]
  %v44 = vld [vmem:[%s1 + $0x58] sm:$0xf]
  %v45 = vld [vmem:[%s1 + $0x5c] sm:$0xf]
  %v46 = vld [vmem:[%s1 + $0x60] sm:$0xf]
  %v47 = vld [vmem:[%s1 + $0x64] sm:$0xf]
  %v48 = vld [vmem:[%s1 + $0x68] sm:$0xf]
  %v49 = vld [vmem:[%s1 + $0x6c] sm:$0xf]
  %v50 = vld [vmem:[%s1 + $0x70] sm:$0xf]
  %v51 = vld [vmem:[%s1 + $0x74] sm:$0xf]
  %v52 = vld [vmem:[%s1 + $0x78] sm:$0xf]
  %v53 = vld [vmem:[%s1 + $0x7c] sm:$0xf]
  %v54 = vld [vmem:[%s1 + $0x80] sm:$0xf]
  %v55 = vld [vmem:[%s1 + $0x84] sm:$0xf]
  %v56 = vld [vmem:[%s1 + $0x88] sm:$0xf]
  %v57 = vld [vmem:[%s1 + $0x8c] sm:$0xf]
  %v58 = vld [vmem:[%s1 + $0x90] sm:$0xf]
  %v59 = vld [vmem:[%s1 + $0x94] sm:$0xf]
  %v60 = vld [vmem:[%s1 + $0x98] sm:$0xf]
  %v61 = vld [vmem:[%s1 + $0x9c] sm:$0xf]
  %v62 = vld [vmem:[%s1 + $0xa0] sm:$0xf]
  %v63 = vld [vmem:[%s1 + $0xa4] sm:$0xf]
  %v64 = vld [vmem:[%s1 + $0xa8] sm:$0xf]
  %v65 = vld [vmem:[%s1 + $0xac] sm:$0xf]
  %v66 = vld [vmem:[%s1 + $0xb0] sm:$0xf]
  %v67 = vld [vmem:[%s1 + $0xb4] sm:$0xf]
  %v68 = vld [vmem:[%s1 + $0xb8] sm:$0xf]
  %v69 = vld [vmem:[%s1 + $0xbc] sm:$0xf]
  %v70 = vld [vmem:[%s1 + $0xc0] sm:$0xf]
  %v71 = vld [vmem:[%s1 + $0xc4] sm:$0xf]
  %v72 = vld [vmem:[%s1 + $0xc8] sm:$0xf]
  %v73 = vld [vmem:[%s1 + $0xcc] sm:$0xf]
  %v74 = vld [vmem:[%s1 + $0xd0] sm:$0xf]
  %v75 = vld [vmem:[%s1 + $0xd4] sm:$0xf]
  %v76 = vld [vmem:[%s1 + $0xd8] sm:$0xf]
  %v77 = vld [vmem:[%s1 + $0xdc] sm:$0xf]
  %v78 = vld [vmem:[%s1 + $0xe0] sm:$0xf]
  %v79 = vld [vmem:[%s1 + $0xe4] sm:$0xf]
  %v80 = vld [vmem:[%s1 + $0xe8] sm:$0xf]
  %v81 = vld [vmem:[%s1 + $0xec] sm:$0xf]
  %v82 = vld [vmem:[%s1 + $0xf0] sm:$0xf]
  %v83 = vld [vmem:[%s1 + $0xf4] sm:$0xf]
  %v84 = vld [vmem:[%s1 + $0xf8] sm:$0xf]
  %v85 = vld [vmem:[%s1 + $0xfc] sm:$0xf]
  %v86 = vld [vmem:[%s1 + $0x100] sm:$0xf]
  %v87 = vld [vmem:[%s1 + $0x104] sm:$0xf]
  %v88 = vld [vmem:[%s1 + $0x108] sm:$0xf]
  %v89 = vld [vmem:[%s1 + $0x10c] sm:$0xf]
  %v90 = vld [vmem:[%s1 + $0x110] sm:$0xf]
  %v91 = vld [vmem:[%s1 + $0x114] sm:$0xf]
  %v92 = vld [vmem:[%s1 + $0x118] sm:$0xf]
  %v93 = vld [vmem:[%s1 + $0x11c] sm:$0xf]
  %v94 = vld [vmem:[%s1 + $0x120] sm:$0xf]
  %v95 = vld [vmem:[%s1 + $0x124] sm:$0xf]
  %v96 = vld [vmem:[%s1 + $0x128] sm:$0xf]
  %v97 = vld [vmem:[%s1 + $0x12c] sm:$0xf]
  %v98 = vld [vmem:[%s1 + $0x130] sm:$0xf]
  %v99 = vld [vmem:[%s1 + $0x134] sm:$0xf]
  %v100 = vld [vmem:[%s1 + $0x138] sm:$0xf]
  %v101 = vld [vmem:[%s1 + $0x13c] sm:$0xf]
  %v102 = vld [vmem:[%s1 + $0x140] sm:$0xf]
  %v103 = vld [vmem:[%s1 + $0x144] sm:$0xf]
  %v104 = vld [vmem:[%s1 + $0x148] sm:$0xf]
  %v105 = vld [vmem:[%s1 + $0x14c] sm:$0xf]
  %v106 = vld [vmem:[%s1 + $0x150] sm:$0xf]
  %v107 = vld [vmem:[%s1 + $0x154] sm:$0xf]
  %v108 = vld [vmem:[%s1 + $0x158] sm:$0xf]
  %v109 = vld [vmem:[%s1 + $0x15c] sm:$0xf]
  %v110 = vld [vmem:[%s1 + $0x160] sm:$0xf]
  %v111 = vld [vmem:[%s1 + $0x164] sm:$0xf]
  %v112 = vld [vmem:[%s1 + $0x168] sm:$0xf]
  %v113 = vld [vmem:[%s1 + $0x16c] sm:$0xf]
  %v114 = vld [vmem:[%s1 + $0x170] sm:$0xf]
  %v115 = vld [vmem:[%s1 + $0x174] sm:$0xf]
  %v116 = vld [vmem:[%s1 + $0x178] sm:$0xf]
  %v117 = vld [vmem:[%s1 + $0x17c] sm:$0xf]
  %v118 = vld [vmem:[%s1 + $0x180] sm:$0xf]
  %v119 = vld [vmem:[%s1 + $0x184] sm:$0xf]
  %v120 = vld [vmem:[%s1 + $0x188] sm:$0xf]
  %v121 = vld [vmem:[%s1 + $0x18c] sm:$0xf]
  %v122 = vld [vmem:[%s1 + $0x190] sm:$0xf]
  %v123 = vld [vmem:[%s1 + $0x194] sm:$0xf]
  %v124 = vld [vmem:[%s1 + $0x198] sm:$0xf]
  %v125 = vld [vmem:[%s1 + $0x19c] sm:$0xf]
  %v126 = vld [vmem:[%s1 + $0x1a0] sm:$0xf]
  %v127 = vld [vmem:[%s1 + $0x1a4] sm:$0xf]
  %v128 = vld [vmem:[%s1 + $0x1a8] sm:$0xf]
  %v129 = vld [vmem:[%s1 + $0x1ac] sm:$0xf]
  %v130 = vld [vmem:[%s1 + $0x1b0] sm:$0xf]
  %v131 = vld [vmem:[%s1 + $0x1b4] sm:$0xf]
  %v132 = vld [vmem:[%s1 + $0x1b8] sm:$0xf]
  %v133 = vld [vmem:[%s1 + $0x1bc] sm:$0xf]
  %v134 = vld [vmem:[%s1 + $0x1c0] sm:$0xf]
  %v135 = vld [vmem:[%s1 + $0x1c4] sm:$0xf]
  %v136 = vld [vmem:[%s1 + $0x1c8] sm:$0xf]
  %v137 = vld [vmem:[%s1 + $0x1cc] sm:$0xf]
  %v138 = vld [vmem:[%s1 + $0x1d0] sm:$0xf]
  %v139 = vld [vmem:[%s1 + $0x1d4] sm:$0xf]
  %v140 = vld [vmem:[%s1 + $0x1d8] sm:$0xf]
  %v141 = vld [vmem:[%s1 + $0x1dc] sm:$0xf]
  %v142 = vld [vmem:[%s1 + $0x1e0] sm:$0xf]
  %v143 = vld [vmem:[%s1 + $0x1e4] sm:$0xf]
  %v144 = vld [vmem:[%s1 + $0x1e8] sm:$0xf]
  %v145 = vld [vmem:[%s1 + $0x1ec] sm:$0xf]
  %v146 = vld [vmem:[%s1 + $0x1f0] sm:$0xf]
  %v147 = vld [vmem:[%s1 + $0x1f4] sm:$0xf]
  %v148 = vld [vmem:[%s1 + $0x1f8] sm:$0xf]
  %v149 = vld [vmem:[%s1 + $0x1fc] sm:$0xf]
  %v150 = vld [vmem:[%s1 + $0x200] sm:$0xf]
  %v151 = vld [vmem:[%s1 + $0x204] sm:$0xf]
  %v152 = vld [vmem:[%s1 + $0x208] sm:$0xf]
  %v153 = vld [vmem:[%s1 + $0x20c] sm:$0xf]
  %v154 = vld [vmem:[%s1 + $0x210] sm:$0xf]
  %v155 = vld [vmem:[%s1 + $0x214] sm:$0xf]
  %v156 = vld [vmem:[%s1 + $0x218] sm:$0xf]
  %v157 = vld [vmem:[%s1 + $0x21c] sm:$0xf]
  %v158 = vld [vmem:[%s1 + $0x220] sm:$0xf]
  %v159 = vld [vmem:[%s1 + $0x224] sm:$0xf]
  %v160 = vld [vmem:[%s1 + $0x228] sm:$0xf]
  %v161 = vld [vmem:[%s1 + $0x22c] sm:$0xf]
  %v162 = vld [vmem:[%s1 + $0x230] sm:$0xf]
  %v163 = vld [vmem:[%s1 + $0x234] sm:$0xf]
  %v164 = vld [vmem:[%s1 + $0x238] sm:$0xf]
  %v165 = vld [vmem:[%s1 + $0x23c] sm:$0xf]
  %v166 = vld [vmem:[%s1 + $0x240] sm:$0xf]
  %v167 = vld [vmem:[%s1 + $0x244] sm:$0xf]
  %v168 = vld [vmem:[%s1 + $0x248] sm:$0xf]
  %v169 = vld [vmem:[%s1 + $0x24c] sm:$0xf]
  %v170 = vld [vmem:[%s1 + $0x250] sm:$0xf]
  %v171 = vld [vmem:[%s1 + $0x254] sm:$0xf]
  %v172 = vld [vmem:[%s1 + $0x258] sm:$0xf]
  %v173 = vld [vmem:[%s1 + $0x25c] sm:$0xf]
  %v174 = vld [vmem:[%s1 + $0x260] sm:$0xf]
  %v175 = vld [vmem:[%s1 + $0x264] sm:$0xf]
  %v176 = vld [vmem:[%s1 + $0x268] sm:$0xf]
  %v177 = vld [vmem:[%s1 + $0x26c] sm:$0xf]
  %v178 = vld [vmem:[%s1 + $0x270] sm:$0xf]
  %v179 = vld [vmem:[%s1 + $0x274] sm:$0xf]
  %v180 = vld [vmem:[%s1 + $0x278] sm:$0xf]
  %v181 = vld [vmem:[%s1 + $0x27c] sm:$0xf]
  %v182 = vld [vmem:[%s1 + $0x280] sm:$0xf]
  %v183 = vld [vmem:[%s1 + $0x284] sm:$0xf]
  %v184 = vld [vmem:[%s1 + $0x288] sm:$0xf]
  %v185 = vld [vmem:[%s1 + $0x28c] sm:$0xf]
  %v186 = vld [vmem:[%s1 + $0x290] sm:$0xf]
  %v187 = vld [vmem:[%s1 + $0x294] sm:$0xf]
  %v188 = vld [vmem:[%s1 + $0x298] sm:$0xf]
  %v189 = vld [vmem:[%s1 + $0x29c] sm:$0xf]
  %v190 = vld [vmem:[%s1 + $0x2a0] sm:$0xf]
  %v191 = vld [vmem:[%s1 + $0x2a4] sm:$0xf]
  %v192 = vld [vmem:[%s1 + $0x2a8] sm:$0xf]
  %v193 = vld [vmem:[%s1 + $0x2ac] sm:$0xf]
  %v194 = vld [vmem:[%s1 + $0x2b0] sm:$0xf]
  %v195 = vld [vmem:[%s1 + $0x2b4] sm:$0xf]
  %v196 = vld [vmem:[%s1 + $0x2b8] sm:$0xf]
  %v197 = vld [vmem:[%s1 + $0x2bc] sm:$0xf]
  %v198 = vld [vmem:[%s1 + $0x2c0] sm:$0xf]
  %v199 = vld [vmem:[%s1 + $0x2c4] sm:$0xf]
  %v200 = vld [vmem:[%s1 + $0x2c8] sm:$0xf]
  %v201 = vld [vmem:[%s1 + $0x2cc] sm:$0xf]
  %v202 = vld [vmem:[%s1 + $0x2d0] sm:$0xf]
  %v203 = vld [vmem:[%s1 + $0x2d4] sm:$0xf]
  %v204 = vld [vmem:[%s1 + $0x2d8] sm:$0xf]
  %v205 = vld [vmem:[%s1 + $0x2dc] sm:$0xf]
  %v206 = vld [vmem:[%s1 + $0x2e0] sm:$0xf]
  %v207 = vld [vmem:[%s1 + $0x2e4] sm:$0xf]
  %v208 = vld [vmem:[%s1 + $0x2e8] sm:$0xf]
  %v209 = vld [vmem:[%s1 + $0x2ec] sm:$0xf]
  %v210 = vld [vmem:[%s1 + $0x2f0] sm:$0xf]
  %v211 = vld [vmem:[%s1 + $0x2f4] sm:$0xf]
  %v212 = vld [vmem:[%s1 + $0x2f8] sm:$0xf]
  %v213 = vld [vmem:[%s1 + $0x2fc] sm:$0xf]
  %v214 = vld [vmem:[%s1 + $0x300] sm:$0xf]
  %v215 = vld [vmem:[%s1 + $0x304] sm:$0xf]
  %v216 = vld [vmem:[%s1 + $0x308] sm:$0xf]
  %v217 = vld [vmem:[%s1 + $0x30c] sm:$0xf]
  %v218 = vld [vmem:[%s2] sm:$0x1]
  %v220 = vlaneseq
  %v221 = vshrl.u32 %v220, 7
  %v222 = vsub.s32 0, %v221
  %v223 = vrot.slane %v218, %v222
  %v232 = vunpack.c.l.b16 %v15
  %v233 = vunpack.c.h.b16 %v15
  %v234 = vunpack.c.l.b16 %v16
  %v235 = vunpack.c.h.b16 %v16
  %v236 = vunpack.c.l.b16 %v17
  %v237 = vunpack.c.h.b16 %v17
  %v238 = vunpack.c.l.b16 %v18
  %v239 = vunpack.c.h.b16 %v18
  %v240 = vunpack.c.l.b16 %v19
  %v241 = vunpack.c.h.b16 %v19
  %v242 = vunpack.c.l.b16 %v20
  %v243 = vunpack.c.h.b16 %v20
  %v244 = vunpack.c.l.b16 %v21
  %v245 = vpack.c.b16 %v232, %v232
  %v246 = vpack.c.b16 %v233, %v233
  %v247 = vpack.c.b16 %v234, %v234
  %v248 = vpack.c.b16 %v235, %v235
  %v249 = vpack.c.b16 %v236, %v236
  %v250 = vpack.c.b16 %v237, %v237
  %v251 = vpack.c.b16 %v238, %v238
  %v252 = vpack.c.b16 %v239, %v239
  %v253 = vpack.c.b16 %v240, %v240
  %v254 = vpack.c.b16 %v241, %v241
  %v255 = vpack.c.b16 %v242, %v242
  %v256 = vpack.c.b16 %v243, %v243
  %v257 = vpack.c.b16 %v244, %v244
  %v466 = vunpack.c.l.b16 %v22
  %v467 = vunpack.c.l.b16 %v23
  %v468 = vunpack.c.l.b16 %v24
  %v469 = vunpack.c.l.b16 %v25
  %v470 = vunpack.c.l.b16 %v26
  %v471 = vunpack.c.l.b16 %v27
  %v472 = vunpack.c.l.b16 %v28
  %v473 = vunpack.c.l.b16 %v29
  %v474 = vunpack.c.l.b16 %v30
  %v475 = vunpack.c.l.b16 %v31
  %v476 = vunpack.c.l.b16 %v32
  %v477 = vunpack.c.l.b16 %v33
  %v478 = vunpack.c.l.b16 %v34
  %v479 = vunpack.c.l.b16 %v35
  %v480 = vunpack.c.l.b16 %v36
  %v481 = vunpack.c.l.b16 %v37
  %v482 = vunpack.c.l.b16 %v38
  %v483 = vunpack.c.l.b16 %v39
  %v484 = vunpack.c.l.b16 %v40
  %v485 = vunpack.c.l.b16 %v41
  %v486 = vunpack.c.l.b16 %v42
  %v487 = vunpack.c.l.b16 %v43
  %v488 = vunpack.c.l.b16 %v44
  %v489 = vunpack.c.l.b16 %v45
  %v490 = vunpack.c.l.b16 %v46
  %v491 = vunpack.c.l.b16 %v47
  %v492 = vunpack.c.l.b16 %v48
  %v493 = vunpack.c.l.b16 %v49
  %v494 = vunpack.c.l.b16 %v50
  %v495 = vunpack.c.l.b16 %v51
  %v496 = vunpack.c.l.b16 %v52
  %v497 = vunpack.c.l.b16 %v53
  %v498 = vunpack.c.l.b16 %v54
  %v499 = vunpack.c.l.b16 %v55
  %v500 = vunpack.c.l.b16 %v56
  %v501 = vunpack.c.l.b16 %v57
  %v502 = vunpack.c.l.b16 %v58
  %v503 = vunpack.c.l.b16 %v59
  %v504 = vunpack.c.l.b16 %v60
  %v505 = vunpack.c.l.b16 %v61
  %v506 = vunpack.c.l.b16 %v62
  %v507 = vunpack.c.l.b16 %v63
  %v508 = vunpack.c.l.b16 %v64
  %v509 = vunpack.c.l.b16 %v65
  %v510 = vunpack.c.l.b16 %v66
  %v511 = vunpack.c.l.b16 %v67
  %v512 = vunpack.c.l.b16 %v68
  %v513 = vunpack.c.l.b16 %v69
  %v514 = vunpack.c.l.b16 %v70
  %v515 = vunpack.c.l.b16 %v71
  %v516 = vunpack.c.l.b16 %v72
  %v517 = vunpack.c.l.b16 %v73
  %v518 = vunpack.c.l.b16 %v74
  %v519 = vunpack.c.l.b16 %v75
  %v520 = vunpack.c.l.b16 %v76
  %v521 = vunpack.c.l.b16 %v77
  %v522 = vunpack.c.l.b16 %v78
  %v523 = vunpack.c.l.b16 %v79
  %v524 = vunpack.c.l.b16 %v80
  %v525 = vunpack.c.l.b16 %v81
  %v526 = vunpack.c.l.b16 %v82
  %v527 = vunpack.c.l.b16 %v83
  %v528 = vunpack.c.l.b16 %v84
  %v529 = vunpack.c.l.b16 %v85
  %v530 = vunpack.c.l.b16 %v86
  %v531 = vunpack.c.l.b16 %v87
  %v532 = vunpack.c.l.b16 %v88
  %v533 = vunpack.c.l.b16 %v89
  %v534 = vunpack.c.l.b16 %v90
  %v535 = vunpack.c.l.b16 %v91
  %v536 = vunpack.c.l.b16 %v92
  %v537 = vunpack.c.l.b16 %v93
  %v538 = vunpack.c.l.b16 %v94
  %v539 = vunpack.c.l.b16 %v95
  %v540 = vunpack.c.l.b16 %v96
  %v541 = vunpack.c.l.b16 %v97
  %v542 = vunpack.c.l.b16 %v98
  %v543 = vunpack.c.l.b16 %v99
  %v544 = vunpack.c.l.b16 %v100
  %v545 = vunpack.c.l.b16 %v101
  %v546 = vunpack.c.l.b16 %v102
  %v547 = vunpack.c.l.b16 %v103
  %v548 = vunpack.c.l.b16 %v104
  %v549 = vunpack.c.l.b16 %v105
  %v550 = vunpack.c.l.b16 %v106
  %v551 = vunpack.c.l.b16 %v107
  %v552 = vunpack.c.l.b16 %v108
  %v553 = vunpack.c.l.b16 %v109
  %v554 = vunpack.c.l.b16 %v110
  %v555 = vunpack.c.l.b16 %v111
  %v556 = vunpack.c.l.b16 %v112
  %v557 = vunpack.c.l.b16 %v113
  %v558 = vunpack.c.l.b16 %v114
  %v559 = vunpack.c.l.b16 %v115
  %v560 = vunpack.c.l.b16 %v116
  %v561 = vunpack.c.l.b16 %v117
  %v562 = vunpack.c.l.b16 %v118
  %v563 = vunpack.c.l.b16 %v119
  %v564 = vunpack.c.l.b16 %v120
  %v565 = vunpack.c.l.b16 %v121
  %v566 = vunpack.c.l.b16 %v122
  %v567 = vunpack.c.l.b16 %v123
  %v568 = vunpack.c.l.b16 %v124
  %v569 = vunpack.c.l.b16 %v125
  %v570 = vunpack.c.l.b16 %v126
  %v571 = vunpack.c.l.b16 %v127
  %v572 = vunpack.c.l.b16 %v128
  %v573 = vunpack.c.l.b16 %v129
  %v574 = vunpack.c.l.b16 %v130
  %v575 = vunpack.c.l.b16 %v131
  %v576 = vunpack.c.l.b16 %v132
  %v577 = vunpack.c.l.b16 %v133
  %v578 = vunpack.c.l.b16 %v134
  %v579 = vunpack.c.l.b16 %v135
  %v580 = vunpack.c.l.b16 %v136
  %v581 = vunpack.c.l.b16 %v137
  %v582 = vunpack.c.l.b16 %v138
  %v583 = vunpack.c.l.b16 %v139
  %v584 = vunpack.c.l.b16 %v140
  %v585 = vunpack.c.l.b16 %v141
  %v586 = vunpack.c.l.b16 %v142
  %v587 = vunpack.c.l.b16 %v143
  %v588 = vunpack.c.l.b16 %v144
  %v589 = vunpack.c.l.b16 %v145
  %v590 = vunpack.c.l.b16 %v146
  %v591 = vunpack.c.l.b16 %v147
  %v592 = vunpack.c.l.b16 %v148
  %v593 = vunpack.c.l.b16 %v149
  %v594 = vunpack.c.l.b16 %v150
  %v595 = vunpack.c.l.b16 %v151
  %v596 = vunpack.c.l.b16 %v152
  %v597 = vunpack.c.l.b16 %v153
  %v598 = vunpack.c.l.b16 %v154
  %v599 = vunpack.c.l.b16 %v155
  %v600 = vunpack.c.l.b16 %v156
  %v601 = vunpack.c.l.b16 %v157
  %v602 = vunpack.c.l.b16 %v158
  %v603 = vunpack.c.l.b16 %v159
  %v604 = vunpack.c.l.b16 %v160
  %v605 = vunpack.c.l.b16 %v161
  %v606 = vunpack.c.l.b16 %v162
  %v607 = vunpack.c.l.b16 %v163
  %v608 = vunpack.c.l.b16 %v164
  %v609 = vunpack.c.l.b16 %v165
  %v610 = vunpack.c.l.b16 %v166
  %v611 = vunpack.c.l.b16 %v167
  %v612 = vunpack.c.l.b16 %v168
  %v613 = vunpack.c.l.b16 %v169
  %v614 = vunpack.c.l.b16 %v170
  %v615 = vunpack.c.l.b16 %v171
  %v616 = vunpack.c.l.b16 %v172
  %v617 = vunpack.c.l.b16 %v173
  %v618 = vunpack.c.l.b16 %v174
  %v619 = vunpack.c.l.b16 %v175
  %v620 = vunpack.c.l.b16 %v176
  %v621 = vunpack.c.l.b16 %v177
  %v622 = vunpack.c.l.b16 %v178
  %v623 = vunpack.c.l.b16 %v179
  %v624 = vunpack.c.l.b16 %v180
  %v625 = vunpack.c.l.b16 %v181
  %v626 = vunpack.c.l.b16 %v182
  %v627 = vunpack.c.l.b16 %v183
  %v628 = vunpack.c.l.b16 %v184
  %v629 = vunpack.c.l.b16 %v185
  %v630 = vunpack.c.l.b16 %v186
  %v631 = vunpack.c.l.b16 %v187
  %v632 = vunpack.c.l.b16 %v188
  %v633 = vunpack.c.l.b16 %v189
  %v634 = vunpack.c.l.b16 %v190
  %v635 = vunpack.c.l.b16 %v191
  %v636 = vunpack.c.l.b16 %v192
  %v637 = vunpack.c.l.b16 %v193
  %v638 = vunpack.c.l.b16 %v194
  %v639 = vunpack.c.l.b16 %v195
  %v640 = vunpack.c.l.b16 %v196
  %v641 = vunpack.c.l.b16 %v197
  %v642 = vunpack.c.l.b16 %v198
  %v643 = vunpack.c.l.b16 %v199
  %v644 = vunpack.c.l.b16 %v200
  %v645 = vunpack.c.l.b16 %v201
  %v646 = vunpack.c.l.b16 %v202
  %v647 = vunpack.c.l.b16 %v203
  %v648 = vunpack.c.l.b16 %v204
  %v649 = vunpack.c.l.b16 %v205
  %v650 = vunpack.c.l.b16 %v206
  %v651 = vunpack.c.l.b16 %v207
  %v652 = vunpack.c.l.b16 %v208
  %v653 = vunpack.c.l.b16 %v209
  %v654 = vunpack.c.l.b16 %v210
  %v655 = vunpack.c.l.b16 %v211
  %v656 = vunpack.c.l.b16 %v212
  %v657 = vunpack.c.l.b16 %v213
  %v658 = vunpack.c.l.b16 %v214
  %v659 = vunpack.c.l.b16 %v215
  %v660 = vunpack.c.l.b16 %v216
  %v661 = vunpack.c.l.b16 %v217
  %v662 = vpack.c.b16 %v467, %v466
  %v663 = vpack.c.b16 %v469, %v468
  %v664 = vpack.c.b16 %v471, %v470
  %v665 = vpack.c.b16 %v473, %v472
  %v666 = vpack.c.b16 %v475, %v474
  %v667 = vpack.c.b16 %v477, %v476
  %v668 = vpack.c.b16 %v479, %v478
  %v669 = vpack.c.b16 %v481, %v480
  %v670 = vpack.c.b16 %v483, %v482
  %v671 = vpack.c.b16 %v485, %v484
  %v672 = vpack.c.b16 %v487, %v486
  %v673 = vpack.c.b16 %v489, %v488
  %v674 = vpack.c.b16 %v491, %v490
  %v675 = vpack.c.b16 %v493, %v492
  %v676 = vpack.c.b16 %v495, %v494
  %v677 = vpack.c.b16 %v497, %v496
  %v678 = vpack.c.b16 %v499, %v498
  %v679 = vpack.c.b16 %v501, %v500
  %v680 = vpack.c.b16 %v503, %v502
  %v681 = vpack.c.b16 %v505, %v504
  %v682 = vpack.c.b16 %v507, %v506
  %v683 = vpack.c.b16 %v509, %v508
  %v684 = vpack.c.b16 %v511, %v510
  %v685 = vpack.c.b16 %v513, %v512
  %v686 = vpack.c.b16 %v515, %v514
  %v687 = vpack.c.b16 %v517, %v516
  %v688 = vpack.c.b16 %v519, %v518
  %v689 = vpack.c.b16 %v521, %v520
  %v690 = vpack.c.b16 %v523, %v522
  %v691 = vpack.c.b16 %v525, %v524
  %v692 = vpack.c.b16 %v527, %v526
  %v693 = vpack.c.b16 %v529, %v528
  %v694 = vpack.c.b16 %v531, %v530
  %v695 = vpack.c.b16 %v533, %v532
  %v696 = vpack.c.b16 %v535, %v534
  %v697 = vpack.c.b16 %v537, %v536
  %v698 = vpack.c.b16 %v539, %v538
  %v699 = vpack.c.b16 %v541, %v540
  %v700 = vpack.c.b16 %v543, %v542
  %v701 = vpack.c.b16 %v545, %v544
  %v702 = vpack.c.b16 %v547, %v546
  %v703 = vpack.c.b16 %v549, %v548
  %v704 = vpack.c.b16 %v551, %v550
  %v705 = vpack.c.b16 %v553, %v552
  %v706 = vpack.c.b16 %v555, %v554
  %v707 = vpack.c.b16 %v557, %v556
  %v708 = vpack.c.b16 %v559, %v558
  %v709 = vpack.c.b16 %v561, %v560
  %v710 = vpack.c.b16 %v563, %v562
  %v711 = vpack.c.b16 %v565, %v564
  %v712 = vpack.c.b16 %v567, %v566
  %v713 = vpack.c.b16 %v569, %v568
  %v714 = vpack.c.b16 %v571, %v570
  %v715 = vpack.c.b16 %v573, %v572
  %v716 = vpack.c.b16 %v575, %v574
  %v717 = vpack.c.b16 %v577, %v576
  %v718 = vpack.c.b16 %v579, %v578
  %v719 = vpack.c.b16 %v581, %v580
  %v720 = vpack.c.b16 %v583, %v582
  %v721 = vpack.c.b16 %v585, %v584
  %v722 = vpack.c.b16 %v587, %v586
  %v723 = vpack.c.b16 %v589, %v588
  %v724 = vpack.c.b16 %v591, %v590
  %v725 = vpack.c.b16 %v593, %v592
  %v726 = vpack.c.b16 %v595, %v594
  %v727 = vpack.c.b16 %v597, %v596
  %v728 = vpack.c.b16 %v599, %v598
  %v729 = vpack.c.b16 %v601, %v600
  %v730 = vpack.c.b16 %v603, %v602
  %v731 = vpack.c.b16 %v605, %v604
  %v732 = vpack.c.b16 %v607, %v606
  %v733 = vpack.c.b16 %v609, %v608
  %v734 = vpack.c.b16 %v611, %v610
  %v735 = vpack.c.b16 %v613, %v612
  %v736 = vpack.c.b16 %v615, %v614
  %v737 = vpack.c.b16 %v617, %v616
  %v738 = vpack.c.b16 %v619, %v618
  %v739 = vpack.c.b16 %v621, %v620
  %v740 = vpack.c.b16 %v623, %v622
  %v741 = vpack.c.b16 %v625, %v624
  %v742 = vpack.c.b16 %v627, %v626
  %v743 = vpack.c.b16 %v629, %v628
  %v744 = vpack.c.b16 %v631, %v630
  %v745 = vpack.c.b16 %v633, %v632
  %v746 = vpack.c.b16 %v635, %v634
  %v747 = vpack.c.b16 %v637, %v636
  %v748 = vpack.c.b16 %v639, %v638
  %v749 = vpack.c.b16 %v641, %v640
  %v750 = vpack.c.b16 %v643, %v642
  %v751 = vpack.c.b16 %v645, %v644
  %v752 = vpack.c.b16 %v647, %v646
  %v753 = vpack.c.b16 %v649, %v648
  %v754 = vpack.c.b16 %v651, %v650
  %v755 = vpack.c.b16 %v653, %v652
  %v756 = vpack.c.b16 %v655, %v654
  %v757 = vpack.c.b16 %v657, %v656
  %v758 = vpack.c.b16 %v659, %v658
  %v759 = vpack.c.b16 %v661, %v660
  %vm858 = vcmask 261120
  %v860 = vsel %vm858, %v257, 0
  %862 = vmatprep.subr.bf16.mxu0 0
  %863 = vmatpush1.bf16.msra.mxu0 %v669
  %864 = vmatprep.subr.bf16.mxu0 0
  %865 = vmatpush1.bf16.msra.mxu0 %v668
  %866 = vmatprep.subr.bf16.mxu0 0
  %867 = vmatpush1.bf16.msra.mxu0 %v667
  %868 = vmatprep.subr.bf16.mxu0 0
  %869 = vmatpush1.bf16.msra.mxu0 %v666
  %870 = vmatprep.subr.bf16.mxu0 0
  %871 = vmatpush1.bf16.msra.mxu0 %v665
  %872 = vmatprep.subr.bf16.mxu0 0
  %873 = vmatpush1.bf16.msra.mxu0 %v664
  %874 = vmatprep.subr.bf16.mxu0 0
  %875 = vmatpush1.bf16.msra.mxu0 %v663
  %876 = vmatprep.subr.bf16.mxu0 0
  %877 = vmatpush1.bf16.msra.mxu0 %v662
  %878 = vmatprep.subr.bf16.mxu0 0
  %879 = vmatpush2.bf16.msra.mxu0 %v677
  %880 = vmatprep.subr.bf16.mxu0 0
  %881 = vmatpush2.bf16.msra.mxu0 %v676
  %882 = vmatprep.subr.bf16.mxu0 0
  %883 = vmatpush2.bf16.msra.mxu0 %v675
  %884 = vmatprep.subr.bf16.mxu0 0
  %885 = vmatpush2.bf16.msra.mxu0 %v674
  %886 = vmatprep.subr.bf16.mxu0 0
  %887 = vmatpush2.bf16.msra.mxu0 %v673
  %888 = vmatprep.subr.bf16.mxu0 0
  %889 = vmatpush2.bf16.msra.mxu0 %v672
  %890 = vmatprep.subr.bf16.mxu0 0
  %891 = vmatpush2.bf16.msra.mxu0 %v671
  %892 = vmatprep.subr.bf16.mxu0 0
  %893 = vmatpush2.bf16.msra.mxu0 %v670
  %894 = vmatprep.mubr.bf16.mxu0 %v246
  %895 = vmatmul.mubr.bf16.gmra.mxu0 %v245
  %v896 = vpop.f32.mrf.mxu0
  %v897 = vadd.f32 %v223, %v896
  %v898 = vpop.f32.mrf.mxu0
  %v899 = vpop.f32.mrf.mxu0
  %v900 = vpop.f32.mrf.mxu0
  %901 = vdwg.mxu0
  %902 = vmatprep.subr.bf16.mxu0 0
  %903 = vmatpush1.bf16.msra.mxu0 %v685
  %904 = vmatprep.subr.bf16.mxu0 0
  %905 = vmatpush1.bf16.msra.mxu0 %v684
  %906 = vmatprep.subr.bf16.mxu0 0
  %907 = vmatpush1.bf16.msra.mxu0 %v683
  %908 = vmatprep.subr.bf16.mxu0 0
  %909 = vmatpush1.bf16.msra.mxu0 %v682
  %910 = vmatprep.subr.bf16.mxu0 0
  %911 = vmatpush1.bf16.msra.mxu0 %v681
  %912 = vmatprep.subr.bf16.mxu0 0
  %913 = vmatpush1.bf16.msra.mxu0 %v680
  %914 = vmatprep.subr.bf16.mxu0 0
  %915 = vmatpush1.bf16.msra.mxu0 %v679
  %916 = vmatprep.subr.bf16.mxu0 0
  %917 = vmatpush1.bf16.msra.mxu0 %v678
  %918 = vmatprep.subr.bf16.mxu0 0
  %919 = vmatpush2.bf16.msra.mxu0 %v693
  %920 = vmatprep.subr.bf16.mxu0 0
  %921 = vmatpush2.bf16.msra.mxu0 %v692
  %922 = vmatprep.subr.bf16.mxu0 0
  %923 = vmatpush2.bf16.msra.mxu0 %v691
  %924 = vmatprep.subr.bf16.mxu0 0
  %925 = vmatpush2.bf16.msra.mxu0 %v690
  %926 = vmatprep.subr.bf16.mxu0 0
  %927 = vmatpush2.bf16.msra.mxu0 %v689
  %928 = vmatprep.subr.bf16.mxu0 0
  %929 = vmatpush2.bf16.msra.mxu0 %v688
  %930 = vmatprep.subr.bf16.mxu0 0
  %931 = vmatpush2.bf16.msra.mxu0 %v687
  %932 = vmatprep.subr.bf16.mxu0 0
  %933 = vmatpush2.bf16.msra.mxu0 %v686
  %934 = vmatprep.mubr.bf16.mxu0 %v248
  %935 = vmatmul.mubr.bf16.gmra.mxu0 %v247
  %v936 = vpop.f32.mrf.mxu0
  %v937 = vadd.f32 %v897, %v936
  %v938 = vpop.f32.mrf.mxu0
  %v939 = vpop.f32.mrf.mxu0
  %v940 = vpop.f32.mrf.mxu0
  %941 = vdwg.mxu0
  %942 = vmatprep.subr.bf16.mxu0 0
  %943 = vmatpush1.bf16.msra.mxu0 %v701
  %944 = vmatprep.subr.bf16.mxu0 0
  %945 = vmatpush1.bf16.msra.mxu0 %v700
  %946 = vmatprep.subr.bf16.mxu0 0
  %947 = vmatpush1.bf16.msra.mxu0 %v699
  %948 = vmatprep.subr.bf16.mxu0 0
  %949 = vmatpush1.bf16.msra.mxu0 %v698
  %950 = vmatprep.subr.bf16.mxu0 0
  %951 = vmatpush1.bf16.msra.mxu0 %v697
  %952 = vmatprep.subr.bf16.mxu0 0
  %953 = vmatpush1.bf16.msra.mxu0 %v696
  %954 = vmatprep.subr.bf16.mxu0 0
  %955 = vmatpush1.bf16.msra.mxu0 %v695
  %956 = vmatprep.subr.bf16.mxu0 0
  %957 = vmatpush1.bf16.msra.mxu0 %v694
  %958 = vmatprep.subr.bf16.mxu0 0
  %959 = vmatpush2.bf16.msra.mxu0 %v709
  %960 = vmatprep.subr.bf16.mxu0 0
  %961 = vmatpush2.bf16.msra.mxu0 %v708
  %962 = vmatprep.subr.bf16.mxu0 0
  %963 = vmatpush2.bf16.msra.mxu0 %v707
  %964 = vmatprep.subr.bf16.mxu0 0
  %965 = vmatpush2.bf16.msra.mxu0 %v706
  %966 = vmatprep.subr.bf16.mxu0 0
  %967 = vmatpush2.bf16.msra.mxu0 %v705
  %968 = vmatprep.subr.bf16.mxu0 0
  %969 = vmatpush2.bf16.msra.mxu0 %v704
  %970 = vmatprep.subr.bf16.mxu0 0
  %971 = vmatpush2.bf16.msra.mxu0 %v703
  %972 = vmatprep.subr.bf16.mxu0 0
  %973 = vmatpush2.bf16.msra.mxu0 %v702
  %974 = vmatprep.mubr.bf16.mxu0 %v250
  %975 = vmatmul.mubr.bf16.gmra.mxu0 %v249
  %v976 = vpop.f32.mrf.mxu0
  %v977 = vadd.f32 %v937, %v976
  %v978 = vpop.f32.mrf.mxu0
  %v979 = vpop.f32.mrf.mxu0
  %v980 = vpop.f32.mrf.mxu0
  %981 = vdwg.mxu0
  %982 = vmatprep.subr.bf16.mxu0 0
  %983 = vmatpush1.bf16.msra.mxu0 %v717
  %984 = vmatprep.subr.bf16.mxu0 0
  %985 = vmatpush1.bf16.msra.mxu0 %v716
  %986 = vmatprep.subr.bf16.mxu0 0
  %987 = vmatpush1.bf16.msra.mxu0 %v715
  %988 = vmatprep.subr.bf16.mxu0 0
  %989 = vmatpush1.bf16.msra.mxu0 %v714
  %990 = vmatprep.subr.bf16.mxu0 0
  %991 = vmatpush1.bf16.msra.mxu0 %v713
  %992 = vmatprep.subr.bf16.mxu0 0
  %993 = vmatpush1.bf16.msra.mxu0 %v712
  %994 = vmatprep.subr.bf16.mxu0 0
  %995 = vmatpush1.bf16.msra.mxu0 %v711
  %996 = vmatprep.subr.bf16.mxu0 0
  %997 = vmatpush1.bf16.msra.mxu0 %v710
  %998 = vmatprep.subr.bf16.mxu0 0
  %999 = vmatpush2.bf16.msra.mxu0 %v725
  %1000 = vmatprep.subr.bf16.mxu0 0
  %1001 = vmatpush2.bf16.msra.mxu0 %v724
  %1002 = vmatprep.subr.bf16.mxu0 0
  %1003 = vmatpush2.bf16.msra.mxu0 %v723
  %1004 = vmatprep.subr.bf16.mxu0 0
  %1005 = vmatpush2.bf16.msra.mxu0 %v722
  %1006 = vmatprep.subr.bf16.mxu0 0
  %1007 = vmatpush2.bf16.msra.mxu0 %v721
  %1008 = vmatprep.subr.bf16.mxu0 0
  %1009 = vmatpush2.bf16.msra.mxu0 %v720
  %1010 = vmatprep.subr.bf16.mxu0 0
  %1011 = vmatpush2.bf16.msra.mxu0 %v719
  %1012 = vmatprep.subr.bf16.mxu0 0
  %1013 = vmatpush2.bf16.msra.mxu0 %v718
  %1014 = vmatprep.mubr.bf16.mxu0 %v252
  %1015 = vmatmul.mubr.bf16.gmra.mxu0 %v251
  %v1016 = vpop.f32.mrf.mxu0
  %v1017 = vadd.f32 %v977, %v1016
  %v1018 = vpop.f32.mrf.mxu0
  %v1019 = vpop.f32.mrf.mxu0
  %v1020 = vpop.f32.mrf.mxu0
  %1021 = vdwg.mxu0
  %1022 = vmatprep.subr.bf16.mxu0 0
  %1023 = vmatpush1.bf16.msra.mxu0 %v733
  %1024 = vmatprep.subr.bf16.mxu0 0
  %1025 = vmatpush1.bf16.msra.mxu0 %v732
  %1026 = vmatprep.subr.bf16.mxu0 0
  %1027 = vmatpush1.bf16.msra.mxu0 %v731
  %1028 = vmatprep.subr.bf16.mxu0 0
  %1029 = vmatpush1.bf16.msra.mxu0 %v730
  %1030 = vmatprep.subr.bf16.mxu0 0
  %1031 = vmatpush1.bf16.msra.mxu0 %v729
  %1032 = vmatprep.subr.bf16.mxu0 0
  %1033 = vmatpush1.bf16.msra.mxu0 %v728
  %1034 = vmatprep.subr.bf16.mxu0 0
  %1035 = vmatpush1.bf16.msra.mxu0 %v727
  %1036 = vmatprep.subr.bf16.mxu0 0
  %1037 = vmatpush1.bf16.msra.mxu0 %v726
  %1038 = vmatprep.subr.bf16.mxu0 0
  %1039 = vmatpush2.bf16.msra.mxu0 %v741
  %1040 = vmatprep.subr.bf16.mxu0 0
  %1041 = vmatpush2.bf16.msra.mxu0 %v740
  %1042 = vmatprep.subr.bf16.mxu0 0
  %1043 = vmatpush2.bf16.msra.mxu0 %v739
  %1044 = vmatprep.subr.bf16.mxu0 0
  %1045 = vmatpush2.bf16.msra.mxu0 %v738
  %1046 = vmatprep.subr.bf16.mxu0 0
  %1047 = vmatpush2.bf16.msra.mxu0 %v737
  %1048 = vmatprep.subr.bf16.mxu0 0
  %1049 = vmatpush2.bf16.msra.mxu0 %v736
  %1050 = vmatprep.subr.bf16.mxu0 0
  %1051 = vmatpush2.bf16.msra.mxu0 %v735
  %1052 = vmatprep.subr.bf16.mxu0 0
  %1053 = vmatpush2.bf16.msra.mxu0 %v734
  %1054 = vmatprep.mubr.bf16.mxu0 %v254
  %1055 = vmatmul.mubr.bf16.gmra.mxu0 %v253
  %v1056 = vpop.f32.mrf.mxu0
  %v1057 = vadd.f32 %v1017, %v1056
  %v1058 = vpop.f32.mrf.mxu0
  %v1059 = vpop.f32.mrf.mxu0
  %v1060 = vpop.f32.mrf.mxu0
  %1061 = vdwg.mxu0
  %1062 = vmatprep.subr.bf16.mxu0 0
  %1063 = vmatpush1.bf16.msra.mxu0 %v749
  %1064 = vmatprep.subr.bf16.mxu0 0
  %1065 = vmatpush1.bf16.msra.mxu0 %v748
  %1066 = vmatprep.subr.bf16.mxu0 0
  %1067 = vmatpush1.bf16.msra.mxu0 %v747
  %1068 = vmatprep.subr.bf16.mxu0 0
  %1069 = vmatpush1.bf16.msra.mxu0 %v746
  %1070 = vmatprep.subr.bf16.mxu0 0
  %1071 = vmatpush1.bf16.msra.mxu0 %v745
  %1072 = vmatprep.subr.bf16.mxu0 0
  %1073 = vmatpush1.bf16.msra.mxu0 %v744
  %1074 = vmatprep.subr.bf16.mxu0 0
  %1075 = vmatpush1.bf16.msra.mxu0 %v743
  %1076 = vmatprep.subr.bf16.mxu0 0
  %1077 = vmatpush1.bf16.msra.mxu0 %v742
  %1078 = vmatprep.subr.bf16.mxu0 0
  %1079 = vmatpush2.bf16.msra.mxu0 %v757
  %1080 = vmatprep.subr.bf16.mxu0 0
  %1081 = vmatpush2.bf16.msra.mxu0 %v756
  %1082 = vmatprep.subr.bf16.mxu0 0
  %1083 = vmatpush2.bf16.msra.mxu0 %v755
  %1084 = vmatprep.subr.bf16.mxu0 0
  %1085 = vmatpush2.bf16.msra.mxu0 %v754
  %1086 = vmatprep.subr.bf16.mxu0 0
  %1087 = vmatpush2.bf16.msra.mxu0 %v753
  %1088 = vmatprep.subr.bf16.mxu0 0
  %1089 = vmatpush2.bf16.msra.mxu0 %v752
  %1090 = vmatprep.subr.bf16.mxu0 0
  %1091 = vmatpush2.bf16.msra.mxu0 %v751
  %1092 = vmatprep.subr.bf16.mxu0 0
  %1093 = vmatpush2.bf16.msra.mxu0 %v750
  %1094 = vmatprep.mubr.bf16.mxu0 %v256
  %1095 = vmatmul.mubr.bf16.gmra.mxu0 %v255
  %v1096 = vpop.f32.mrf.mxu0
  %v1097 = vadd.f32 %v1057, %v1096
  %v1098 = vpop.f32.mrf.mxu0
  %v1099 = vpop.f32.mrf.mxu0
  %v1100 = vpop.f32.mrf.mxu0
  %1101 = vdwg.mxu0
  %1102 = vmatprep.subr.bf16.mxu0 0
  %1103 = vmatpush1.bf16.msra.mxu0 0
  %1104 = vmatprep.subr.bf16.mxu0 0
  %1105 = vmatpush1.bf16.msra.mxu0 0
  %1106 = vmatprep.subr.bf16.mxu0 0
  %1107 = vmatpush1.bf16.msra.mxu0 0
  %1108 = vmatprep.subr.bf16.mxu0 0
  %1109 = vmatpush1.bf16.msra.mxu0 0
  %1110 = vmatprep.subr.bf16.mxu0 0
  %1111 = vmatpush1.bf16.msra.mxu0 0
  %1112 = vmatprep.subr.bf16.mxu0 0
  %1113 = vmatpush1.bf16.msra.mxu0 0
  %1114 = vmatprep.subr.bf16.mxu0 0
  %1115 = vmatpush1.bf16.msra.mxu0 %v759
  %1116 = vmatprep.subr.bf16.mxu0 0
  %1117 = vmatpush1.bf16.msra.mxu0 %v758
  %1118 = vmatprep.subr.bf16.mxu0 0
  %1119 = vmatpush2.bf16.msra.mxu0 0
  %1120 = vmatprep.subr.bf16.mxu0 0
  %1121 = vmatpush2.bf16.msra.mxu0 0
  %1122 = vmatprep.subr.bf16.mxu0 0
  %1123 = vmatpush2.bf16.msra.mxu0 0
  %1124 = vmatprep.subr.bf16.mxu0 0
  %1125 = vmatpush2.bf16.msra.mxu0 0
  %1126 = vmatprep.subr.bf16.mxu0 0
  %1127 = vmatpush2.bf16.msra.mxu0 0
  %1128 = vmatprep.subr.bf16.mxu0 0
  %1129 = vmatpush2.bf16.msra.mxu0 0
  %1130 = vmatprep.subr.bf16.mxu0 0
  %1131 = vmatpush2.bf16.msra.mxu0 0
  %1132 = vmatprep.subr.bf16.mxu0 0
  %1133 = vmatpush2.bf16.msra.mxu0 0
  %1134 = vmatprep.mubr.bf16.mxu0 0
  %1135 = vmatmul.mubr.bf16.gmra.mxu0 %v860
  %v1136 = vpop.f32.mrf.mxu0
  %v1137 = vadd.f32 %v1097, %v1136
  %v1138 = vpop.f32.mrf.mxu0
  %v1139 = vpop.f32.mrf.mxu0
  %v1140 = vpop.f32.mrf.mxu0
  %1141 = vdwg.mxu0
  %1142 = vst [vmem:[%s3] sm:$0xff] %v1137
  // Predicated region
  $region14: #{autoencoder_forward.8} parent=0 // pred_check
    _
  $region15: #{autoencoder_forward.8} parent=0 // pred_check_branch
    %1144 = sbr.rel (0) target = $region17
  $region16: #{autoencoder_forward.8} parent=0 // pred_region
    _
  $region17: #{autoencoder_forward.8} parent=0 // pred_fallthru
    _
  // Predicated region
  $region18: #{autoencoder_forward.8} parent=0 // pred_check
    _
  $region19: #{autoencoder_forward.8} parent=0 // pred_check_branch
    %1146 = sbr.rel (0) target = $region21
  $region20: #{autoencoder_forward.8} parent=0 // pred_region
    _
  $region21: #{autoencoder_forward.8} parent=0 // pred_fallthru
    _

// kernel: autoencoder_forward.9
$region0: #{autoencoder_forward.9}
  #allocation0 [shape = 'u32[]', space=smem, size = 0x4, offset = 0x4, fixed_abs, tag = 'smem constant byte address 0x4 - core index']
  #allocation1 [shape = 'u32[144,128]{1,0:T(1,128)}', space=vmem, size = 0x12000, scoped, tag = 'internal scratch']
  %s0 = inlined_call_operand.vmem [shape: bf16[8,64], index: 0, kind: input, shape index: {}]
  %s1 = inlined_call_operand.vmem [shape: bf16[64,1664], index: 1, kind: input, shape index: {}]
  %s2 = inlined_call_operand.vmem [shape: f32[1,1664], index: 2, kind: input, shape index: {}]
  %s3 = inlined_call_operand.vmem [shape: f32[8,1664], index: 3, kind: output, shape index: {}]
  %s4 = sld [smem:[#allocation0]]
  $region22: #{autoencoder_forward.9} parent=0
    _
  %s6 = ssub.s32 1, %s4
  %s7 = scalar_select 0, %s6, %s4
  // Predicated region
  $region2: #{autoencoder_forward.9} parent=0 // pred_check
    _
  $region3: #{autoencoder_forward.9} parent=0 // pred_check_branch
    %9 = sbr.rel (0) target = $region5
  $region4: #{autoencoder_forward.9} parent=0 // pred_region
    _
  $region5: #{autoencoder_forward.9} parent=0 // pred_fallthru
    _
  // Predicated region
  $region6: #{autoencoder_forward.9} parent=0 // pred_check
    _
  $region7: #{autoencoder_forward.9} parent=0 // pred_check_branch
    %11 = sbr.rel (0) target = $region9
  $region8: #{autoencoder_forward.9} parent=0 // pred_region
    _
  $region9: #{autoencoder_forward.9} parent=0 // pred_fallthru
    _
  // Predicated region
  $region10: #{autoencoder_forward.9} parent=0 // pred_check
    _
  $region11: #{autoencoder_forward.9} parent=0 // pred_check_branch
    %13 = sbr.rel (0) target = $region13
  $region12: #{autoencoder_forward.9} parent=0 // pred_region
    _
  $region13: #{autoencoder_forward.9} parent=0 // pred_fallthru
    _
  %v15 = vld [vmem:[%s0] sm:$0xf]
  %v16 = vld [vmem:[%s1] sm:$0xff]
  %v17 = vld [vmem:[%s1 + $0x8] sm:$0xff]
  %v18 = vld [vmem:[%s1 + $0x10] sm:$0xff]
  %v19 = vld [vmem:[%s1 + $0x18] sm:$0xff]
  %v20 = vld [vmem:[%s1 + $0x20] sm:$0xff]
  %v21 = vld [vmem:[%s1 + $0x28] sm:$0xff]
  %v22 = vld [vmem:[%s1 + $0x30] sm:$0xf]
  %v23 = vld [vmem:[%s1 + $0x34] sm:$0xff]
  %v24 = vld [vmem:[%s1 + $0x3c] sm:$0xff]
  %v25 = vld [vmem:[%s1 + $0x44] sm:$0xff]
  %v26 = vld [vmem:[%s1 + $0x4c] sm:$0xff]
  %v27 = vld [vmem:[%s1 + $0x54] sm:$0xff]
  %v28 = vld [vmem:[%s1 + $0x5c] sm:$0xff]
  %v29 = vld [vmem:[%s1 + $0x64] sm:$0xf]
  %v30 = vld [vmem:[%s1 + $0x68] sm:$0xff]
  %v31 = vld [vmem:[%s1 + $0x70] sm:$0xff]
  %v32 = vld [vmem:[%s1 + $0x78] sm:$0xff]
  %v33 = vld [vmem:[%s1 + $0x80] sm:$0xff]
  %v34 = vld [vmem:[%s1 + $0x88] sm:$0xff]
  %v35 = vld [vmem:[%s1 + $0x90] sm:$0xff]
  %v36 = vld [vmem:[%s1 + $0x98] sm:$0xf]
  %v37 = vld [vmem:[%s1 + $0x9c] sm:$0xff]
  %v38 = vld [vmem:[%s1 + $0xa4] sm:$0xff]
  %v39 = vld [vmem:[%s1 + $0xac] sm:$0xff]
  %v40 = vld [vmem:[%s1 + $0xb4] sm:$0xff]
  %v41 = vld [vmem:[%s1 + $0xbc] sm:$0xff]
  %v42 = vld [vmem:[%s1 + $0xc4] sm:$0xff]
  %v43 = vld [vmem:[%s1 + $0xcc] sm:$0xf]
  %v44 = vld [vmem:[%s1 + $0xd0] sm:$0xff]
  %v45 = vld [vmem:[%s1 + $0xd8] sm:$0xff]
  %v46 = vld [vmem:[%s1 + $0xe0] sm:$0xff]
  %v47 = vld [vmem:[%s1 + $0xe8] sm:$0xff]
  %v48 = vld [vmem:[%s1 + $0xf0] sm:$0xff]
  %v49 = vld [vmem:[%s1 + $0xf8] sm:$0xff]
  %v50 = vld [vmem:[%s1 + $0x100] sm:$0xf]
  %v51 = vld [vmem:[%s1 + $0x104] sm:$0xff]
  %v52 = vld [vmem:[%s1 + $0x10c] sm:$0xff]
  %v53 = vld [vmem:[%s1 + $0x114] sm:$0xff]
  %v54 = vld [vmem:[%s1 + $0x11c] sm:$0xff]
  %v55 = vld [vmem:[%s1 + $0x124] sm:$0xff]
  %v56 = vld [vmem:[%s1 + $0x12c] sm:$0xff]
  %v57 = vld [vmem:[%s1 + $0x134] sm:$0xf]
  %v58 = vld [vmem:[%s1 + $0x138] sm:$0xff]
  %v59 = vld [vmem:[%s1 + $0x140] sm:$0xff]
  %v60 = vld [vmem:[%s1 + $0x148] sm:$0xff]
  %v61 = vld [vmem:[%s1 + $0x150] sm:$0xff]
  %v62 = vld [vmem:[%s1 + $0x158] sm:$0xff]
  %v63 = vld [vmem:[%s1 + $0x160] sm:$0xff]
  %v64 = vld [vmem:[%s1 + $0x168] sm:$0xf]
  %v65 = vld [vmem:[%s1 + $0x16c] sm:$0xff]
  %v66 = vld [vmem:[%s1 + $0x174] sm:$0xff]
  %v67 = vld [vmem:[%s1 + $0x17c] sm:$0xff]
  %v68 = vld [vmem:[%s1 + $0x184] sm:$0xff]
  %v69 = vld [vmem:[%s1 + $0x18c] sm:$0xff]
  %v70 = vld [vmem:[%s1 + $0x194] sm:$0xff]
  %v71 = vld [vmem:[%s1 + $0x19c] sm:$0xf]
  %v72 = vld [vmem:[%s2] sm:$0xff]
  %v73 = vld [vmem:[%s2 + $0x8] sm:$0x1f]
  %v76 = vlaneseq
  %v77 = vshrl.u32 %v76, 7
  %v78 = vsub.s32 0, %v77
  %v79 = vrot.slane %v72, %v78
  %v80 = vlaneseq
  %v81 = vshrl.u32 %v80, 7
  %v82 = vsub.s32 1, %v81
  %v83 = vrot.slane %v72, %v82
  %v84 = vlaneseq
  %v85 = vshrl.u32 %v84, 7
  %v86 = vsub.s32 2, %v85
  %v87 = vrot.slane %v72, %v86
  %v88 = vlaneseq
  %v89 = vshrl.u32 %v88, 7
  %v90 = vsub.s32 3, %v89
  %v91 = vrot.slane %v72, %v90
  %v92 = vlaneseq
  %v93 = vshrl.u32 %v92, 7
  %v94 = vsub.s32 4, %v93
  %v95 = vrot.slane %v72, %v94
  %v96 = vlaneseq
  %v97 = vshrl.u32 %v96, 7
  %v98 = vsub.s32 5, %v97
  %v99 = vrot.slane %v72, %v98
  %v100 = vlaneseq
  %v101 = vshrl.u32 %v100, 7
  %v102 = vsub.s32 6, %v101
  %v103 = vrot.slane %v72, %v102
  %v104 = vlaneseq
  %v105 = vshrl.u32 %v104, 7
  %v106 = vsub.s32 7, %v105
  %v107 = vrot.slane %v72, %v106
  %v108 = vlaneseq
  %v109 = vshrl.u32 %v108, 7
  %v110 = vsub.s32 0, %v109
  %v111 = vrot.slane %v73, %v110
  %v112 = vlaneseq
  %v113 = vshrl.u32 %v112, 7
  %v114 = vsub.s32 1, %v113
  %v115 = vrot.slane %v73, %v114
  %v116 = vlaneseq
  %v117 = vshrl.u32 %v116, 7
  %v118 = vsub.s32 2, %v117
  %v119 = vrot.slane %v73, %v118
  %v120 = vlaneseq
  %v121 = vshrl.u32 %v120, 7
  %v122 = vsub.s32 3, %v121
  %v123 = vrot.slane %v73, %v122
  %v124 = vlaneseq
  %v125 = vshrl.u32 %v124, 7
  %v126 = vsub.s32 4, %v125
  %v127 = vrot.slane %v73, %v126
  %v197 = vunpack.c.l.b16 %v16
  %v198 = vunpack.c.h.b16 %v16
  %v199 = vunpack.c.l.b16 %v17
  %v200 = vunpack.c.h.b16 %v17
  %v201 = vunpack.c.l.b16 %v18
  %v202 = vunpack.c.h.b16 %v18
  %v203 = vunpack.c.l.b16 %v19
  %v204 = vunpack.c.h.b16 %v19
  %v205 = vunpack.c.l.b16 %v20
  %v206 = vunpack.c.h.b16 %v20
  %v207 = vunpack.c.l.b16 %v21
  %v208 = vunpack.c.h.b16 %v21
  %v209 = vunpack.c.l.b16 %v22
  %v210 = vunpack.c.l.b16 %v23
  %v211 = vunpack.c.h.b16 %v23
  %v212 = vunpack.c.l.b16 %v24
  %v213 = vunpack.c.h.b16 %v24
  %v214 = vunpack.c.l.b16 %v25
  %v215 = vunpack.c.h.b16 %v25
  %v216 = vunpack.c.l.b16 %v26
  %v217 = vunpack.c.h.b16 %v26
  %v218 = vunpack.c.l.b16 %v27
  %v219 = vunpack.c.h.b16 %v27
  %v220 = vunpack.c.l.b16 %v28
  %v221 = vunpack.c.h.b16 %v28
  %v222 = vunpack.c.l.b16 %v29
  %v223 = vunpack.c.l.b16 %v30
  %v224 = vunpack.c.h.b16 %v30
  %v225 = vunpack.c.l.b16 %v31
  %v226 = vunpack.c.h.b16 %v31
  %v227 = vunpack.c.l.b16 %v32
  %v228 = vunpack.c.h.b16 %v32
  %v229 = vunpack.c.l.b16 %v33
  %v230 = vunpack.c.h.b16 %v33
  %v231 = vunpack.c.l.b16 %v34
  %v232 = vunpack.c.h.b16 %v34
  %v233 = vunpack.c.l.b16 %v35
  %v234 = vunpack.c.h.b16 %v35
  %v235 = vunpack.c.l.b16 %v36
  %v236 = vunpack.c.l.b16 %v37
  %v237 = vunpack.c.h.b16 %v37
  %v238 = vunpack.c.l.b16 %v38
  %v239 = vunpack.c.h.b16 %v38
  %v240 = vunpack.c.l.b16 %v39
  %v241 = vunpack.c.h.b16 %v39
  %v242 = vunpack.c.l.b16 %v40
  %v243 = vunpack.c.h.b16 %v40
  %v244 = vunpack.c.l.b16 %v41
  %v245 = vunpack.c.h.b16 %v41
  %v246 = vunpack.c.l.b16 %v42
  %v247 = vunpack.c.h.b16 %v42
  %v248 = vunpack.c.l.b16 %v43
  %v249 = vunpack.c.l.b16 %v44
  %v250 = vunpack.c.h.b16 %v44
  %v251 = vunpack.c.l.b16 %v45
  %v252 = vunpack.c.h.b16 %v45
  %v253 = vunpack.c.l.b16 %v46
  %v254 = vunpack.c.h.b16 %v46
  %v255 = vunpack.c.l.b16 %v47
  %v256 = vunpack.c.h.b16 %v47
  %v257 = vunpack.c.l.b16 %v48
  %v258 = vunpack.c.h.b16 %v48
  %v259 = vunpack.c.l.b16 %v49
  %v260 = vunpack.c.h.b16 %v49
  %v261 = vunpack.c.l.b16 %v50
  %v262 = vunpack.c.l.b16 %v51
  %v263 = vunpack.c.h.b16 %v51
  %v264 = vunpack.c.l.b16 %v52
  %v265 = vunpack.c.h.b16 %v52
  %v266 = vunpack.c.l.b16 %v53
  %v267 = vunpack.c.h.b16 %v53
  %v268 = vunpack.c.l.b16 %v54
  %v269 = vunpack.c.h.b16 %v54
  %v270 = vunpack.c.l.b16 %v55
  %v271 = vunpack.c.h.b16 %v55
  %v272 = vunpack.c.l.b16 %v56
  %v273 = vunpack.c.h.b16 %v56
  %v274 = vunpack.c.l.b16 %v57
  %v275 = vunpack.c.l.b16 %v58
  %v276 = vunpack.c.h.b16 %v58
  %v277 = vunpack.c.l.b16 %v59
  %v278 = vunpack.c.h.b16 %v59
  %v279 = vunpack.c.l.b16 %v60
  %v280 = vunpack.c.h.b16 %v60
  %v281 = vunpack.c.l.b16 %v61
  %v282 = vunpack.c.h.b16 %v61
  %v283 = vunpack.c.l.b16 %v62
  %v284 = vunpack.c.h.b16 %v62
  %v285 = vunpack.c.l.b16 %v63
  %v286 = vunpack.c.h.b16 %v63
  %v287 = vunpack.c.l.b16 %v64
  %v288 = vunpack.c.l.b16 %v65
  %v289 = vunpack.c.h.b16 %v65
  %v290 = vunpack.c.l.b16 %v66
  %v291 = vunpack.c.h.b16 %v66
  %v292 = vunpack.c.l.b16 %v67
  %v293 = vunpack.c.h.b16 %v67
  %v294 = vunpack.c.l.b16 %v68
  %v295 = vunpack.c.h.b16 %v68
  %v296 = vunpack.c.l.b16 %v69
  %v297 = vunpack.c.h.b16 %v69
  %v298 = vunpack.c.l.b16 %v70
  %v299 = vunpack.c.h.b16 %v70
  %v300 = vunpack.c.l.b16 %v71
  %v301 = vpack.c.b16 %v210, %v197
  %v302 = vpack.c.b16 %v211, %v198
  %v303 = vpack.c.b16 %v212, %v199
  %v304 = vpack.c.b16 %v213, %v200
  %v305 = vpack.c.b16 %v214, %v201
  %v306 = vpack.c.b16 %v215, %v202
  %v307 = vpack.c.b16 %v216, %v203
  %v308 = vpack.c.b16 %v217, %v204
  %v309 = vpack.c.b16 %v218, %v205
  %v310 = vpack.c.b16 %v219, %v206
  %v311 = vpack.c.b16 %v220, %v207
  %v312 = vpack.c.b16 %v221, %v208
  %v313 = vpack.c.b16 %v222, %v209
  %v314 = vpack.c.b16 %v236, %v223
  %v315 = vpack.c.b16 %v237, %v224
  %v316 = vpack.c.b16 %v238, %v225
  %v317 = vpack.c.b16 %v239, %v226
  %v318 = vpack.c.b16 %v240, %v227
  %v319 = vpack.c.b16 %v241, %v228
  %v320 = vpack.c.b16 %v242, %v229
  %v321 = vpack.c.b16 %v243, %v230
  %v322 = vpack.c.b16 %v244, %v231
  %v323 = vpack.c.b16 %v245, %v232
  %v324 = vpack.c.b16 %v246, %v233
  %v325 = vpack.c.b16 %v247, %v234
  %v326 = vpack.c.b16 %v248, %v235
  %v327 = vpack.c.b16 %v262, %v249
  %v328 = vpack.c.b16 %v263, %v250
  %v329 = vpack.c.b16 %v264, %v251
  %v330 = vpack.c.b16 %v265, %v252
  %v331 = vpack.c.b16 %v266, %v253
  %v332 = vpack.c.b16 %v267, %v254
  %v333 = vpack.c.b16 %v268, %v255
  %v334 = vpack.c.b16 %v269, %v256
  %v335 = vpack.c.b16 %v270, %v257
  %v336 = vpack.c.b16 %v271, %v258
  %v337 = vpack.c.b16 %v272, %v259
  %v338 = vpack.c.b16 %v273, %v260
  %v339 = vpack.c.b16 %v274, %v261
  %v340 = vpack.c.b16 %v288, %v275
  %v341 = vpack.c.b16 %v289, %v276
  %v342 = vpack.c.b16 %v290, %v277
  %v343 = vpack.c.b16 %v291, %v278
  %v344 = vpack.c.b16 %v292, %v279
  %v345 = vpack.c.b16 %v293, %v280
  %v346 = vpack.c.b16 %v294, %v281
  %v347 = vpack.c.b16 %v295, %v282
  %v348 = vpack.c.b16 %v296, %v283
  %v349 = vpack.c.b16 %v297, %v284
  %v350 = vpack.c.b16 %v298, %v285
  %v351 = vpack.c.b16 %v299, %v286
  %v352 = vpack.c.b16 %v300, %v287
  %vm405 = vcmask 523264
  %v407 = vsel %vm405, %v15, 0
  %409 = vmatprep.subr.bf16.mxu0 0
  %410 = vmatpush1.bf16.msra.mxu0 0
  %411 = vmatprep.subr.bf16.mxu0 0
  %412 = vmatpush1.bf16.msra.mxu0 0
  %413 = vmatprep.subr.bf16.mxu0 0
  %414 = vmatpush1.bf16.msra.mxu0 0
  %415 = vmatprep.subr.bf16.mxu0 0
  %416 = vmatpush1.bf16.msra.mxu0 0
  %417 = vmatprep.subr.bf16.mxu0 %v341
  %418 = vmatpush1.bf16.msra.mxu0 %v340
  %419 = vmatprep.subr.bf16.mxu0 %v328
  %420 = vmatpush1.bf16.msra.mxu0 %v327
  %421 = vmatprep.subr.bf16.mxu0 %v315
  %422 = vmatpush1.bf16.msra.mxu0 %v314
  %423 = vmatprep.subr.bf16.mxu0 %v302
  %424 = vmatpush1.bf16.msra.mxu0 %v301
  %425 = vmatprep.subr.bf16.mxu0 0
  %426 = vmatpush2.bf16.msra.mxu0 0
  %427 = vmatprep.subr.bf16.mxu0 0
  %428 = vmatpush2.bf16.msra.mxu0 0
  %429 = vmatprep.subr.bf16.mxu0 0
  %430 = vmatpush2.bf16.msra.mxu0 0
  %431 = vmatprep.subr.bf16.mxu0 0
  %432 = vmatpush2.bf16.msra.mxu0 0
  %433 = vmatprep.subr.bf16.mxu0 0
  %434 = vmatpush2.bf16.msra.mxu0 0
  %435 = vmatprep.subr.bf16.mxu0 0
  %436 = vmatpush2.bf16.msra.mxu0 0
  %437 = vmatprep.subr.bf16.mxu0 0
  %438 = vmatpush2.bf16.msra.mxu0 0
  %439 = vmatprep.subr.bf16.mxu0 0
  %440 = vmatpush2.bf16.msra.mxu0 0
  %441 = vmatprep.mubr.bf16.mxu0 0
  %442 = vmatmul.mubr.bf16.gmra.mxu0 %v407
  %v443 = vpop.f32.mrf.mxu0
  %v444 = vadd.f32 %v79, %v443
  %v445 = vpop.f32.mrf.mxu0
  %v446 = vadd.f32 %v83, %v445
  %v447 = vpop.f32.mrf.mxu0
  %v448 = vpop.f32.mrf.mxu0
  %449 = vdwg.mxu0
  %450 = vmatprep.subr.bf16.mxu0 0
  %451 = vmatpush1.bf16.msra.mxu0 0
  %452 = vmatprep.subr.bf16.mxu0 0
  %453 = vmatpush1.bf16.msra.mxu0 0
  %454 = vmatprep.subr.bf16.mxu0 0
  %455 = vmatpush1.bf16.msra.mxu0 0
  %456 = vmatprep.subr.bf16.mxu0 0
  %457 = vmatpush1.bf16.msra.mxu0 0
  %458 = vmatprep.subr.bf16.mxu0 %v343
  %459 = vmatpush1.bf16.msra.mxu0 %v342
  %460 = vmatprep.subr.bf16.mxu0 %v330
  %461 = vmatpush1.bf16.msra.mxu0 %v329
  %462 = vmatprep.subr.bf16.mxu0 %v317
  %463 = vmatpush1.bf16.msra.mxu0 %v316
  %464 = vmatprep.subr.bf16.mxu0 %v304
  %465 = vmatpush1.bf16.msra.mxu0 %v303
  %466 = vmatprep.subr.bf16.mxu0 0
  %467 = vmatpush2.bf16.msra.mxu0 0
  %468 = vmatprep.subr.bf16.mxu0 0
  %469 = vmatpush2.bf16.msra.mxu0 0
  %470 = vmatprep.subr.bf16.mxu0 0
  %471 = vmatpush2.bf16.msra.mxu0 0
  %472 = vmatprep.subr.bf16.mxu0 0
  %473 = vmatpush2.bf16.msra.mxu0 0
  %474 = vmatprep.subr.bf16.mxu0 0
  %475 = vmatpush2.bf16.msra.mxu0 0
  %476 = vmatprep.subr.bf16.mxu0 0
  %477 = vmatpush2.bf16.msra.mxu0 0
  %478 = vmatprep.subr.bf16.mxu0 0
  %479 = vmatpush2.bf16.msra.mxu0 0
  %480 = vmatprep.subr.bf16.mxu0 0
  %481 = vmatpush2.bf16.msra.mxu0 0
  %482 = vmatprep.mubr.bf16.mxu0 0
  %483 = vmatmul.mubr.bf16.gmra.mxu0 %v407
  %v484 = vpop.f32.mrf.mxu0
  %v485 = vadd.f32 %v87, %v484
  %v486 = vpop.f32.mrf.mxu0
  %v487 = vadd.f32 %v91, %v486
  %v488 = vpop.f32.mrf.mxu0
  %v489 = vpop.f32.mrf.mxu0
  %490 = vdwg.mxu0
  %491 = vmatprep.subr.bf16.mxu0 0
  %492 = vmatpush1.bf16.msra.mxu0 0
  %493 = vmatprep.subr.bf16.mxu0 0
  %494 = vmatpush1.bf16.msra.mxu0 0
  %495 = vmatprep.subr.bf16.mxu0 0
  %496 = vmatpush1.bf16.msra.mxu0 0
  %497 = vmatprep.subr.bf16.mxu0 0
  %498 = vmatpush1.bf16.msra.mxu0 0
  %499 = vmatprep.subr.bf16.mxu0 %v345
  %500 = vmatpush1.bf16.msra.mxu0 %v344
  %501 = vmatprep.subr.bf16.mxu0 %v332
  %502 = vmatpush1.bf16.msra.mxu0 %v331
  %503 = vmatprep.subr.bf16.mxu0 %v319
  %504 = vmatpush1.bf16.msra.mxu0 %v318
  %505 = vmatprep.subr.bf16.mxu0 %v306
  %506 = vmatpush1.bf16.msra.mxu0 %v305
  %507 = vmatprep.subr.bf16.mxu0 0
  %508 = vmatpush2.bf16.msra.mxu0 0
  %509 = vmatprep.subr.bf16.mxu0 0
  %510 = vmatpush2.bf16.msra.mxu0 0
  %511 = vmatprep.subr.bf16.mxu0 0
  %512 = vmatpush2.bf16.msra.mxu0 0
  %513 = vmatprep.subr.bf16.mxu0 0
  %514 = vmatpush2.bf16.msra.mxu0 0
  %515 = vmatprep.subr.bf16.mxu0 0
  %516 = vmatpush2.bf16.msra.mxu0 0
  %517 = vmatprep.subr.bf16.mxu0 0
  %518 = vmatpush2.bf16.msra.mxu0 0
  %519 = vmatprep.subr.bf16.mxu0 0
  %520 = vmatpush2.bf16.msra.mxu0 0
  %521 = vmatprep.subr.bf16.mxu0 0
  %522 = vmatpush2.bf16.msra.mxu0 0
  %523 = vmatprep.mubr.bf16.mxu0 0
  %524 = vmatmul.mubr.bf16.gmra.mxu0 %v407
  %v525 = vpop.f32.mrf.mxu0
  %v526 = vadd.f32 %v95, %v525
  %v527 = vpop.f32.mrf.mxu0
  %v528 = vadd.f32 %v99, %v527
  %v529 = vpop.f32.mrf.mxu0
  %v530 = vpop.f32.mrf.mxu0
  %531 = vdwg.mxu0
  %532 = vmatprep.subr.bf16.mxu0 0
  %533 = vmatpush1.bf16.msra.mxu0 0
  %534 = vmatprep.subr.bf16.mxu0 0
  %535 = vmatpush1.bf16.msra.mxu0 0
  %536 = vmatprep.subr.bf16.mxu0 0
  %537 = vmatpush1.bf16.msra.mxu0 0
  %538 = vmatprep.subr.bf16.mxu0 0
  %539 = vmatpush1.bf16.msra.mxu0 0
  %540 = vmatprep.subr.bf16.mxu0 %v347
  %541 = vmatpush1.bf16.msra.mxu0 %v346
  %542 = vmatprep.subr.bf16.mxu0 %v334
  %543 = vmatpush1.bf16.msra.mxu0 %v333
  %544 = vmatprep.subr.bf16.mxu0 %v321
  %545 = vmatpush1.bf16.msra.mxu0 %v320
  %546 = vmatprep.subr.bf16.mxu0 %v308
  %547 = vmatpush1.bf16.msra.mxu0 %v307
  %548 = vmatprep.subr.bf16.mxu0 0
  %549 = vmatpush2.bf16.msra.mxu0 0
  %550 = vmatprep.subr.bf16.mxu0 0
  %551 = vmatpush2.bf16.msra.mxu0 0
  %552 = vmatprep.subr.bf16.mxu0 0
  %553 = vmatpush2.bf16.msra.mxu0 0
  %554 = vmatprep.subr.bf16.mxu0 0
  %555 = vmatpush2.bf16.msra.mxu0 0
  %556 = vmatprep.subr.bf16.mxu0 0
  %557 = vmatpush2.bf16.msra.mxu0 0
  %558 = vmatprep.subr.bf16.mxu0 0
  %559 = vmatpush2.bf16.msra.mxu0 0
  %560 = vmatprep.subr.bf16.mxu0 0
  %561 = vmatpush2.bf16.msra.mxu0 0
  %562 = vmatprep.subr.bf16.mxu0 0
  %563 = vmatpush2.bf16.msra.mxu0 0
  %564 = vmatprep.mubr.bf16.mxu0 0
  %565 = vmatmul.mubr.bf16.gmra.mxu0 %v407
  %v566 = vpop.f32.mrf.mxu0
  %v567 = vadd.f32 %v103, %v566
  %v568 = vpop.f32.mrf.mxu0
  %v569 = vadd.f32 %v107, %v568
  %v570 = vpop.f32.mrf.mxu0
  %v571 = vpop.f32.mrf.mxu0
  %572 = vdwg.mxu0
  %573 = vmatprep.subr.bf16.mxu0 0
  %574 = vmatpush1.bf16.msra.mxu0 0
  %575 = vmatprep.subr.bf16.mxu0 0
  %576 = vmatpush1.bf16.msra.mxu0 0
  %577 = vmatprep.subr.bf16.mxu0 0
  %578 = vmatpush1.bf16.msra.mxu0 0
  %579 = vmatprep.subr.bf16.mxu0 0
  %580 = vmatpush1.bf16.msra.mxu0 0
  %581 = vmatprep.subr.bf16.mxu0 %v349
  %582 = vmatpush1.bf16.msra.mxu0 %v348
  %583 = vmatprep.subr.bf16.mxu0 %v336
  %584 = vmatpush1.bf16.msra.mxu0 %v335
  %585 = vmatprep.subr.bf16.mxu0 %v323
  %586 = vmatpush1.bf16.msra.mxu0 %v322
  %587 = vmatprep.subr.bf16.mxu0 %v310
  %588 = vmatpush1.bf16.msra.mxu0 %v309
  %589 = vmatprep.subr.bf16.mxu0 0
  %590 = vmatpush2.bf16.msra.mxu0 0
  %591 = vmatprep.subr.bf16.mxu0 0
  %592 = vmatpush2.bf16.msra.mxu0 0
  %593 = vmatprep.subr.bf16.mxu0 0
  %594 = vmatpush2.bf16.msra.mxu0 0
  %595 = vmatprep.subr.bf16.mxu0 0
  %596 = vmatpush2.bf16.msra.mxu0 0
  %597 = vmatprep.subr.bf16.mxu0 0
  %598 = vmatpush2.bf16.msra.mxu0 0
  %599 = vmatprep.subr.bf16.mxu0 0
  %600 = vmatpush2.bf16.msra.mxu0 0
  %601 = vmatprep.subr.bf16.mxu0 0
  %602 = vmatpush2.bf16.msra.mxu0 0
  %603 = vmatprep.subr.bf16.mxu0 0
  %604 = vmatpush2.bf16.msra.mxu0 0
  %605 = vmatprep.mubr.bf16.mxu0 0
  %606 = vmatmul.mubr.bf16.gmra.mxu0 %v407
  %v607 = vpop.f32.mrf.mxu0
  %v608 = vadd.f32 %v111, %v607
  %v609 = vpop.f32.mrf.mxu0
  %v610 = vadd.f32 %v115, %v609
  %v611 = vpop.f32.mrf.mxu0
  %v612 = vpop.f32.mrf.mxu0
  %613 = vdwg.mxu0
  %614 = vmatprep.subr.bf16.mxu0 0
  %615 = vmatpush1.bf16.msra.mxu0 0
  %616 = vmatprep.subr.bf16.mxu0 0
  %617 = vmatpush1.bf16.msra.mxu0 0
  %618 = vmatprep.subr.bf16.mxu0 0
  %619 = vmatpush1.bf16.msra.mxu0 0
  %620 = vmatprep.subr.bf16.mxu0 0
  %621 = vmatpush1.bf16.msra.mxu0 0
  %622 = vmatprep.subr.bf16.mxu0 %v351
  %623 = vmatpush1.bf16.msra.mxu0 %v350
  %624 = vmatprep.subr.bf16.mxu0 %v338
  %625 = vmatpush1.bf16.msra.mxu0 %v337
  %626 = vmatprep.subr.bf16.mxu0 %v325
  %627 = vmatpush1.bf16.msra.mxu0 %v324
  %628 = vmatprep.subr.bf16.mxu0 %v312
  %629 = vmatpush1.bf16.msra.mxu0 %v311
  %630 = vmatprep.subr.bf16.mxu0 0
  %631 = vmatpush2.bf16.msra.mxu0 0
  %632 = vmatprep.subr.bf16.mxu0 0
  %633 = vmatpush2.bf16.msra.mxu0 0
  %634 = vmatprep.subr.bf16.mxu0 0
  %635 = vmatpush2.bf16.msra.mxu0 0
  %636 = vmatprep.subr.bf16.mxu0 0
  %637 = vmatpush2.bf16.msra.mxu0 0
  %638 = vmatprep.subr.bf16.mxu0 0
  %639 = vmatpush2.bf16.msra.mxu0 0
  %640 = vmatprep.subr.bf16.mxu0 0
  %641 = vmatpush2.bf16.msra.mxu0 0
  %642 = vmatprep.subr.bf16.mxu0 0
  %643 = vmatpush2.bf16.msra.mxu0 0
  %644 = vmatprep.subr.bf16.mxu0 0
  %645 = vmatpush2.bf16.msra.mxu0 0
  %646 = vmatprep.mubr.bf16.mxu0 0
  %647 = vmatmul.mubr.bf16.gmra.mxu0 %v407
  %v648 = vpop.f32.mrf.mxu0
  %v649 = vadd.f32 %v119, %v648
  %v650 = vpop.f32.mrf.mxu0
  %v651 = vadd.f32 %v123, %v650
  %v652 = vpop.f32.mrf.mxu0
  %v653 = vpop.f32.mrf.mxu0
  %654 = vdwg.mxu0
  %655 = vmatprep.subr.bf16.mxu0 0
  %656 = vmatpush1.bf16.msra.mxu0 0
  %657 = vmatprep.subr.bf16.mxu0 0
  %658 = vmatpush1.bf16.msra.mxu0 0
  %659 = vmatprep.subr.bf16.mxu0 0
  %660 = vmatpush1.bf16.msra.mxu0 0
  %661 = vmatprep.subr.bf16.mxu0 0
  %662 = vmatpush1.bf16.msra.mxu0 0
  %663 = vmatprep.subr.bf16.mxu0 0
  %664 = vmatpush1.bf16.msra.mxu0 %v352
  %665 = vmatprep.subr.bf16.mxu0 0
  %666 = vmatpush1.bf16.msra.mxu0 %v339
  %667 = vmatprep.subr.bf16.mxu0 0
  %668 = vmatpush1.bf16.msra.mxu0 %v326
  %669 = vmatprep.subr.bf16.mxu0 0
  %670 = vmatpush1.bf16.msra.mxu0 %v313
  %671 = vmatprep.subr.bf16.mxu0 0
  %672 = vmatpush2.bf16.msra.mxu0 0
  %673 = vmatprep.subr.bf16.mxu0 0
  %674 = vmatpush2.bf16.msra.mxu0 0
  %675 = vmatprep.subr.bf16.mxu0 0
  %676 = vmatpush2.bf16.msra.mxu0 0
  %677 = vmatprep.subr.bf16.mxu0 0
  %678 = vmatpush2.bf16.msra.mxu0 0
  %679 = vmatprep.subr.bf16.mxu0 0
  %680 = vmatpush2.bf16.msra.mxu0 0
  %681 = vmatprep.subr.bf16.mxu0 0
  %682 = vmatpush2.bf16.msra.mxu0 0
  %683 = vmatprep.subr.bf16.mxu0 0
  %684 = vmatpush2.bf16.msra.mxu0 0
  %685 = vmatprep.subr.bf16.mxu0 0
  %686 = vmatpush2.bf16.msra.mxu0 0
  %687 = vmatprep.mubr.bf16.mxu0 0
  %688 = vmatmul.mubr.bf16.gmra.mxu0 %v407
  %v689 = vpop.f32.mrf.mxu0
  %v690 = vadd.f32 %v127, %v689
  %v691 = vpop.f32.mrf.mxu0
  %v692 = vpop.f32.mrf.mxu0
  %v693 = vpop.f32.mrf.mxu0
  %694 = vdwg.mxu0
  %v695 = vmax.f32 %v444, 0.0
  %v696 = vmax.f32 %v446, 0.0
  %v697 = vmax.f32 %v485, 0.0
  %v698 = vmax.f32 %v487, 0.0
  %v699 = vmax.f32 %v526, 0.0
  %v700 = vmax.f32 %v528, 0.0
  %v701 = vmax.f32 %v567, 0.0
  %v702 = vmax.f32 %v569, 0.0
  %v703 = vmax.f32 %v608, 0.0
  %v704 = vmax.f32 %v610, 0.0
  %v705 = vmax.f32 %v649, 0.0
  %v706 = vmax.f32 %v651, 0.0
  %v707 = vmax.f32 %v690, 0.0
  %708 = vst [vmem:[%s3] sm:$0xff] %v695
  %709 = vst [vmem:[%s3 + $0x8] sm:$0xff] %v696
  %710 = vst [vmem:[%s3 + $0x10] sm:$0xff] %v697
  %711 = vst [vmem:[%s3 + $0x18] sm:$0xff] %v698
  %712 = vst [vmem:[%s3 + $0x20] sm:$0xff] %v699
  %713 = vst [vmem:[%s3 + $0x28] sm:$0xff] %v700
  %714 = vst [vmem:[%s3 + $0x30] sm:$0xff] %v701
  %715 = vst [vmem:[%s3 + $0x38] sm:$0xff] %v702
  %716 = vst [vmem:[%s3 + $0x40] sm:$0xff] %v703
  %717 = vst [vmem:[%s3 + $0x48] sm:$0xff] %v704
  %718 = vst [vmem:[%s3 + $0x50] sm:$0xff] %v705
  %719 = vst [vmem:[%s3 + $0x58] sm:$0xff] %v706
  %720 = vst [vmem:[%s3 + $0x60] sm:$0xff] %v707
  // Predicated region
  $region14: #{autoencoder_forward.9} parent=0 // pred_check
    _
  $region15: #{autoencoder_forward.9} parent=0 // pred_check_branch
    %722 = sbr.rel (0) target = $region17
  $region16: #{autoencoder_forward.9} parent=0 // pred_region
    _
  $region17: #{autoencoder_forward.9} parent=0 // pred_fallthru
    _
  // Predicated region
  $region18: #{autoencoder_forward.9} parent=0 // pred_check
    _
  $region19: #{autoencoder_forward.9} parent=0 // pred_check_branch
    %724 = sbr.rel (0) target = $region21
  $region20: #{autoencoder_forward.9} parent=0 // pred_region
    _
  $region21: #{autoencoder_forward.9} parent=0 // pred_fallthru
    _

// kernel: tile.23
$region0: #{tile.23}
  #allocation0 [shape = 's32[1]{0}', space=sflag, size = 0x4, scoped, tag = 'scoped memory for tile.23']
  %s0 = inlined_call_operand.vmem [shape: f32[16], index: 0, kind: input, shape index: {}]
  %s1 = inlined_call_operand.vmem [shape: f32[4,16], index: 1, kind: output, shape index: {}]
  // Predicated region
  $region2: #{tile.23} parent=0 // pred_check
    _
  $region3: #{tile.23} parent=0 // pred_check_branch
    %3 = sbr.rel (0) target = $region5
  $region4: #{tile.23} parent=0 // pred_region
    _
  $region5: #{tile.23} parent=0 // pred_fallthru
    _
  %v4 = vld [vmem:[%s0] ss:$0 sm:$0xff]
  %5 = vst [vmem:[%s1] sm:$0xf] %v4

// kernel: tile.24
$region0: #{tile.24}
  %s0 = inlined_call_operand.vmem [shape: f32[4,16], index: 0, kind: input, shape index: {}]
  %s1 = inlined_call_operand.vmem [shape: f32[64], index: 1, kind: output, shape index: {}]
  $region1: #{tile.24} parent=0
    #allocation0 [shape = 'u8[4096]{0}', space=vmem, size = 0x1000, scoped, tag = 'scoped mem for output reshape']
    #allocation1 [shape = 'u8[4096]{0}', space=vmem, size = 0x1000, scoped, tag = 'scoped mem for input reshape']
    %s3 = sshll.u32 1, 4
    %s4 = ssub.s32 %s3, 1
    %v5 = vld [vmem:[%s0] sm:%s4]
    %6 = vst [vmem:[#allocation1] sm:%s4] %v5
    %v7 = vld [vmem:[#allocation1] sm:$0x1]
    %vm8 = vcmask 130048
    %9 = vst.msk [vmem:[#allocation0] sm:$0x1] %vm8, %v7
    %s10 = scalar_lea.vmem [#allocation1], 3
    %v11 = vld [vmem:[%s10] sm:$0x1]
    %12 = vrot.lane.b32.xlu0 %v11, 48
    %v13 = vpop.permute.xlu0 %12
    %vm14 = vcmask 523648
    %15 = vst.msk [vmem:[#allocation0] sm:$0x1] %vm14, %v13
    %s16 = scalar_lea.vmem [#allocation1], 2
    %v17 = vld [vmem:[%s16] sm:$0x1]
    %18 = vrot.lane.b32.xlu0 %v17, 32
    %v19 = vpop.permute.xlu0 %18
    %vm20 = vcmask 392448
    %21 = vst.msk [vmem:[#allocation0] sm:$0x1] %vm20, %v19
    %s22 = scalar_lea.vmem [#allocation1], 1
    %v23 = vld [vmem:[%s22] sm:$0x1]
    %24 = vrot.lane.b32.xlu0 %v23, 16
    %v25 = vpop.permute.xlu0 %24
    %vm26 = vcmask 261248
    %27 = vst.msk [vmem:[#allocation0] sm:$0x1] %vm26, %v25
    %s29 = sshll.u32 1, 1
    %s30 = ssub.s32 %s29, 1
    %v32 = vld [vmem:[#allocation0] sm:%s30]
    %s33 = sshll.u32 1, 1
    %s34 = ssub.s32 %s33, 1
    %35 = vst [vmem:[%s1] sm:%s34] %v32

// kernel: autoencoder_forward.10
$region0: #{autoencoder_forward.10}
  #allocation0 [shape = 'u32[]', space=smem, size = 0x4, offset = 0x4, fixed_abs, tag = 'smem constant byte address 0x4 - core index']
  #allocation1 [shape = 'u32[144,128]{1,0:T(1,128)}', space=vmem, size = 0x12000, scoped, tag = 'internal scratch']
  %s0 = inlined_call_operand.vmem [shape: bf16[104,128], index: 0, kind: input, shape index: {}]
  %s1 = inlined_call_operand.vmem [shape: bf16[128,128], index: 1, kind: input, shape index: {}]
  %s2 = inlined_call_operand.vmem [shape: f32[1,128], index: 2, kind: input, shape index: {}]
  %s3 = inlined_call_operand.vmem [shape: f32[104,128], index: 3, kind: output, shape index: {}]
  %s4 = sld [smem:[#allocation0]]
  $region22: #{autoencoder_forward.10} parent=0
    _
  %s6 = ssub.s32 1, %s4
  %s7 = scalar_select 0, %s6, %s4
  // Predicated region
  $region2: #{autoencoder_forward.10} parent=0 // pred_check
    _
  $region3: #{autoencoder_forward.10} parent=0 // pred_check_branch
    %9 = sbr.rel (0) target = $region5
  $region4: #{autoencoder_forward.10} parent=0 // pred_region
    _
  $region5: #{autoencoder_forward.10} parent=0 // pred_fallthru
    _
  // Predicated region
  $region6: #{autoencoder_forward.10} parent=0 // pred_check
    _
  $region7: #{autoencoder_forward.10} parent=0 // pred_check_branch
    %11 = sbr.rel (0) target = $region9
  $region8: #{autoencoder_forward.10} parent=0 // pred_region
    _
  $region9: #{autoencoder_forward.10} parent=0 // pred_fallthru
    _
  // Predicated region
  $region10: #{autoencoder_forward.10} parent=0 // pred_check
    _
  $region11: #{autoencoder_forward.10} parent=0 // pred_check_branch
    %13 = sbr.rel (0) target = $region13
  $region12: #{autoencoder_forward.10} parent=0 // pred_region
    _
  $region13: #{autoencoder_forward.10} parent=0 // pred_fallthru
    _
  %v15 = vld [vmem:[%s0] sm:$0xf]
  %v16 = vld [vmem:[%s0 + $0x4] sm:$0xf]
  %v17 = vld [vmem:[%s0 + $0x8] sm:$0xf]
  %v18 = vld [vmem:[%s0 + $0xc] sm:$0xf]
  %v19 = vld [vmem:[%s0 + $0x10] sm:$0xf]
  %v20 = vld [vmem:[%s0 + $0x14] sm:$0xf]
  %v21 = vld [vmem:[%s0 + $0x18] sm:$0xf]
  %v22 = vld [vmem:[%s0 + $0x1c] sm:$0xf]
  %v23 = vld [vmem:[%s0 + $0x20] sm:$0xf]
  %v24 = vld [vmem:[%s0 + $0x24] sm:$0xf]
  %v25 = vld [vmem:[%s0 + $0x28] sm:$0xf]
  %v26 = vld [vmem:[%s0 + $0x2c] sm:$0xf]
  %v27 = vld [vmem:[%s0 + $0x30] sm:$0xf]
  %v28 = vld [vmem:[%s1] sm:$0xf]
  %v29 = vld [vmem:[%s1 + $0x4] sm:$0xf]
  %v30 = vld [vmem:[%s1 + $0x8] sm:$0xf]
  %v31 = vld [vmem:[%s1 + $0xc] sm:$0xf]
  %v32 = vld [vmem:[%s1 + $0x10] sm:$0xf]
  %v33 = vld [vmem:[%s1 + $0x14] sm:$0xf]
  %v34 = vld [vmem:[%s1 + $0x18] sm:$0xf]
  %v35 = vld [vmem:[%s1 + $0x1c] sm:$0xf]
  %v36 = vld [vmem:[%s1 + $0x20] sm:$0xf]
  %v37 = vld [vmem:[%s1 + $0x24] sm:$0xf]
  %v38 = vld [vmem:[%s1 + $0x28] sm:$0xf]
  %v39 = vld [vmem:[%s1 + $0x2c] sm:$0xf]
  %v40 = vld [vmem:[%s1 + $0x30] sm:$0xf]
  %v41 = vld [vmem:[%s1 + $0x34] sm:$0xf]
  %v42 = vld [vmem:[%s1 + $0x38] sm:$0xf]
  %v43 = vld [vmem:[%s1 + $0x3c] sm:$0xf]
  %v44 = vld [vmem:[%s2] sm:$0x1]
  %v46 = vlaneseq
  %v47 = vshrl.u32 %v46, 7
  %v48 = vsub.s32 0, %v47
  %v49 = vrot.slane %v44, %v48
  %v64 = vunpack.c.l.b16 %v15
  %v65 = vunpack.c.l.b16 %v16
  %v66 = vunpack.c.l.b16 %v17
  %v67 = vunpack.c.l.b16 %v18
  %v68 = vunpack.c.l.b16 %v19
  %v69 = vunpack.c.l.b16 %v20
  %v70 = vunpack.c.l.b16 %v21
  %v71 = vunpack.c.l.b16 %v22
  %v72 = vunpack.c.l.b16 %v23
  %v73 = vunpack.c.l.b16 %v24
  %v74 = vunpack.c.l.b16 %v25
  %v75 = vunpack.c.l.b16 %v26
  %v76 = vunpack.c.l.b16 %v27
  %v77 = vpack.c.b16 %v65, %v64
  %v78 = vpack.c.b16 %v67, %v66
  %v79 = vpack.c.b16 %v69, %v68
  %v80 = vpack.c.b16 %v71, %v70
  %v81 = vpack.c.b16 %v73, %v72
  %v82 = vpack.c.b16 %v75, %v74
  %v83 = vpack.c.b16 %v76, %v76
  %v107 = vunpack.c.l.b16 %v28
  %v108 = vunpack.c.l.b16 %v29
  %v109 = vunpack.c.l.b16 %v30
  %v110 = vunpack.c.l.b16 %v31
  %v111 = vunpack.c.l.b16 %v32
  %v112 = vunpack.c.l.b16 %v33
  %v113 = vunpack.c.l.b16 %v34
  %v114 = vunpack.c.l.b16 %v35
  %v115 = vunpack.c.l.b16 %v36
  %v116 = vunpack.c.l.b16 %v37
  %v117 = vunpack.c.l.b16 %v38
  %v118 = vunpack.c.l.b16 %v39
  %v119 = vunpack.c.l.b16 %v40
  %v120 = vunpack.c.l.b16 %v41
  %v121 = vunpack.c.l.b16 %v42
  %v122 = vunpack.c.l.b16 %v43
  %v123 = vpack.c.b16 %v108, %v107
  %v124 = vpack.c.b16 %v110, %v109
  %v125 = vpack.c.b16 %v112, %v111
  %v126 = vpack.c.b16 %v114, %v113
  %v127 = vpack.c.b16 %v116, %v115
  %v128 = vpack.c.b16 %v118, %v117
  %v129 = vpack.c.b16 %v120, %v119
  %v130 = vpack.c.b16 %v122, %v121
  %139 = vmatprep.subr.bf16.mxu0 0
  %140 = vmatpush1.bf16.msra.mxu0 %v130
  %141 = vmatprep.subr.bf16.mxu0 0
  %142 = vmatpush1.bf16.msra.mxu0 %v129
  %143 = vmatprep.subr.bf16.mxu0 0
  %144 = vmatpush1.bf16.msra.mxu0 %v128
  %145 = vmatprep.subr.bf16.mxu0 0
  %146 = vmatpush1.bf16.msra.mxu0 %v127
  %147 = vmatprep.subr.bf16.mxu0 0
  %148 = vmatpush1.bf16.msra.mxu0 %v126
  %149 = vmatprep.subr.bf16.mxu0 0
  %150 = vmatpush1.bf16.msra.mxu0 %v125
  %151 = vmatprep.subr.bf16.mxu0 0
  %152 = vmatpush1.bf16.msra.mxu0 %v124
  %153 = vmatprep.subr.bf16.mxu0 0
  %154 = vmatpush1.bf16.msra.mxu0 %v123
  %155 = vmatprep.subr.bf16.mxu0 0
  %156 = vmatpush2.bf16.msra.mxu0 0
  %157 = vmatprep.subr.bf16.mxu0 0
  %158 = vmatpush2.bf16.msra.mxu0 0
  %159 = vmatprep.subr.bf16.mxu0 0
  %160 = vmatpush2.bf16.msra.mxu0 0
  %161 = vmatprep.subr.bf16.mxu0 0
  %162 = vmatpush2.bf16.msra.mxu0 0
  %163 = vmatprep.subr.bf16.mxu0 0
  %164 = vmatpush2.bf16.msra.mxu0 0
  %165 = vmatprep.subr.bf16.mxu0 0
  %166 = vmatpush2.bf16.msra.mxu0 0
  %167 = vmatprep.subr.bf16.mxu0 0
  %168 = vmatpush2.bf16.msra.mxu0 0
  %169 = vmatprep.subr.bf16.mxu0 0
  %170 = vmatpush2.bf16.msra.mxu0 0
  %171 = vmatprep.mubr.bf16.mxu0 0
  %172 = vmatmul.mubr.bf16.gmra.mxu0 %v77
  %v173 = vpop.f32.mrf.mxu0
  %v174 = vadd.f32 %v49, %v173
  %v175 = vpop.f32.mrf.mxu0
  %v176 = vpop.f32.mrf.mxu0
  %v177 = vadd.f32 %v49, %v176
  %v178 = vpop.f32.mrf.mxu0
  %179 = vmatprep.mubr.bf16.mxu0 0
  %180 = vmatmul.mubr.bf16.gmra.mxu0 %v78
  %v181 = vpop.f32.mrf.mxu0
  %v182 = vadd.f32 %v49, %v181
  %v183 = vpop.f32.mrf.mxu0
  %v184 = vpop.f32.mrf.mxu0
  %v185 = vadd.f32 %v49, %v184
  %v186 = vpop.f32.mrf.mxu0
  %187 = vmatprep.mubr.bf16.mxu0 0
  %188 = vmatmul.mubr.bf16.gmra.mxu0 %v79
  %v189 = vpop.f32.mrf.mxu0
  %v190 = vadd.f32 %v49, %v189
  %v191 = vpop.f32.mrf.mxu0
  %v192 = vpop.f32.mrf.mxu0
  %v193 = vadd.f32 %v49, %v192
  %v194 = vpop.f32.mrf.mxu0
  %195 = vmatprep.mubr.bf16.mxu0 0
  %196 = vmatmul.mubr.bf16.gmra.mxu0 %v80
  %v197 = vpop.f32.mrf.mxu0
  %v198 = vadd.f32 %v49, %v197
  %v199 = vpop.f32.mrf.mxu0
  %v200 = vpop.f32.mrf.mxu0
  %v201 = vadd.f32 %v49, %v200
  %v202 = vpop.f32.mrf.mxu0
  %203 = vmatprep.mubr.bf16.mxu0 0
  %204 = vmatmul.mubr.bf16.gmra.mxu0 %v81
  %v205 = vpop.f32.mrf.mxu0
  %v206 = vadd.f32 %v49, %v205
  %v207 = vpop.f32.mrf.mxu0
  %v208 = vpop.f32.mrf.mxu0
  %v209 = vadd.f32 %v49, %v208
  %v210 = vpop.f32.mrf.mxu0
  %211 = vmatprep.mubr.bf16.mxu0 0
  %212 = vmatmul.mubr.bf16.gmra.mxu0 %v82
  %v213 = vpop.f32.mrf.mxu0
  %v214 = vadd.f32 %v49, %v213
  %v215 = vpop.f32.mrf.mxu0
  %v216 = vpop.f32.mrf.mxu0
  %v217 = vadd.f32 %v49, %v216
  %v218 = vpop.f32.mrf.mxu0
  %219 = vmatprep.mubr.bf16.mxu0 0
  %220 = vmatmul.mubr.bf16.gmra.mxu0 %v83
  %v221 = vpop.f32.mrf.mxu0
  %v222 = vadd.f32 %v49, %v221
  %v223 = vpop.f32.mrf.mxu0
  %v224 = vpop.f32.mrf.mxu0
  %v225 = vpop.f32.mrf.mxu0
  %226 = vdwg.mxu0
  %v227 = vmax.f32 %v174, 0.0
  %v228 = vmax.f32 %v177, 0.0
  %v229 = vmax.f32 %v182, 0.0
  %v230 = vmax.f32 %v185, 0.0
  %v231 = vmax.f32 %v190, 0.0
  %v232 = vmax.f32 %v193, 0.0
  %v233 = vmax.f32 %v198, 0.0
  %v234 = vmax.f32 %v201, 0.0
  %v235 = vmax.f32 %v206, 0.0
  %v236 = vmax.f32 %v209, 0.0
  %v237 = vmax.f32 %v214, 0.0
  %v238 = vmax.f32 %v217, 0.0
  %v239 = vmax.f32 %v222, 0.0
  %240 = vst [vmem:[%s3] sm:$0xff] %v227
  %241 = vst [vmem:[%s3 + $0x8] sm:$0xff] %v228
  %242 = vst [vmem:[%s3 + $0x10] sm:$0xff] %v229
  %243 = vst [vmem:[%s3 + $0x18] sm:$0xff] %v230
  %244 = vst [vmem:[%s3 + $0x20] sm:$0xff] %v231
  %245 = vst [vmem:[%s3 + $0x28] sm:$0xff] %v232
  %246 = vst [vmem:[%s3 + $0x30] sm:$0xff] %v233
  %247 = vst [vmem:[%s3 + $0x38] sm:$0xff] %v234
  %248 = vst [vmem:[%s3 + $0x40] sm:$0xff] %v235
  %249 = vst [vmem:[%s3 + $0x48] sm:$0xff] %v236
  %250 = vst [vmem:[%s3 + $0x50] sm:$0xff] %v237
  %251 = vst [vmem:[%s3 + $0x58] sm:$0xff] %v238
  %252 = vst [vmem:[%s3 + $0x60] sm:$0xff] %v239
  // Predicated region
  $region14: #{autoencoder_forward.10} parent=0 // pred_check
    _
  $region15: #{autoencoder_forward.10} parent=0 // pred_check_branch
    %254 = sbr.rel (0) target = $region17
  $region16: #{autoencoder_forward.10} parent=0 // pred_region
    _
  $region17: #{autoencoder_forward.10} parent=0 // pred_fallthru
    _
  // Predicated region
  $region18: #{autoencoder_forward.10} parent=0 // pred_check
    _
  $region19: #{autoencoder_forward.10} parent=0 // pred_check_branch
    %256 = sbr.rel (0) target = $region21
  $region20: #{autoencoder_forward.10} parent=0 // pred_region
    _
  $region21: #{autoencoder_forward.10} parent=0 // pred_fallthru
    _

// kernel: autoencoder_forward.11
$region0: #{autoencoder_forward.11}
  #allocation0 [shape = 'u32[]', space=smem, size = 0x4, offset = 0x4, fixed_abs, tag = 'smem constant byte address 0x4 - core index']
  #allocation1 [shape = 'u32[144,128]{1,0:T(1,128)}', space=vmem, size = 0x12000, scoped, tag = 'internal scratch']
  %s0 = inlined_call_operand.vmem [shape: bf16[392,64], index: 0, kind: input, shape index: {}]
  %s1 = inlined_call_operand.vmem [shape: bf16[64,128], index: 1, kind: input, shape index: {}]
  %s2 = inlined_call_operand.vmem [shape: f32[1,128], index: 2, kind: input, shape index: {}]
  %s3 = inlined_call_operand.vmem [shape: f32[392,128], index: 3, kind: output, shape index: {}]
  %s4 = sld [smem:[#allocation0]]
  $region22: #{autoencoder_forward.11} parent=0
    _
  %s6 = ssub.s32 1, %s4
  %s7 = scalar_select 0, %s6, %s4
  // Predicated region
  $region2: #{autoencoder_forward.11} parent=0 // pred_check
    _
  $region3: #{autoencoder_forward.11} parent=0 // pred_check_branch
    %9 = sbr.rel (0) target = $region5
  $region4: #{autoencoder_forward.11} parent=0 // pred_region
    _
  $region5: #{autoencoder_forward.11} parent=0 // pred_fallthru
    _
  // Predicated region
  $region6: #{autoencoder_forward.11} parent=0 // pred_check
    _
  $region7: #{autoencoder_forward.11} parent=0 // pred_check_branch
    %11 = sbr.rel (0) target = $region9
  $region8: #{autoencoder_forward.11} parent=0 // pred_region
    _
  $region9: #{autoencoder_forward.11} parent=0 // pred_fallthru
    _
  // Predicated region
  $region10: #{autoencoder_forward.11} parent=0 // pred_check
    _
  $region11: #{autoencoder_forward.11} parent=0 // pred_check_branch
    %13 = sbr.rel (0) target = $region13
  $region12: #{autoencoder_forward.11} parent=0 // pred_region
    _
  $region13: #{autoencoder_forward.11} parent=0 // pred_fallthru
    _
  %v15 = vld [vmem:[%s0] sm:$0xf]
  %v16 = vld [vmem:[%s0 + $0x4] sm:$0xf]
  %v17 = vld [vmem:[%s0 + $0x8] sm:$0xf]
  %v18 = vld [vmem:[%s0 + $0xc] sm:$0xf]
  %v19 = vld [vmem:[%s0 + $0x10] sm:$0xf]
  %v20 = vld [vmem:[%s0 + $0x14] sm:$0xf]
  %v21 = vld [vmem:[%s0 + $0x18] sm:$0xf]
  %v22 = vld [vmem:[%s0 + $0x1c] sm:$0xf]
  %v23 = vld [vmem:[%s0 + $0x20] sm:$0xf]
  %v24 = vld [vmem:[%s0 + $0x24] sm:$0xf]
  %v25 = vld [vmem:[%s0 + $0x28] sm:$0xf]
  %v26 = vld [vmem:[%s0 + $0x2c] sm:$0xf]
  %v27 = vld [vmem:[%s0 + $0x30] sm:$0xf]
  %v28 = vld [vmem:[%s0 + $0x34] sm:$0xf]
  %v29 = vld [vmem:[%s0 + $0x38] sm:$0xf]
  %v30 = vld [vmem:[%s0 + $0x3c] sm:$0xf]
  %v31 = vld [vmem:[%s0 + $0x40] sm:$0xf]
  %v32 = vld [vmem:[%s0 + $0x44] sm:$0xf]
  %v33 = vld [vmem:[%s0 + $0x48] sm:$0xf]
  %v34 = vld [vmem:[%s0 + $0x4c] sm:$0xf]
  %v35 = vld [vmem:[%s0 + $0x50] sm:$0xf]
  %v36 = vld [vmem:[%s0 + $0x54] sm:$0xf]
  %v37 = vld [vmem:[%s0 + $0x58] sm:$0xf]
  %v38 = vld [vmem:[%s0 + $0x5c] sm:$0xf]
  %v39 = vld [vmem:[%s0 + $0x60] sm:$0xf]
  %v40 = vld [vmem:[%s0 + $0x64] sm:$0xf]
  %v41 = vld [vmem:[%s0 + $0x68] sm:$0xf]
  %v42 = vld [vmem:[%s0 + $0x6c] sm:$0xf]
  %v43 = vld [vmem:[%s0 + $0x70] sm:$0xf]
  %v44 = vld [vmem:[%s0 + $0x74] sm:$0xf]
  %v45 = vld [vmem:[%s0 + $0x78] sm:$0xf]
  %v46 = vld [vmem:[%s0 + $0x7c] sm:$0xf]
  %v47 = vld [vmem:[%s0 + $0x80] sm:$0xf]
  %v48 = vld [vmem:[%s0 + $0x84] sm:$0xf]
  %v49 = vld [vmem:[%s0 + $0x88] sm:$0xf]
  %v50 = vld [vmem:[%s0 + $0x8c] sm:$0xf]
  %v51 = vld [vmem:[%s0 + $0x90] sm:$0xf]
  %v52 = vld [vmem:[%s0 + $0x94] sm:$0xf]
  %v53 = vld [vmem:[%s0 + $0x98] sm:$0xf]
  %v54 = vld [vmem:[%s0 + $0x9c] sm:$0xf]
  %v55 = vld [vmem:[%s0 + $0xa0] sm:$0xf]
  %v56 = vld [vmem:[%s0 + $0xa4] sm:$0xf]
  %v57 = vld [vmem:[%s0 + $0xa8] sm:$0xf]
  %v58 = vld [vmem:[%s0 + $0xac] sm:$0xf]
  %v59 = vld [vmem:[%s0 + $0xb0] sm:$0xf]
  %v60 = vld [vmem:[%s0 + $0xb4] sm:$0xf]
  %v61 = vld [vmem:[%s0 + $0xb8] sm:$0xf]
  %v62 = vld [vmem:[%s0 + $0xbc] sm:$0xf]
  %v63 = vld [vmem:[%s0 + $0xc0] sm:$0xf]
  %v64 = vld [vmem:[%s1] sm:$0xf]
  %v65 = vld [vmem:[%s1 + $0x4] sm:$0xf]
  %v66 = vld [vmem:[%s1 + $0x8] sm:$0xf]
  %v67 = vld [vmem:[%s1 + $0xc] sm:$0xf]
  %v68 = vld [vmem:[%s1 + $0x10] sm:$0xf]
  %v69 = vld [vmem:[%s1 + $0x14] sm:$0xf]
  %v70 = vld [vmem:[%s1 + $0x18] sm:$0xf]
  %v71 = vld [vmem:[%s1 + $0x1c] sm:$0xf]
  %v72 = vld [vmem:[%s2] sm:$0x1]
  %v74 = vlaneseq
  %v75 = vshrl.u32 %v74, 7
  %v76 = vsub.s32 0, %v75
  %v77 = vrot.slane %v72, %v76
  %v128 = vunpack.c.l.b16 %v15
  %v129 = vunpack.c.l.b16 %v16
  %v130 = vunpack.c.l.b16 %v17
  %v131 = vunpack.c.l.b16 %v18
  %v132 = vunpack.c.l.b16 %v19
  %v133 = vunpack.c.l.b16 %v20
  %v134 = vunpack.c.l.b16 %v21
  %v135 = vunpack.c.l.b16 %v22
  %v136 = vunpack.c.l.b16 %v23
  %v137 = vunpack.c.l.b16 %v24
  %v138 = vunpack.c.l.b16 %v25
  %v139 = vunpack.c.l.b16 %v26
  %v140 = vunpack.c.l.b16 %v27
  %v141 = vunpack.c.l.b16 %v28
  %v142 = vunpack.c.l.b16 %v29
  %v143 = vunpack.c.l.b16 %v30
  %v144 = vunpack.c.l.b16 %v31
  %v145 = vunpack.c.l.b16 %v32
  %v146 = vunpack.c.l.b16 %v33
  %v147 = vunpack.c.l.b16 %v34
  %v148 = vunpack.c.l.b16 %v35
  %v149 = vunpack.c.l.b16 %v36
  %v150 = vunpack.c.l.b16 %v37
  %v151 = vunpack.c.l.b16 %v38
  %v152 = vunpack.c.l.b16 %v39
  %v153 = vunpack.c.l.b16 %v40
  %v154 = vunpack.c.l.b16 %v41
  %v155 = vunpack.c.l.b16 %v42
  %v156 = vunpack.c.l.b16 %v43
  %v157 = vunpack.c.l.b16 %v44
  %v158 = vunpack.c.l.b16 %v45
  %v159 = vunpack.c.l.b16 %v46
  %v160 = vunpack.c.l.b16 %v47
  %v161 = vunpack.c.l.b16 %v48
  %v162 = vunpack.c.l.b16 %v49
  %v163 = vunpack.c.l.b16 %v50
  %v164 = vunpack.c.l.b16 %v51
  %v165 = vunpack.c.l.b16 %v52
  %v166 = vunpack.c.l.b16 %v53
  %v167 = vunpack.c.l.b16 %v54
  %v168 = vunpack.c.l.b16 %v55
  %v169 = vunpack.c.l.b16 %v56
  %v170 = vunpack.c.l.b16 %v57
  %v171 = vunpack.c.l.b16 %v58
  %v172 = vunpack.c.l.b16 %v59
  %v173 = vunpack.c.l.b16 %v60
  %v174 = vunpack.c.l.b16 %v61
  %v175 = vunpack.c.l.b16 %v62
  %v176 = vunpack.c.l.b16 %v63
  %v177 = vpack.c.b16 %v129, %v128
  %v178 = vpack.c.b16 %v131, %v130
  %v179 = vpack.c.b16 %v133, %v132
  %v180 = vpack.c.b16 %v135, %v134
  %v181 = vpack.c.b16 %v137, %v136
  %v182 = vpack.c.b16 %v139, %v138
  %v183 = vpack.c.b16 %v141, %v140
  %v184 = vpack.c.b16 %v143, %v142
  %v185 = vpack.c.b16 %v145, %v144
  %v186 = vpack.c.b16 %v147, %v146
  %v187 = vpack.c.b16 %v149, %v148
  %v188 = vpack.c.b16 %v151, %v150
  %v189 = vpack.c.b16 %v153, %v152
  %v190 = vpack.c.b16 %v155, %v154
  %v191 = vpack.c.b16 %v157, %v156
  %v192 = vpack.c.b16 %v159, %v158
  %v193 = vpack.c.b16 %v161, %v160
  %v194 = vpack.c.b16 %v163, %v162
  %v195 = vpack.c.b16 %v165, %v164
  %v196 = vpack.c.b16 %v167, %v166
  %v197 = vpack.c.b16 %v169, %v168
  %v198 = vpack.c.b16 %v171, %v170
  %v199 = vpack.c.b16 %v173, %v172
  %v200 = vpack.c.b16 %v175, %v174
  %v201 = vpack.c.b16 %v176, %v176
  %v210 = vunpack.c.l.b16 %v64
  %v211 = vunpack.c.l.b16 %v65
  %v212 = vunpack.c.l.b16 %v66
  %v213 = vunpack.c.l.b16 %v67
  %v214 = vunpack.c.l.b16 %v68
  %v215 = vunpack.c.l.b16 %v69
  %v216 = vunpack.c.l.b16 %v70
  %v217 = vunpack.c.l.b16 %v71
  %v218 = vpack.c.b16 %v211, %v210
  %v219 = vpack.c.b16 %v213, %v212
  %v220 = vpack.c.b16 %v215, %v214
  %v221 = vpack.c.b16 %v217, %v216
  %vm226 = vcmask 523264
  %v228 = vsel %vm226, %v177, 0
  %v231 = vsel %vm226, %v178, 0
  %v234 = vsel %vm226, %v179, 0
  %v237 = vsel %vm226, %v180, 0
  %v240 = vsel %vm226, %v181, 0
  %v243 = vsel %vm226, %v182, 0
  %v246 = vsel %vm226, %v183, 0
  %v249 = vsel %vm226, %v184, 0
  %v252 = vsel %vm226, %v185, 0
  %v255 = vsel %vm226, %v186, 0
  %v258 = vsel %vm226, %v187, 0
  %v261 = vsel %vm226, %v188, 0
  %v264 = vsel %vm226, %v189, 0
  %v267 = vsel %vm226, %v190, 0
  %v270 = vsel %vm226, %v191, 0
  %v273 = vsel %vm226, %v192, 0
  %v276 = vsel %vm226, %v193, 0
  %v279 = vsel %vm226, %v194, 0
  %v282 = vsel %vm226, %v195, 0
  %v285 = vsel %vm226, %v196, 0
  %v288 = vsel %vm226, %v197, 0
  %v291 = vsel %vm226, %v198, 0
  %v294 = vsel %vm226, %v199, 0
  %v297 = vsel %vm226, %v200, 0
  %v300 = vsel %vm226, %v201, 0
  %302 = vmatprep.subr.bf16.mxu0 0
  %303 = vmatpush1.bf16.msra.mxu0 0
  %304 = vmatprep.subr.bf16.mxu0 0
  %305 = vmatpush1.bf16.msra.mxu0 0
  %306 = vmatprep.subr.bf16.mxu0 0
  %307 = vmatpush1.bf16.msra.mxu0 0
  %308 = vmatprep.subr.bf16.mxu0 0
  %309 = vmatpush1.bf16.msra.mxu0 0
  %310 = vmatprep.subr.bf16.mxu0 0
  %311 = vmatpush1.bf16.msra.mxu0 %v221
  %312 = vmatprep.subr.bf16.mxu0 0
  %313 = vmatpush1.bf16.msra.mxu0 %v220
  %314 = vmatprep.subr.bf16.mxu0 0
  %315 = vmatpush1.bf16.msra.mxu0 %v219
  %316 = vmatprep.subr.bf16.mxu0 0
  %317 = vmatpush1.bf16.msra.mxu0 %v218
  %318 = vmatprep.subr.bf16.mxu0 0
  %319 = vmatpush2.bf16.msra.mxu0 0
  %320 = vmatprep.subr.bf16.mxu0 0
  %321 = vmatpush2.bf16.msra.mxu0 0
  %322 = vmatprep.subr.bf16.mxu0 0
  %323 = vmatpush2.bf16.msra.mxu0 0
  %324 = vmatprep.subr.bf16.mxu0 0
  %325 = vmatpush2.bf16.msra.mxu0 0
  %326 = vmatprep.subr.bf16.mxu0 0
  %327 = vmatpush2.bf16.msra.mxu0 0
  %328 = vmatprep.subr.bf16.mxu0 0
  %329 = vmatpush2.bf16.msra.mxu0 0
  %330 = vmatprep.subr.bf16.mxu0 0
  %331 = vmatpush2.bf16.msra.mxu0 0
  %332 = vmatprep.subr.bf16.mxu0 0
  %333 = vmatpush2.bf16.msra.mxu0 0
  %334 = vmatprep.mubr.bf16.mxu0 0
  %335 = vmatmul.mubr.bf16.gmra.mxu0 %v228
  %v336 = vpop.f32.mrf.mxu0
  %v337 = vadd.f32 %v77, %v336
  %v338 = vpop.f32.mrf.mxu0
  %v339 = vpop.f32.mrf.mxu0
  %v340 = vadd.f32 %v77, %v339
  %v341 = vpop.f32.mrf.mxu0
  %342 = vmatprep.mubr.bf16.mxu0 0
  %343 = vmatmul.mubr.bf16.gmra.mxu0 %v231
  %v344 = vpop.f32.mrf.mxu0
  %v345 = vadd.f32 %v77, %v344
  %v346 = vpop.f32.mrf.mxu0
  %v347 = vpop.f32.mrf.mxu0
  %v348 = vadd.f32 %v77, %v347
  %v349 = vpop.f32.mrf.mxu0
  %350 = vmatprep.mubr.bf16.mxu0 0
  %351 = vmatmul.mubr.bf16.gmra.mxu0 %v234
  %v352 = vpop.f32.mrf.mxu0
  %v353 = vadd.f32 %v77, %v352
  %v354 = vpop.f32.mrf.mxu0
  %v355 = vpop.f32.mrf.mxu0
  %v356 = vadd.f32 %v77, %v355
  %v357 = vpop.f32.mrf.mxu0
  %358 = vmatprep.mubr.bf16.mxu0 0
  %359 = vmatmul.mubr.bf16.gmra.mxu0 %v237
  %v360 = vpop.f32.mrf.mxu0
  %v361 = vadd.f32 %v77, %v360
  %v362 = vpop.f32.mrf.mxu0
  %v363 = vpop.f32.mrf.mxu0
  %v364 = vadd.f32 %v77, %v363
  %v365 = vpop.f32.mrf.mxu0
  %366 = vmatprep.mubr.bf16.mxu0 0
  %367 = vmatmul.mubr.bf16.gmra.mxu0 %v240
  %v368 = vpop.f32.mrf.mxu0
  %v369 = vadd.f32 %v77, %v368
  %v370 = vpop.f32.mrf.mxu0
  %v371 = vpop.f32.mrf.mxu0
  %v372 = vadd.f32 %v77, %v371
  %v373 = vpop.f32.mrf.mxu0
  %374 = vmatprep.mubr.bf16.mxu0 0
  %375 = vmatmul.mubr.bf16.gmra.mxu0 %v243
  %v376 = vpop.f32.mrf.mxu0
  %v377 = vadd.f32 %v77, %v376
  %v378 = vpop.f32.mrf.mxu0
  %v379 = vpop.f32.mrf.mxu0
  %v380 = vadd.f32 %v77, %v379
  %v381 = vpop.f32.mrf.mxu0
  %382 = vmatprep.mubr.bf16.mxu0 0
  %383 = vmatmul.mubr.bf16.gmra.mxu0 %v246
  %v384 = vpop.f32.mrf.mxu0
  %v385 = vadd.f32 %v77, %v384
  %v386 = vpop.f32.mrf.mxu0
  %v387 = vpop.f32.mrf.mxu0
  %v388 = vadd.f32 %v77, %v387
  %v389 = vpop.f32.mrf.mxu0
  %390 = vmatprep.mubr.bf16.mxu0 0
  %391 = vmatmul.mubr.bf16.gmra.mxu0 %v249
  %v392 = vpop.f32.mrf.mxu0
  %v393 = vadd.f32 %v77, %v392
  %v394 = vpop.f32.mrf.mxu0
  %v395 = vpop.f32.mrf.mxu0
  %v396 = vadd.f32 %v77, %v395
  %v397 = vpop.f32.mrf.mxu0
  %398 = vmatprep.mubr.bf16.mxu0 0
  %399 = vmatmul.mubr.bf16.gmra.mxu0 %v252
  %v400 = vpop.f32.mrf.mxu0
  %v401 = vadd.f32 %v77, %v400
  %v402 = vpop.f32.mrf.mxu0
  %v403 = vpop.f32.mrf.mxu0
  %v404 = vadd.f32 %v77, %v403
  %v405 = vpop.f32.mrf.mxu0
  %406 = vmatprep.mubr.bf16.mxu0 0
  %407 = vmatmul.mubr.bf16.gmra.mxu0 %v255
  %v408 = vpop.f32.mrf.mxu0
  %v409 = vadd.f32 %v77, %v408
  %v410 = vpop.f32.mrf.mxu0
  %v411 = vpop.f32.mrf.mxu0
  %v412 = vadd.f32 %v77, %v411
  %v413 = vpop.f32.mrf.mxu0
  %414 = vmatprep.mubr.bf16.mxu0 0
  %415 = vmatmul.mubr.bf16.gmra.mxu0 %v258
  %v416 = vpop.f32.mrf.mxu0
  %v417 = vadd.f32 %v77, %v416
  %v418 = vpop.f32.mrf.mxu0
  %v419 = vpop.f32.mrf.mxu0
  %v420 = vadd.f32 %v77, %v419
  %v421 = vpop.f32.mrf.mxu0
  %422 = vmatprep.mubr.bf16.mxu0 0
  %423 = vmatmul.mubr.bf16.gmra.mxu0 %v261
  %v424 = vpop.f32.mrf.mxu0
  %v425 = vadd.f32 %v77, %v424
  %v426 = vpop.f32.mrf.mxu0
  %v427 = vpop.f32.mrf.mxu0
  %v428 = vadd.f32 %v77, %v427
  %v429 = vpop.f32.mrf.mxu0
  %430 = vmatprep.mubr.bf16.mxu0 0
  %431 = vmatmul.mubr.bf16.gmra.mxu0 %v264
  %v432 = vpop.f32.mrf.mxu0
  %v433 = vadd.f32 %v77, %v432
  %v434 = vpop.f32.mrf.mxu0
  %v435 = vpop.f32.mrf.mxu0
  %v436 = vadd.f32 %v77, %v435
  %v437 = vpop.f32.mrf.mxu0
  %438 = vmatprep.mubr.bf16.mxu0 0
  %439 = vmatmul.mubr.bf16.gmra.mxu0 %v267
  %v440 = vpop.f32.mrf.mxu0
  %v441 = vadd.f32 %v77, %v440
  %v442 = vpop.f32.mrf.mxu0
  %v443 = vpop.f32.mrf.mxu0
  %v444 = vadd.f32 %v77, %v443
  %v445 = vpop.f32.mrf.mxu0
  %446 = vmatprep.mubr.bf16.mxu0 0
  %447 = vmatmul.mubr.bf16.gmra.mxu0 %v270
  %v448 = vpop.f32.mrf.mxu0
  %v449 = vadd.f32 %v77, %v448
  %v450 = vpop.f32.mrf.mxu0
  %v451 = vpop.f32.mrf.mxu0
  %v452 = vadd.f32 %v77, %v451
  %v453 = vpop.f32.mrf.mxu0
  %454 = vmatprep.mubr.bf16.mxu0 0
  %455 = vmatmul.mubr.bf16.gmra.mxu0 %v273
  %v456 = vpop.f32.mrf.mxu0
  %v457 = vadd.f32 %v77, %v456
  %v458 = vpop.f32.mrf.mxu0
  %v459 = vpop.f32.mrf.mxu0
  %v460 = vadd.f32 %v77, %v459
  %v461 = vpop.f32.mrf.mxu0
  %462 = vmatprep.mubr.bf16.mxu0 0
  %463 = vmatmul.mubr.bf16.gmra.mxu0 %v276
  %v464 = vpop.f32.mrf.mxu0
  %v465 = vadd.f32 %v77, %v464
  %v466 = vpop.f32.mrf.mxu0
  %v467 = vpop.f32.mrf.mxu0
  %v468 = vadd.f32 %v77, %v467
  %v469 = vpop.f32.mrf.mxu0
  %470 = vmatprep.mubr.bf16.mxu0 0
  %471 = vmatmul.mubr.bf16.gmra.mxu0 %v279
  %v472 = vpop.f32.mrf.mxu0
  %v473 = vadd.f32 %v77, %v472
  %v474 = vpop.f32.mrf.mxu0
  %v475 = vpop.f32.mrf.mxu0
  %v476 = vadd.f32 %v77, %v475
  %v477 = vpop.f32.mrf.mxu0
  %478 = vmatprep.mubr.bf16.mxu0 0
  %479 = vmatmul.mubr.bf16.gmra.mxu0 %v282
  %v480 = vpop.f32.mrf.mxu0
  %v481 = vadd.f32 %v77, %v480
  %v482 = vpop.f32.mrf.mxu0
  %v483 = vpop.f32.mrf.mxu0
  %v484 = vadd.f32 %v77, %v483
  %v485 = vpop.f32.mrf.mxu0
  %486 = vmatprep.mubr.bf16.mxu0 0
  %487 = vmatmul.mubr.bf16.gmra.mxu0 %v285
  %v488 = vpop.f32.mrf.mxu0
  %v489 = vadd.f32 %v77, %v488
  %v490 = vpop.f32.mrf.mxu0
  %v491 = vpop.f32.mrf.mxu0
  %v492 = vadd.f32 %v77, %v491
  %v493 = vpop.f32.mrf.mxu0
  %494 = vmatprep.mubr.bf16.mxu0 0
  %495 = vmatmul.mubr.bf16.gmra.mxu0 %v288
  %v496 = vpop.f32.mrf.mxu0
  %v497 = vadd.f32 %v77, %v496
  %v498 = vpop.f32.mrf.mxu0
  %v499 = vpop.f32.mrf.mxu0
  %v500 = vadd.f32 %v77, %v499
  %v501 = vpop.f32.mrf.mxu0
  %502 = vmatprep.mubr.bf16.mxu0 0
  %503 = vmatmul.mubr.bf16.gmra.mxu0 %v291
  %v504 = vpop.f32.mrf.mxu0
  %v505 = vadd.f32 %v77, %v504
  %v506 = vpop.f32.mrf.mxu0
  %v507 = vpop.f32.mrf.mxu0
  %v508 = vadd.f32 %v77, %v507
  %v509 = vpop.f32.mrf.mxu0
  %510 = vmatprep.mubr.bf16.mxu0 0
  %511 = vmatmul.mubr.bf16.gmra.mxu0 %v294
  %v512 = vpop.f32.mrf.mxu0
  %v513 = vadd.f32 %v77, %v512
  %v514 = vpop.f32.mrf.mxu0
  %v515 = vpop.f32.mrf.mxu0
  %v516 = vadd.f32 %v77, %v515
  %v517 = vpop.f32.mrf.mxu0
  %518 = vmatprep.mubr.bf16.mxu0 0
  %519 = vmatmul.mubr.bf16.gmra.mxu0 %v297
  %v520 = vpop.f32.mrf.mxu0
  %v521 = vadd.f32 %v77, %v520
  %v522 = vpop.f32.mrf.mxu0
  %v523 = vpop.f32.mrf.mxu0
  %v524 = vadd.f32 %v77, %v523
  %v525 = vpop.f32.mrf.mxu0
  %526 = vmatprep.mubr.bf16.mxu0 0
  %527 = vmatmul.mubr.bf16.gmra.mxu0 %v300
  %v528 = vpop.f32.mrf.mxu0
  %v529 = vadd.f32 %v77, %v528
  %v530 = vpop.f32.mrf.mxu0
  %v531 = vpop.f32.mrf.mxu0
  %v532 = vpop.f32.mrf.mxu0
  %533 = vdwg.mxu0
  %v534 = vxor.u32 %v337, 2147483648
  %v535 = vxor.u32 %v340, 2147483648
  %v536 = vxor.u32 %v345, 2147483648
  %v537 = vxor.u32 %v348, 2147483648
  %v538 = vxor.u32 %v353, 2147483648
  %v539 = vxor.u32 %v356, 2147483648
  %v540 = vxor.u32 %v361, 2147483648
  %v541 = vxor.u32 %v364, 2147483648
  %v542 = vxor.u32 %v369, 2147483648
  %v543 = vxor.u32 %v372, 2147483648
  %v544 = vxor.u32 %v377, 2147483648
  %v545 = vxor.u32 %v380, 2147483648
  %v546 = vxor.u32 %v385, 2147483648
  %v547 = vxor.u32 %v388, 2147483648
  %v548 = vxor.u32 %v393, 2147483648
  %v549 = vxor.u32 %v396, 2147483648
  %v550 = vxor.u32 %v401, 2147483648
  %v551 = vxor.u32 %v404, 2147483648
  %v552 = vxor.u32 %v409, 2147483648
  %v553 = vxor.u32 %v412, 2147483648
  %v554 = vxor.u32 %v417, 2147483648
  %v555 = vxor.u32 %v420, 2147483648
  %v556 = vxor.u32 %v425, 2147483648
  %v557 = vxor.u32 %v428, 2147483648
  %v558 = vxor.u32 %v433, 2147483648
  %v559 = vxor.u32 %v436, 2147483648
  %v560 = vxor.u32 %v441, 2147483648
  %v561 = vxor.u32 %v444, 2147483648
  %v562 = vxor.u32 %v449, 2147483648
  %v563 = vxor.u32 %v452, 2147483648
  %v564 = vxor.u32 %v457, 2147483648
  %v565 = vxor.u32 %v460, 2147483648
  %v566 = vxor.u32 %v465, 2147483648
  %v567 = vxor.u32 %v468, 2147483648
  %v568 = vxor.u32 %v473, 2147483648
  %v569 = vxor.u32 %v476, 2147483648
  %v570 = vxor.u32 %v481, 2147483648
  %v571 = vxor.u32 %v484, 2147483648
  %v572 = vxor.u32 %v489, 2147483648
  %v573 = vxor.u32 %v492, 2147483648
  %v574 = vxor.u32 %v497, 2147483648
  %v575 = vxor.u32 %v500, 2147483648
  %v576 = vxor.u32 %v505, 2147483648
  %v577 = vxor.u32 %v508, 2147483648
  %v578 = vxor.u32 %v513, 2147483648
  %v579 = vxor.u32 %v516, 2147483648
  %v580 = vxor.u32 %v521, 2147483648
  %v581 = vxor.u32 %v524, 2147483648
  %v582 = vxor.u32 %v529, 2147483648
  %v583 = vmul.f32 %v534, 1.442695
  %v584 = vpow.pop %v583
  %v585 = vmul.f32 %v535, 1.442695
  %v586 = vpow.pop %v585
  %v587 = vmul.f32 %v536, 1.442695
  %v588 = vpow.pop %v587
  %v589 = vmul.f32 %v537, 1.442695
  %v590 = vpow.pop %v589
  %v591 = vmul.f32 %v538, 1.442695
  %v592 = vpow.pop %v591
  %v593 = vmul.f32 %v539, 1.442695
  %v594 = vpow.pop %v593
  %v595 = vmul.f32 %v540, 1.442695
  %v596 = vpow.pop %v595
  %v597 = vmul.f32 %v541, 1.442695
  %v598 = vpow.pop %v597
  %v599 = vmul.f32 %v542, 1.442695
  %v600 = vpow.pop %v599
  %v601 = vmul.f32 %v543, 1.442695
  %v602 = vpow.pop %v601
  %v603 = vmul.f32 %v544, 1.442695
  %v604 = vpow.pop %v603
  %v605 = vmul.f32 %v545, 1.442695
  %v606 = vpow.pop %v605
  %v607 = vmul.f32 %v546, 1.442695
  %v608 = vpow.pop %v607
  %v609 = vmul.f32 %v547, 1.442695
  %v610 = vpow.pop %v609
  %v611 = vmul.f32 %v548, 1.442695
  %v612 = vpow.pop %v611
  %v613 = vmul.f32 %v549, 1.442695
  %v614 = vpow.pop %v613
  %v615 = vmul.f32 %v550, 1.442695
  %v616 = vpow.pop %v615
  %v617 = vmul.f32 %v551, 1.442695
  %v618 = vpow.pop %v617
  %v619 = vmul.f32 %v552, 1.442695
  %v620 = vpow.pop %v619
  %v621 = vmul.f32 %v553, 1.442695
  %v622 = vpow.pop %v621
  %v623 = vmul.f32 %v554, 1.442695
  %v624 = vpow.pop %v623
  %v625 = vmul.f32 %v555, 1.442695
  %v626 = vpow.pop %v625
  %v627 = vmul.f32 %v556, 1.442695
  %v628 = vpow.pop %v627
  %v629 = vmul.f32 %v557, 1.442695
  %v630 = vpow.pop %v629
  %v631 = vmul.f32 %v558, 1.442695
  %v632 = vpow.pop %v631
  %v633 = vmul.f32 %v559, 1.442695
  %v634 = vpow.pop %v633
  %v635 = vmul.f32 %v560, 1.442695
  %v636 = vpow.pop %v635
  %v637 = vmul.f32 %v561, 1.442695
  %v638 = vpow.pop %v637
  %v639 = vmul.f32 %v562, 1.442695
  %v640 = vpow.pop %v639
  %v641 = vmul.f32 %v563, 1.442695
  %v642 = vpow.pop %v641
  %v643 = vmul.f32 %v564, 1.442695
  %v644 = vpow.pop %v643
  %v645 = vmul.f32 %v565, 1.442695
  %v646 = vpow.pop %v645
  %v647 = vmul.f32 %v566, 1.442695
  %v648 = vpow.pop %v647
  %v649 = vmul.f32 %v567, 1.442695
  %v650 = vpow.pop %v649
  %v651 = vmul.f32 %v568, 1.442695
  %v652 = vpow.pop %v651
  %v653 = vmul.f32 %v569, 1.442695
  %v654 = vpow.pop %v653
  %v655 = vmul.f32 %v570, 1.442695
  %v656 = vpow.pop %v655
  %v657 = vmul.f32 %v571, 1.442695
  %v658 = vpow.pop %v657
  %v659 = vmul.f32 %v572, 1.442695
  %v660 = vpow.pop %v659
  %v661 = vmul.f32 %v573, 1.442695
  %v662 = vpow.pop %v661
  %v663 = vmul.f32 %v574, 1.442695
  %v664 = vpow.pop %v663
  %v665 = vmul.f32 %v575, 1.442695
  %v666 = vpow.pop %v665
  %v667 = vmul.f32 %v576, 1.442695
  %v668 = vpow.pop %v667
  %v669 = vmul.f32 %v577, 1.442695
  %v670 = vpow.pop %v669
  %v671 = vmul.f32 %v578, 1.442695
  %v672 = vpow.pop %v671
  %v673 = vmul.f32 %v579, 1.442695
  %v674 = vpow.pop %v673
  %v675 = vmul.f32 %v580, 1.442695
  %v676 = vpow.pop %v675
  %v677 = vmul.f32 %v581, 1.442695
  %v678 = vpow.pop %v677
  %v679 = vmul.f32 %v582, 1.442695
  %v680 = vpow.pop %v679
  %v681 = vadd.f32 %v584, 1.0
  %v682 = vadd.f32 %v586, 1.0
  %v683 = vadd.f32 %v588, 1.0
  %v684 = vadd.f32 %v590, 1.0
  %v685 = vadd.f32 %v592, 1.0
  %v686 = vadd.f32 %v594, 1.0
  %v687 = vadd.f32 %v596, 1.0
  %v688 = vadd.f32 %v598, 1.0
  %v689 = vadd.f32 %v600, 1.0
  %v690 = vadd.f32 %v602, 1.0
  %v691 = vadd.f32 %v604, 1.0
  %v692 = vadd.f32 %v606, 1.0
  %v693 = vadd.f32 %v608, 1.0
  %v694 = vadd.f32 %v610, 1.0
  %v695 = vadd.f32 %v612, 1.0
  %v696 = vadd.f32 %v614, 1.0
  %v697 = vadd.f32 %v616, 1.0
  %v698 = vadd.f32 %v618, 1.0
  %v699 = vadd.f32 %v620, 1.0
  %v700 = vadd.f32 %v622, 1.0
  %v701 = vadd.f32 %v624, 1.0
  %v702 = vadd.f32 %v626, 1.0
  %v703 = vadd.f32 %v628, 1.0
  %v704 = vadd.f32 %v630, 1.0
  %v705 = vadd.f32 %v632, 1.0
  %v706 = vadd.f32 %v634, 1.0
  %v707 = vadd.f32 %v636, 1.0
  %v708 = vadd.f32 %v638, 1.0
  %v709 = vadd.f32 %v640, 1.0
  %v710 = vadd.f32 %v642, 1.0
  %v711 = vadd.f32 %v644, 1.0
  %v712 = vadd.f32 %v646, 1.0
  %v713 = vadd.f32 %v648, 1.0
  %v714 = vadd.f32 %v650, 1.0
  %v715 = vadd.f32 %v652, 1.0
  %v716 = vadd.f32 %v654, 1.0
  %v717 = vadd.f32 %v656, 1.0
  %v718 = vadd.f32 %v658, 1.0
  %v719 = vadd.f32 %v660, 1.0
  %v720 = vadd.f32 %v662, 1.0
  %v721 = vadd.f32 %v664, 1.0
  %v722 = vadd.f32 %v666, 1.0
  %v723 = vadd.f32 %v668, 1.0
  %v724 = vadd.f32 %v670, 1.0
  %v725 = vadd.f32 %v672, 1.0
  %v726 = vadd.f32 %v674, 1.0
  %v727 = vadd.f32 %v676, 1.0
  %v728 = vadd.f32 %v678, 1.0
  %v729 = vadd.f32 %v680, 1.0
  %v730 = vrcp.pop %v681
  %v731 = vmul.f32 1.0, %v730
  %v732 = vrcp.pop %v682
  %v733 = vmul.f32 1.0, %v732
  %v734 = vrcp.pop %v683
  %v735 = vmul.f32 1.0, %v734
  %v736 = vrcp.pop %v684
  %v737 = vmul.f32 1.0, %v736
  %v738 = vrcp.pop %v685
  %v739 = vmul.f32 1.0, %v738
  %v740 = vrcp.pop %v686
  %v741 = vmul.f32 1.0, %v740
  %v742 = vrcp.pop %v687
  %v743 = vmul.f32 1.0, %v742
  %v744 = vrcp.pop %v688
  %v745 = vmul.f32 1.0, %v744
  %v746 = vrcp.pop %v689
  %v747 = vmul.f32 1.0, %v746
  %v748 = vrcp.pop %v690
  %v749 = vmul.f32 1.0, %v748
  %v750 = vrcp.pop %v691
  %v751 = vmul.f32 1.0, %v750
  %v752 = vrcp.pop %v692
  %v753 = vmul.f32 1.0, %v752
  %v754 = vrcp.pop %v693
  %v755 = vmul.f32 1.0, %v754
  %v756 = vrcp.pop %v694
  %v757 = vmul.f32 1.0, %v756
  %v758 = vrcp.pop %v695
  %v759 = vmul.f32 1.0, %v758
  %v760 = vrcp.pop %v696
  %v761 = vmul.f32 1.0, %v760
  %v762 = vrcp.pop %v697
  %v763 = vmul.f32 1.0, %v762
  %v764 = vrcp.pop %v698
  %v765 = vmul.f32 1.0, %v764
  %v766 = vrcp.pop %v699
  %v767 = vmul.f32 1.0, %v766
  %v768 = vrcp.pop %v700
  %v769 = vmul.f32 1.0, %v768
  %v770 = vrcp.pop %v701
  %v771 = vmul.f32 1.0, %v770
  %v772 = vrcp.pop %v702
  %v773 = vmul.f32 1.0, %v772
  %v774 = vrcp.pop %v703
  %v775 = vmul.f32 1.0, %v774
  %v776 = vrcp.pop %v704
  %v777 = vmul.f32 1.0, %v776
  %v778 = vrcp.pop %v705
  %v779 = vmul.f32 1.0, %v778
  %v780 = vrcp.pop %v706
  %v781 = vmul.f32 1.0, %v780
  %v782 = vrcp.pop %v707
  %v783 = vmul.f32 1.0, %v782
  %v784 = vrcp.pop %v708
  %v785 = vmul.f32 1.0, %v784
  %v786 = vrcp.pop %v709
  %v787 = vmul.f32 1.0, %v786
  %v788 = vrcp.pop %v710
  %v789 = vmul.f32 1.0, %v788
  %v790 = vrcp.pop %v711
  %v791 = vmul.f32 1.0, %v790
  %v792 = vrcp.pop %v712
  %v793 = vmul.f32 1.0, %v792
  %v794 = vrcp.pop %v713
  %v795 = vmul.f32 1.0, %v794
  %v796 = vrcp.pop %v714
  %v797 = vmul.f32 1.0, %v796
  %v798 = vrcp.pop %v715
  %v799 = vmul.f32 1.0, %v798
  %v800 = vrcp.pop %v716
  %v801 = vmul.f32 1.0, %v800
  %v802 = vrcp.pop %v717
  %v803 = vmul.f32 1.0, %v802
  %v804 = vrcp.pop %v718
  %v805 = vmul.f32 1.0, %v804
  %v806 = vrcp.pop %v719
  %v807 = vmul.f32 1.0, %v806
  %v808 = vrcp.pop %v720
  %v809 = vmul.f32 1.0, %v808
  %v810 = vrcp.pop %v721
  %v811 = vmul.f32 1.0, %v810
  %v812 = vrcp.pop %v722
  %v813 = vmul.f32 1.0, %v812
  %v814 = vrcp.pop %v723
  %v815 = vmul.f32 1.0, %v814
  %v816 = vrcp.pop %v724
  %v817 = vmul.f32 1.0, %v816
  %v818 = vrcp.pop %v725
  %v819 = vmul.f32 1.0, %v818
  %v820 = vrcp.pop %v726
  %v821 = vmul.f32 1.0, %v820
  %v822 = vrcp.pop %v727
  %v823 = vmul.f32 1.0, %v822
  %v824 = vrcp.pop %v728
  %v825 = vmul.f32 1.0, %v824
  %v826 = vrcp.pop %v729
  %v827 = vmul.f32 1.0, %v826
  %828 = vst [vmem:[%s3] sm:$0xff] %v731
  %829 = vst [vmem:[%s3 + $0x8] sm:$0xff] %v733
  %830 = vst [vmem:[%s3 + $0x10] sm:$0xff] %v735
  %831 = vst [vmem:[%s3 + $0x18] sm:$0xff] %v737
  %832 = vst [vmem:[%s3 + $0x20] sm:$0xff] %v739
  %833 = vst [vmem:[%s3 + $0x28] sm:$0xff] %v741
  %834 = vst [vmem:[%s3 + $0x30] sm:$0xff] %v743
  %835 = vst [vmem:[%s3 + $0x38] sm:$0xff] %v745
  %836 = vst [vmem:[%s3 + $0x40] sm:$0xff] %v747
  %837 = vst [vmem:[%s3 + $0x48] sm:$0xff] %v749
  %838 = vst [vmem:[%s3 + $0x50] sm:$0xff] %v751
  %839 = vst [vmem:[%s3 + $0x58] sm:$0xff] %v753
  %840 = vst [vmem:[%s3 + $0x60] sm:$0xff] %v755
  %841 = vst [vmem:[%s3 + $0x68] sm:$0xff] %v757
  %842 = vst [vmem:[%s3 + $0x70] sm:$0xff] %v759
  %843 = vst [vmem:[%s3 + $0x78] sm:$0xff] %v761
  %844 = vst [vmem:[%s3 + $0x80] sm:$0xff] %v763
  %845 = vst [vmem:[%s3 + $0x88] sm:$0xff] %v765
  %846 = vst [vmem:[%s3 + $0x90] sm:$0xff] %v767
  %847 = vst [vmem:[%s3 + $0x98] sm:$0xff] %v769
  %848 = vst [vmem:[%s3 + $0xa0] sm:$0xff] %v771
  %849 = vst [vmem:[%s3 + $0xa8] sm:$0xff] %v773
  %850 = vst [vmem:[%s3 + $0xb0] sm:$0xff] %v775
  %851 = vst [vmem:[%s3 + $0xb8] sm:$0xff] %v777
  %852 = vst [vmem:[%s3 + $0xc0] sm:$0xff] %v779
  %853 = vst [vmem:[%s3 + $0xc8] sm:$0xff] %v781
  %854 = vst [vmem:[%s3 + $0xd0] sm:$0xff] %v783
  %855 = vst [vmem:[%s3 + $0xd8] sm:$0xff] %v785
  %856 = vst [vmem:[%s3 + $0xe0] sm:$0xff] %v787
  %857 = vst [vmem:[%s3 + $0xe8] sm:$0xff] %v789
  %858 = vst [vmem:[%s3 + $0xf0] sm:$0xff] %v791
  %859 = vst [vmem:[%s3 + $0xf8] sm:$0xff] %v793
  %860 = vst [vmem:[%s3 + $0x100] sm:$0xff] %v795
  %861 = vst [vmem:[%s3 + $0x108] sm:$0xff] %v797
  %862 = vst [vmem:[%s3 + $0x110] sm:$0xff] %v799
  %863 = vst [vmem:[%s3 + $0x118] sm:$0xff] %v801
  %864 = vst [vmem:[%s3 + $0x120] sm:$0xff] %v803
  %865 = vst [vmem:[%s3 + $0x128] sm:$0xff] %v805
  %866 = vst [vmem:[%s3 + $0x130] sm:$0xff] %v807
  %867 = vst [vmem:[%s3 + $0x138] sm:$0xff] %v809
  %868 = vst [vmem:[%s3 + $0x140] sm:$0xff] %v811
  %869 = vst [vmem:[%s3 + $0x148] sm:$0xff] %v813
  %870 = vst [vmem:[%s3 + $0x150] sm:$0xff] %v815
  %871 = vst [vmem:[%s3 + $0x158] sm:$0xff] %v817
  %872 = vst [vmem:[%s3 + $0x160] sm:$0xff] %v819
  %873 = vst [vmem:[%s3 + $0x168] sm:$0xff] %v821
  %874 = vst [vmem:[%s3 + $0x170] sm:$0xff] %v823
  %875 = vst [vmem:[%s3 + $0x178] sm:$0xff] %v825
  %876 = vst [vmem:[%s3 + $0x180] sm:$0xff] %v827
  // Predicated region
  $region14: #{autoencoder_forward.11} parent=0 // pred_check
    _
  $region15: #{autoencoder_forward.11} parent=0 // pred_check_branch
    %878 = sbr.rel (0) target = $region17
  $region16: #{autoencoder_forward.11} parent=0 // pred_region
    _
  $region17: #{autoencoder_forward.11} parent=0 // pred_fallthru
    _
  // Predicated region
  $region18: #{autoencoder_forward.11} parent=0 // pred_check
    _
  $region19: #{autoencoder_forward.11} parent=0 // pred_check_branch
    %880 = sbr.rel (0) target = $region21
  $region20: #{autoencoder_forward.11} parent=0 // pred_region
    _
  $region21: #{autoencoder_forward.11} parent=0 // pred_fallthru
    _

</llo_original>
